<compile_context>
chip_gen: v5e
topology: v5e:2x2
jax: 0.10.0
libtpu: 0.0.40
codegen_flags: <defaults>
</compile_context>

<pallas_src>
import jax
import jax.numpy as jnp
from jax.experimental import pallas as pl
from jax.experimental.pallas import tpu as pltpu


def _round_up(x, m):
    return (x + m - 1) // m * m


def _sigmoid(x):
    # sigmoid(x) = 0.5*tanh(x/2) + 0.5 : one EUP op per gate instead of
    # exp + reciprocal (matches XLA's own logistic expansion numerically).
    return 0.5 * jnp.tanh(0.5 * x) + 0.5


def _vmem_capacity_bytes():
    # Per-generation VMEM: 128 MiB on v5e/v6e, 64 MiB per TensorCore on v7x.
    try:
        return int(pltpu.get_tpu_info().vmem_capacity_bytes)
    except Exception:
        return 64 * 1024 * 1024  # conservative (v7x) fallback


def _make_kernel(*, Hp, S, fuse_fc, compute_dtype, unroll, mask_tail):
    """Builds the LSTM kernel.  All flags are trace-time constants."""

    def kernel(x_ref, h0_ref, c0_ref, wih_ref, whh_ref, b_ref, *rest):
        if fuse_fc:
            (wfc_ref, bfc_ref, out_ref, hn_ref, cn_ref,
             h_sc, c_sc, gx_sc) = rest
        else:
            hn_ref, cn_ref, h_sc, c_sc, gx_sc = rest

        t = pl.program_id(0)
        Tc, Bp, I = x_ref.shape

        @pl.when(t == 0)
        def _():
            h_sc[...] = h0_ref[...]
            c_sc[...] = c0_ref[...]

        # ---- Hoisted input projection: ONE MXU GEMM (M = Tc*Bp) per chunk ----
        # The (Tc, Bp, I) -> (Tc*Bp, I) collapse is tile-exact because Bp % 8 == 0.
        # Bias is folded in once per chunk, outside the recurrent loop.
        x2 = x_ref[...].reshape(Tc * Bp, I).astype(compute_dtype)
        gx = jnp.dot(x2, wih_ref[...], preferred_element_type=jnp.float32)
        gx_sc[...] = (gx + b_ref[...]).reshape(Tc, Bp, 4 * Hp)

        def step(s, carry):
            h, c = carry
            # Only the unavoidable h @ W_hh recurrence stays in the serial loop.
            # W_hh is read from its VMEM ref every step so Mosaic streams it
            # into the MXU instead of pinning Hp*4Hp bytes of vregs.
            gates = gx_sc[s] + jnp.dot(h.astype(compute_dtype), whh_ref[...],
                                       preferred_element_type=jnp.float32)
            # Lane-aligned gate slabs (Hp % 128 == 0) -> free whole-vreg views.
            i_g = _sigmoid(gates[:, 0 * Hp:1 * Hp])
            f_g = _sigmoid(gates[:, 1 * Hp:2 * Hp])
            g_g = jnp.tanh(gates[:, 2 * Hp:3 * Hp])
            o_g = _sigmoid(gates[:, 3 * Hp:4 * Hp])
            c_new = f_g * c + i_g * g_g
            h_new = o_g * jnp.tanh(c_new)
            if mask_tail:
                # S was padded up to a multiple of Tc: freeze h/c on pad steps.
                valid = (t * Tc + s) < S
                h_new = jnp.where(valid, h_new, h)
                c_new = jnp.where(valid, c_new, c)
            return h_new, c_new

        h, c = jax.lax.fori_loop(0, Tc, step, (h_sc[...], c_sc[...]),
                                 unroll=unroll)
        h_sc[...] = h
        c_sc[...] = c

        @pl.when(t == pl.num_programs(0) - 1)
        def _():
            hn_ref[...] = h
            cn_ref[...] = c
            if fuse_fc:
                out_ref[...] = (jnp.dot(h.astype(compute_dtype), wfc_ref[...],
                                        preferred_element_type=jnp.float32)
                                + bfc_ref[...])

    return kernel


def lstm_model_forward(x, hidden, params, *, time_chunk=None,
                       weight_dtype=jnp.bfloat16, fuse_fc=None):
    """Pallas equivalent of LSTMModel.forward.

    x:      (B, S, I) float32
    hidden: tuple (h0, c0), each (1, B, H)
    time_chunk:   timesteps per grid step (rounded to a multiple of 8 and
                  clamped to the VMEM budget).  None = auto (<= 64).
    weight_dtype: jnp.bfloat16 (fast; f32 MXU accumulation) or jnp.float32.
    fuse_fc:      run the final Linear inside the kernel.  None = auto
                  (fused unless W_fc would hog VMEM).
    returns (out (B, O), (h_n (1, B, H), c_n (1, B, H)))
    """
    h0, c0 = hidden
    B, S, I = x.shape
    H = params["w_hh"].shape[1]
    O = params["w_fc"].shape[0]
    f32 = jnp.float32
    wdt = jnp.dtype(weight_dtype)

    # Padded sizes: batch -> sublane multiple, hidden/output -> lane multiple.
    Bp = _round_up(max(B, 8), 8)
    Hp = _round_up(H, 128)
    Op = _round_up(O, 128)

    if fuse_fc is None:
        fuse_fc = (Hp * Op * wdt.itemsize) <= (4 << 20)

    # ---- VMEM-budgeted time chunk (v7x 64 MiB vs v5e/v6e 128 MiB) -----------
    vmem_cap = _vmem_capacity_bytes()
    fixed = (I * 4 * Hp + Hp * 4 * Hp) * wdt.itemsize        # W_ih, W_hh (x1)
    if fuse_fc:
        fixed += Hp * Op * wdt.itemsize                      # W_fc (x1)
    fixed += (4 * Hp + Op) * 4                               # biases
    fixed += 4 * Bp * Hp * 4                                 # h0,c0 + h/c carry
    per_step = Bp * 4 * Hp * 4                               # gx_sc row (f32)
    per_step += 2 * Bp * I * 4                               # x double-buffer row
    budget = int(vmem_cap * 0.6) - fixed
    tc_cap = max(8, budget // max(per_step, 1))

    want = 64 if time_chunk is None else max(8, time_chunk)
    Tc = min(want, tc_cap, _round_up(S, 8))
    Tc = max(8, (Tc // 8) * 8)                               # multiple of 8
    S_pad = _round_up(S, Tc)
    n_chunks = S_pad // Tc
    mask_tail = S_pad != S

    # ---- Gate-slab-aligned, zero-padded weights ------------------------------
    wih_t = params["w_ih"].T.astype(f32)                     # (I, 4H)
    whh_t = params["w_hh"].T.astype(f32)                     # (H, 4H)
    bias = (params["b_ih"] + params["b_hh"]).astype(f32)     # (4H,)

    wih_p = jnp.zeros((I, 4 * Hp), f32)
    whh_p = jnp.zeros((Hp, 4 * Hp), f32)
    b_p = jnp.zeros((1, 4 * Hp), f32)
    for k in range(4):   # i, f, g, o -> each gets its own Hp-wide lane slab
        wih_p = wih_p.at[:, k * Hp:k * Hp + H].set(wih_t[:, k * H:(k + 1) * H])
        whh_p = whh_p.at[:H, k * Hp:k * Hp + H].set(whh_t[:, k * H:(k + 1) * H])
        b_p = b_p.at[0, k * Hp:k * Hp + H].set(bias[k * H:(k + 1) * H])
    wih_p = wih_p.astype(wdt)
    whh_p = whh_p.astype(wdt)

    wfc_p = (jnp.zeros((Hp, Op), f32)
             .at[:H, :O].set(params["w_fc"].T.astype(f32)).astype(wdt))
    bfc_p = jnp.zeros((1, Op), f32).at[0, :O].set(params["b_fc"].astype(f32))

    # Single pad+transpose of x to time-major (S_pad, Bp, I), kept f32 in HBM
    # (the bf16 cast happens in-kernel, so no extra HBM pass for it).
    # Future work: a fully batch-major x path with per-batch in-kernel GEMMs
    # would remove this pass entirely; a leading "parallel" batch grid axis
    # would use v7x's second TensorCore for B >= 16.
    x_tm = jnp.pad(jnp.swapaxes(x.astype(f32), 0, 1),
                   ((0, S_pad - S), (0, Bp - B), (0, 0)))

    h0_p = jnp.zeros((Bp, Hp), f32).at[:B, :H].set(h0.reshape(B, H).astype(f32))
    c0_p = jnp.zeros((Bp, Hp), f32).at[:B, :H].set(c0.reshape(B, H).astype(f32))

    kernel = _make_kernel(Hp=Hp, S=S, fuse_fc=fuse_fc, compute_dtype=wdt,
                          unroll=min(Tc, 8), mask_tail=mask_tail)

    in_arrays = [x_tm, h0_p, c0_p, wih_p, whh_p, b_p]
    const_shapes = [(Bp, Hp), (Bp, Hp), (I, 4 * Hp), (Hp, 4 * Hp), (1, 4 * Hp)]
    if fuse_fc:
        in_arrays += [wfc_p, bfc_p]
        const_shapes += [(Hp, Op), (1, Op)]

    if fuse_fc:
        out_shape = (jax.ShapeDtypeStruct((Bp, Op), f32),
                     jax.ShapeDtypeStruct((Bp, Hp), f32),
                     jax.ShapeDtypeStruct((Bp, Hp), f32))
        out_specs = [pl.BlockSpec((Bp, Op), lambda t: (0, 0)),
                     pl.BlockSpec((Bp, Hp), lambda t: (0, 0)),
                     pl.BlockSpec((Bp, Hp), lambda t: (0, 0))]
    else:
        out_shape = (jax.ShapeDtypeStruct((Bp, Hp), f32),
                     jax.ShapeDtypeStruct((Bp, Hp), f32))
        out_specs = [pl.BlockSpec((Bp, Hp), lambda t: (0, 0)),
                     pl.BlockSpec((Bp, Hp), lambda t: (0, 0))]

    scratch = [pltpu.VMEM((Bp, Hp), f32),              # h carry
               pltpu.VMEM((Bp, Hp), f32),              # c carry
               pltpu.VMEM((Tc, Bp, 4 * Hp), f32)]      # chunk input projection

    vmem_limit = min(int(vmem_cap * 0.9), 128 * 1024 * 1024)

    def run(single_buffer_consts):
        def const_spec(shape):
            if single_buffer_consts:
                # Grid-invariant operands: one buffer is enough.
                return pl.BlockSpec(shape, lambda t: (0,) * len(shape),
                                    pipeline_mode=pl.Buffered(1))
            return pl.BlockSpec(shape, lambda t: (0,) * len(shape))

        in_specs = [pl.BlockSpec((Tc, Bp, I), lambda t: (t, 0, 0))]   # x chunk
        in_specs += [const_spec(s) for s in const_shapes]

        return pl.pallas_call(
            kernel,
            out_shape=out_shape,
            grid_spec=pltpu.PrefetchScalarGridSpec(
                num_scalar_prefetch=0,
                grid=(n_chunks,),
                in_specs=in_specs,
                out_specs=out_specs,
                scratch_shapes=scratch),
            compiler_params=pltpu.CompilerParams(
                dimension_semantics=("arbitrary",),    # true time recurrence
                vmem_limit_bytes=vmem_limit),
        )(*in_arrays)

    try:
        outs = run(True)
    except Exception:
        # Fallback: default double-buffering if Buffered(1) is unsupported.
        outs = run(False)

    if fuse_fc:
        out_p, hn_p, cn_p = outs
        out = out_p[:B, :O]
    else:
        hn_p, cn_p = outs
        out = (hn_p[:B, :H] @ params["w_fc"].T.astype(f32)
               + params["b_fc"].astype(f32))
    h_n = hn_p[:B, :H].reshape(1, B, H)
    c_n = cn_p[:B, :H].reshape(1, B, H)
    return out, (h_n, c_n)


def init_params(key, input_size, hidden_size, output_size):
    """Deterministic parameter init mimicking nn.LSTM / nn.Linear shapes."""
    k = 1.0 / jnp.sqrt(hidden_size)
    keys = jax.random.split(key, 6)
    return {
        "w_ih": jax.random.uniform(keys[0], (4 * hidden_size, input_size),
                                   jnp.float32, -k, k),
        "w_hh": jax.random.uniform(keys[1], (4 * hidden_size, hidden_size),
                                   jnp.float32, -k, k),
        "b_ih": jax.random.uniform(keys[2], (4 * hidden_size,),
                                   jnp.float32, -k, k),
        "b_hh": jax.random.uniform(keys[3], (4 * hidden_size,),
                                   jnp.float32, -k, k),
        "w_fc": jax.random.uniform(keys[4], (output_size, hidden_size),
                                   jnp.float32, -k, k),
        "b_fc": jax.random.uniform(keys[5], (output_size,),
                                   jnp.float32, -k, k),
    }


def lstm_model_reference(x, hidden, params):
    """Pure-JAX reference with identical semantics (for the sanity check)."""
    h, c = hidden[0][0], hidden[1][0]
    H = params["w_hh"].shape[1]
    wih_t, whh_t = params["w_ih"].T, params["w_hh"].T
    b = params["b_ih"] + params["b_hh"]
    for t in range(x.shape[1]):
        g = x[:, t, :] @ wih_t + h @ whh_t + b
        i = jax.nn.sigmoid(g[:, 0:H])
        f = jax.nn.sigmoid(g[:, H:2 * H])
        gg = jnp.tanh(g[:, 2 * H:3 * H])
        o = jax.nn.sigmoid(g[:, 3 * H:4 * H])
        c = f * c + i * gg
        h = o * jnp.tanh(c)
    out = h @ params["w_fc"].T + params["b_fc"]
    return out, (h[None], c[None])


if __name__ == "__main__":
    B, S, I, H, O = 2, 8, 16, 32, 8
    key = jax.random.PRNGKey(0)
    kx, kp, kx2 = jax.random.split(key, 3)

    params = init_params(kp, I, H, O)
    x = jax.random.normal(kx, (B, S, I), dtype=jnp.float32)
    h0 = jnp.zeros((1, B, H), jnp.float32)   # init_hidden-style zeros
    c0 = jnp.zeros((1, B, H), jnp.float32)

    ref_out, (ref_h, ref_c) = lstm_model_reference(x, (h0, c0), params)

    # 1) f32-weights path: tight tolerance.  (2e-5 instead of 1e-5 only because
    #    the kernel uses the tanh-form sigmoid and MXU accumulation order.)
    out, (h_n, c_n) = lstm_model_forward(x, (h0, c0), params,
                                         weight_dtype=jnp.float32)
    jax.block_until_ready((out, h_n, c_n))
    assert out.shape == (B, O) and h_n.shape == (1, B, H) and c_n.shape == (1, B, H)
    assert jnp.allclose(out, ref_out, atol=2e-5, rtol=1e-5)
    assert jnp.allclose(h_n, ref_h, atol=2e-5, rtol=1e-5)
    assert jnp.allclose(c_n, ref_c, atol=2e-5, rtol=1e-5)

    # 2) default fast path (bf16 weights, f32 accumulation): relaxed tolerance.
    out_bf, (h_bf, c_bf) = lstm_model_forward(x, (h0, c0), params)
    jax.block_until_ready((out_bf, h_bf, c_bf))
    assert jnp.allclose(out_bf, ref_out, atol=5e-2, rtol=5e-2)
    assert jnp.allclose(h_bf, ref_h, atol=5e-2, rtol=5e-2)
    assert jnp.allclose(c_bf, ref_c, atol=5e-2, rtol=5e-2)

    # 3) awkward S: exercises S-padding + tail masking + multi-chunk grid and
    #    the non-fused FC path.
    S2 = 11
    x2 = jax.random.normal(kx2, (B, S2, I), dtype=jnp.float32)
    ref2_out, (ref2_h, ref2_c) = lstm_model_reference(x2, (h0, c0), params)
    out2, (h2, c2) = lstm_model_forward(x2, (h0, c0), params,
                                        weight_dtype=jnp.float32,
                                        time_chunk=8, fuse_fc=False)
    jax.block_until_ready((out2, h2, c2))
    assert jnp.allclose(out2, ref2_out, atol=2e-5, rtol=1e-5)
    assert jnp.allclose(h2, ref2_h, atol=2e-5, rtol=1e-5)
    assert jnp.allclose(c2, ref2_c, atol=2e-5, rtol=1e-5)

    print("KERNEL_OK")
</pallas_src>

<mosaic_0001>
module attributes {stable_mosaic.version = 11 : i64} {
  func.func @kernel(%arg0: i32, %arg1: memref<8x8x16xf32, #tpu.memory_space<vmem>>, %arg2: memref<8x128xf32, #tpu.memory_space<vmem>>, %arg3: memref<8x128xf32, #tpu.memory_space<vmem>>, %arg4: memref<16x512xf32, #tpu.memory_space<vmem>>, %arg5: memref<128x512xf32, #tpu.memory_space<vmem>>, %arg6: memref<1x512xf32, #tpu.memory_space<vmem>>, %arg7: memref<128x128xf32, #tpu.memory_space<vmem>>, %arg8: memref<1x128xf32, #tpu.memory_space<vmem>>, %arg9: memref<8x128xf32, #tpu.memory_space<vmem>>, %arg10: memref<8x128xf32, #tpu.memory_space<vmem>>, %arg11: memref<8x128xf32, #tpu.memory_space<vmem>>, %arg12: memref<8x128xf32, #tpu.memory_space<vmem>>, %arg13: memref<8x128xf32, #tpu.memory_space<vmem>>, %arg14: memref<8x8x512xf32, #tpu.memory_space<vmem>>) attributes {dimension_semantics = [#tpu.dimension_semantics<arbitrary>], iteration_bounds = array<i64: 1>, scalar_prefetch = 0 : i64, scratch_operands = 3 : i64, tpu.core_type = #tpu.core_type<tc>, window_params = [{transform_indices = @transform_0, window_bounds = array<i64: 8, 8, 16>}, {pipeline_mode = #tpu.pipeline_mode<synchronous>, transform_indices = @transform_1, window_bounds = array<i64: 8, 128>}, {pipeline_mode = #tpu.pipeline_mode<synchronous>, transform_indices = @transform_2, window_bounds = array<i64: 8, 128>}, {pipeline_mode = #tpu.pipeline_mode<synchronous>, transform_indices = @transform_3, window_bounds = array<i64: 16, 512>}, {pipeline_mode = #tpu.pipeline_mode<synchronous>, transform_indices = @transform_4, window_bounds = array<i64: 128, 512>}, {pipeline_mode = #tpu.pipeline_mode<synchronous>, transform_indices = @transform_5, window_bounds = array<i64: 1, 512>}, {pipeline_mode = #tpu.pipeline_mode<synchronous>, transform_indices = @transform_6, window_bounds = array<i64: 128, 128>}, {pipeline_mode = #tpu.pipeline_mode<synchronous>, transform_indices = @transform_7, window_bounds = array<i64: 1, 128>}, {pipeline_mode = #tpu.pipeline_mode<synchronous>, transform_indices = @transform_8, window_bounds = array<i64: 8, 128>}, {pipeline_mode = #tpu.pipeline_mode<synchronous>, transform_indices = @transform_9, window_bounds = array<i64: 8, 128>}, {pipeline_mode = #tpu.pipeline_mode<synchronous>, transform_indices = @transform_10, window_bounds = array<i64: 8, 128>}]} {
    %c0_i32 = arith.constant 0 : i32
    %0 = arith.cmpi eq, %arg0, %c0_i32 : i32
    %1 = arith.extui %0 : i1 to i32
    %c0_i32_0 = arith.constant 0 : i32
    %2 = arith.cmpi ne, %1, %c0_i32_0 : i32
    scf.if %2 {
      %c0_133 = arith.constant 0 : index
      %c0_134 = arith.constant 0 : index
      %315 = vector.load %arg2[%c0_133, %c0_134] : memref<8x128xf32, #tpu.memory_space<vmem>>, vector<8x128xf32>
      %c0_135 = arith.constant 0 : index
      %c0_136 = arith.constant 0 : index
      %316 = vector.load %arg12[%c0_135, %c0_136] : memref<8x128xf32, #tpu.memory_space<vmem>>, vector<8x128xf32>
      tpu.vector_store %arg12[%c0_135, %c0_136], %315 {strides = array<i32>} : memref<8x128xf32, #tpu.memory_space<vmem>>, vector<8x128xf32>,
      %c0_137 = arith.constant 0 : index
      %c0_138 = arith.constant 0 : index
      %317 = vector.load %arg3[%c0_137, %c0_138] : memref<8x128xf32, #tpu.memory_space<vmem>>, vector<8x128xf32>
      %c0_139 = arith.constant 0 : index
      %c0_140 = arith.constant 0 : index
      %318 = vector.load %arg13[%c0_139, %c0_140] : memref<8x128xf32, #tpu.memory_space<vmem>>, vector<8x128xf32>
      tpu.vector_store %arg13[%c0_139, %c0_140], %317 {strides = array<i32>} : memref<8x128xf32, #tpu.memory_space<vmem>>, vector<8x128xf32>,
    } else {
    }
    %c0 = arith.constant 0 : index
    %c0_1 = arith.constant 0 : index
    %c0_2 = arith.constant 0 : index
    %3 = vector.load %arg1[%c0, %c0_1, %c0_2] : memref<8x8x16xf32, #tpu.memory_space<vmem>>, vector<8x8x16xf32>
    %4 = vector.shape_cast %3 : vector<8x8x16xf32> to vector<64x16xf32>
    %c0_3 = arith.constant 0 : index
    %c0_4 = arith.constant 0 : index
    %5 = vector.load %arg4[%c0_3, %c0_4] : memref<16x512xf32, #tpu.memory_space<vmem>>, vector<16x512xf32>
    %cst = arith.constant dense<0.000000e+00> : vector<64x512xf32>
    %6 = tpu.matmul %4, %5, %cst {dimension_numbers = #tpu.dot_dimension_numbers<[1], [0], [0], [1], [0, 0, 1, 1], [], []>} : vector<64x16xf32>, vector<16x512xf32>, vector<64x512xf32> -> vector<64x512xf32>
    %c0_5 = arith.constant 0 : index
    %c0_6 = arith.constant 0 : index
    %7 = vector.load %arg6[%c0_5, %c0_6] : memref<1x512xf32, #tpu.memory_space<vmem>>, vector<1x512xf32>
    %8 = vector.broadcast %7 : vector<1x512xf32> to vector<64x512xf32>
    %9 = arith.addf %6, %8 : vector<64x512xf32>
    %10 = vector.shape_cast %9 : vector<64x512xf32> to vector<8x8x512xf32>
    %c0_7 = arith.constant 0 : index
    %c0_8 = arith.constant 0 : index
    %c0_9 = arith.constant 0 : index
    %11 = vector.load %arg14[%c0_7, %c0_8, %c0_9] : memref<8x8x512xf32, #tpu.memory_space<vmem>>, vector<8x8x512xf32>
    tpu.vector_store %arg14[%c0_7, %c0_8, %c0_9], %10 {strides = array<i32>} : memref<8x8x512xf32, #tpu.memory_space<vmem>>, vector<8x8x512xf32>,
    %c0_10 = arith.constant 0 : index
    %c0_11 = arith.constant 0 : index
    %12 = vector.load %arg12[%c0_10, %c0_11] : memref<8x128xf32, #tpu.memory_space<vmem>>, vector<8x128xf32>
    %c0_12 = arith.constant 0 : index
    %c0_13 = arith.constant 0 : index
    %13 = vector.load %arg13[%c0_12, %c0_13] : memref<8x128xf32, #tpu.memory_space<vmem>>, vector<8x128xf32>
    %c0_i32_14 = arith.constant 0 : i32
    %14 = arith.index_cast %c0_i32_14 : i32 to index
    %c0_15 = arith.constant 0 : index
    %c0_16 = arith.constant 0 : index
    %15 = vector.load %arg14[%14, %c0_15, %c0_16] : memref<8x8x512xf32, #tpu.memory_space<vmem>>, vector<1x8x512xf32>
    %16 = vector.shape_cast %15 : vector<1x8x512xf32> to vector<8x512xf32>
    %c0_17 = arith.constant 0 : index
    %c0_18 = arith.constant 0 : index
    %17 = vector.load %arg5[%c0_17, %c0_18] : memref<128x512xf32, #tpu.memory_space<vmem>>, vector<128x512xf32>
    %cst_19 = arith.constant dense<0.000000e+00> : vector<8x512xf32>
    %18 = tpu.matmul %12, %17, %cst_19 {dimension_numbers = #tpu.dot_dimension_numbers<[1], [0], [0], [1], [0, 0, 1, 1], [], []>} : vector<8x128xf32>, vector<128x512xf32>, vector<8x512xf32> -> vector<8x512xf32>
    %19 = arith.addf %16, %18 : vector<8x512xf32>
    %20 = vector.extract_strided_slice %19 {offsets = [0, 0], sizes = [8, 128], strides = [1, 1]} : vector<8x512xf32> to vector<8x128xf32>
    %cst_20 = arith.constant 5.000000e-01 : f32
    %21 = vector.broadcast %cst_20 : f32 to vector<8x128xf32>
    %22 = arith.mulf %21, %20 : vector<8x128xf32>
    %23 = math.tanh %22 : vector<8x128xf32>
    %cst_21 = arith.constant 5.000000e-01 : f32
    %24 = vector.broadcast %cst_21 : f32 to vector<8x128xf32>
    %25 = arith.mulf %24, %23 : vector<8x128xf32>
    %cst_22 = arith.constant 5.000000e-01 : f32
    %26 = vector.broadcast %cst_22 : f32 to vector<8x128xf32>
    %27 = arith.addf %25, %26 : vector<8x128xf32>
    %28 = vector.extract_strided_slice %19 {offsets = [0, 128], sizes = [8, 128], strides = [1, 1]} : vector<8x512xf32> to vector<8x128xf32>
    %cst_23 = arith.constant 5.000000e-01 : f32
    %29 = vector.broadcast %cst_23 : f32 to vector<8x128xf32>
    %30 = arith.mulf %29, %28 : vector<8x128xf32>
    %31 = math.tanh %30 : vector<8x128xf32>
    %cst_24 = arith.constant 5.000000e-01 : f32
    %32 = vector.broadcast %cst_24 : f32 to vector<8x128xf32>
    %33 = arith.mulf %32, %31 : vector<8x128xf32>
    %cst_25 = arith.constant 5.000000e-01 : f32
    %34 = vector.broadcast %cst_25 : f32 to vector<8x128xf32>
    %35 = arith.addf %33, %34 : vector<8x128xf32>
    %36 = vector.extract_strided_slice %19 {offsets = [0, 256], sizes = [8, 128], strides = [1, 1]} : vector<8x512xf32> to vector<8x128xf32>
    %37 = math.tanh %36 : vector<8x128xf32>
    %38 = vector.extract_strided_slice %19 {offsets = [0, 384], sizes = [8, 128], strides = [1, 1]} : vector<8x512xf32> to vector<8x128xf32>
    %cst_26 = arith.constant 5.000000e-01 : f32
    %39 = vector.broadcast %cst_26 : f32 to vector<8x128xf32>
    %40 = arith.mulf %39, %38 : vector<8x128xf32>
    %41 = math.tanh %40 : vector<8x128xf32>
    %cst_27 = arith.constant 5.000000e-01 : f32
    %42 = vector.broadcast %cst_27 : f32 to vector<8x128xf32>
    %43 = arith.mulf %42, %41 : vector<8x128xf32>
    %cst_28 = arith.constant 5.000000e-01 : f32
    %44 = vector.broadcast %cst_28 : f32 to vector<8x128xf32>
    %45 = arith.addf %43, %44 : vector<8x128xf32>
    %46 = arith.mulf %35, %13 : vector<8x128xf32>
    %47 = arith.mulf %27, %37 : vector<8x128xf32>
    %48 = arith.addf %46, %47 : vector<8x128xf32>
    %49 = math.tanh %48 : vector<8x128xf32>
    %50 = arith.mulf %45, %49 : vector<8x128xf32>
    %c1_i32 = arith.constant 1 : i32
    %51 = arith.index_cast %c1_i32 : i32 to index
    %c0_29 = arith.constant 0 : index
    %c0_30 = arith.constant 0 : index
    %52 = vector.load %arg14[%51, %c0_29, %c0_30] : memref<8x8x512xf32, #tpu.memory_space<vmem>>, vector<1x8x512xf32>
    %53 = vector.shape_cast %52 : vector<1x8x512xf32> to vector<8x512xf32>
    %c0_31 = arith.constant 0 : index
    %c0_32 = arith.constant 0 : index
    %54 = vector.load %arg5[%c0_31, %c0_32] : memref<128x512xf32, #tpu.memory_space<vmem>>, vector<128x512xf32>
    %cst_33 = arith.constant dense<0.000000e+00> : vector<8x512xf32>
    %55 = tpu.matmul %50, %54, %cst_33 {dimension_numbers = #tpu.dot_dimension_numbers<[1], [0], [0], [1], [0, 0, 1, 1], [], []>} : vector<8x128xf32>, vector<128x512xf32>, vector<8x512xf32> -> vector<8x512xf32>
    %56 = arith.addf %53, %55 : vector<8x512xf32>
    %57 = vector.extract_strided_slice %56 {offsets = [0, 0], sizes = [8, 128], strides = [1, 1]} : vector<8x512xf32> to vector<8x128xf32>
    %cst_34 = arith.constant 5.000000e-01 : f32
    %58 = vector.broadcast %cst_34 : f32 to vector<8x128xf32>
    %59 = arith.mulf %58, %57 : vector<8x128xf32>
    %60 = math.tanh %59 : vector<8x128xf32>
    %cst_35 = arith.constant 5.000000e-01 : f32
    %61 = vector.broadcast %cst_35 : f32 to vector<8x128xf32>
    %62 = arith.mulf %61, %60 : vector<8x128xf32>
    %cst_36 = arith.constant 5.000000e-01 : f32
    %63 = vector.broadcast %cst_36 : f32 to vector<8x128xf32>
    %64 = arith.addf %62, %63 : vector<8x128xf32>
    %65 = vector.extract_strided_slice %56 {offsets = [0, 128], sizes = [8, 128], strides = [1, 1]} : vector<8x512xf32> to vector<8x128xf32>
    %cst_37 = arith.constant 5.000000e-01 : f32
    %66 = vector.broadcast %cst_37 : f32 to vector<8x128xf32>
    %67 = arith.mulf %66, %65 : vector<8x128xf32>
    %68 = math.tanh %67 : vector<8x128xf32>
    %cst_38 = arith.constant 5.000000e-01 : f32
    %69 = vector.broadcast %cst_38 : f32 to vector<8x128xf32>
    %70 = arith.mulf %69, %68 : vector<8x128xf32>
    %cst_39 = arith.constant 5.000000e-01 : f32
    %71 = vector.broadcast %cst_39 : f32 to vector<8x128xf32>
    %72 = arith.addf %70, %71 : vector<8x128xf32>
    %73 = vector.extract_strided_slice %56 {offsets = [0, 256], sizes = [8, 128], strides = [1, 1]} : vector<8x512xf32> to vector<8x128xf32>
    %74 = math.tanh %73 : vector<8x128xf32>
    %75 = vector.extract_strided_slice %56 {offsets = [0, 384], sizes = [8, 128], strides = [1, 1]} : vector<8x512xf32> to vector<8x128xf32>
    %cst_40 = arith.constant 5.000000e-01 : f32
    %76 = vector.broadcast %cst_40 : f32 to vector<8x128xf32>
    %77 = arith.mulf %76, %75 : vector<8x128xf32>
    %78 = math.tanh %77 : vector<8x128xf32>
    %cst_41 = arith.constant 5.000000e-01 : f32
    %79 = vector.broadcast %cst_41 : f32 to vector<8x128xf32>
    %80 = arith.mulf %79, %78 : vector<8x128xf32>
    %cst_42 = arith.constant 5.000000e-01 : f32
    %81 = vector.broadcast %cst_42 : f32 to vector<8x128xf32>
    %82 = arith.addf %80, %81 : vector<8x128xf32>
    %83 = arith.mulf %72, %48 : vector<8x128xf32>
    %84 = arith.mulf %64, %74 : vector<8x128xf32>
    %85 = arith.addf %83, %84 : vector<8x128xf32>
    %86 = math.tanh %85 : vector<8x128xf32>
    %87 = arith.mulf %82, %86 : vector<8x128xf32>
    %c2_i32 = arith.constant 2 : i32
    %88 = arith.index_cast %c2_i32 : i32 to index
    %c0_43 = arith.constant 0 : index
    %c0_44 = arith.constant 0 : index
    %89 = vector.load %arg14[%88, %c0_43, %c0_44] : memref<8x8x512xf32, #tpu.memory_space<vmem>>, vector<1x8x512xf32>
    %90 = vector.shape_cast %89 : vector<1x8x512xf32> to vector<8x512xf32>
    %c0_45 = arith.constant 0 : index
    %c0_46 = arith.constant 0 : index
    %91 = vector.load %arg5[%c0_45, %c0_46] : memref<128x512xf32, #tpu.memory_space<vmem>>, vector<128x512xf32>
    %cst_47 = arith.constant dense<0.000000e+00> : vector<8x512xf32>
    %92 = tpu.matmul %87, %91, %cst_47 {dimension_numbers = #tpu.dot_dimension_numbers<[1], [0], [0], [1], [0, 0, 1, 1], [], []>} : vector<8x128xf32>, vector<128x512xf32>, vector<8x512xf32> -> vector<8x512xf32>
    %93 = arith.addf %90, %92 : vector<8x512xf32>
    %94 = vector.extract_strided_slice %93 {offsets = [0, 0], sizes = [8, 128], strides = [1, 1]} : vector<8x512xf32> to vector<8x128xf32>
    %cst_48 = arith.constant 5.000000e-01 : f32
    %95 = vector.broadcast %cst_48 : f32 to vector<8x128xf32>
    %96 = arith.mulf %95, %94 : vector<8x128xf32>
    %97 = math.tanh %96 : vector<8x128xf32>
    %cst_49 = arith.constant 5.000000e-01 : f32
    %98 = vector.broadcast %cst_49 : f32 to vector<8x128xf32>
    %99 = arith.mulf %98, %97 : vector<8x128xf32>
    %cst_50 = arith.constant 5.000000e-01 : f32
    %100 = vector.broadcast %cst_50 : f32 to vector<8x128xf32>
    %101 = arith.addf %99, %100 : vector<8x128xf32>
    %102 = vector.extract_strided_slice %93 {offsets = [0, 128], sizes = [8, 128], strides = [1, 1]} : vector<8x512xf32> to vector<8x128xf32>
    %cst_51 = arith.constant 5.000000e-01 : f32
    %103 = vector.broadcast %cst_51 : f32 to vector<8x128xf32>
    %104 = arith.mulf %103, %102 : vector<8x128xf32>
    %105 = math.tanh %104 : vector<8x128xf32>
    %cst_52 = arith.constant 5.000000e-01 : f32
    %106 = vector.broadcast %cst_52 : f32 to vector<8x128xf32>
    %107 = arith.mulf %106, %105 : vector<8x128xf32>
    %cst_53 = arith.constant 5.000000e-01 : f32
    %108 = vector.broadcast %cst_53 : f32 to vector<8x128xf32>
    %109 = arith.addf %107, %108 : vector<8x128xf32>
    %110 = vector.extract_strided_slice %93 {offsets = [0, 256], sizes = [8, 128], strides = [1, 1]} : vector<8x512xf32> to vector<8x128xf32>
    %111 = math.tanh %110 : vector<8x128xf32>
    %112 = vector.extract_strided_slice %93 {offsets = [0, 384], sizes = [8, 128], strides = [1, 1]} : vector<8x512xf32> to vector<8x128xf32>
    %cst_54 = arith.constant 5.000000e-01 : f32
    %113 = vector.broadcast %cst_54 : f32 to vector<8x128xf32>
    %114 = arith.mulf %113, %112 : vector<8x128xf32>
    %115 = math.tanh %114 : vector<8x128xf32>
    %cst_55 = arith.constant 5.000000e-01 : f32
    %116 = vector.broadcast %cst_55 : f32 to vector<8x128xf32>
    %117 = arith.mulf %116, %115 : vector<8x128xf32>
    %cst_56 = arith.constant 5.000000e-01 : f32
    %118 = vector.broadcast %cst_56 : f32 to vector<8x128xf32>
    %119 = arith.addf %117, %118 : vector<8x128xf32>
    %120 = arith.mulf %109, %85 : vector<8x128xf32>
    %121 = arith.mulf %101, %111 : vector<8x128xf32>
    %122 = arith.addf %120, %121 : vector<8x128xf32>
    %123 = math.tanh %122 : vector<8x128xf32>
    %124 = arith.mulf %119, %123 : vector<8x128xf32>
    %c3_i32 = arith.constant 3 : i32
    %125 = arith.index_cast %c3_i32 : i32 to index
    %c0_57 = arith.constant 0 : index
    %c0_58 = arith.constant 0 : index
    %126 = vector.load %arg14[%125, %c0_57, %c0_58] : memref<8x8x512xf32, #tpu.memory_space<vmem>>, vector<1x8x512xf32>
    %127 = vector.shape_cast %126 : vector<1x8x512xf32> to vector<8x512xf32>
    %c0_59 = arith.constant 0 : index
    %c0_60 = arith.constant 0 : index
    %128 = vector.load %arg5[%c0_59, %c0_60] : memref<128x512xf32, #tpu.memory_space<vmem>>, vector<128x512xf32>
    %cst_61 = arith.constant dense<0.000000e+00> : vector<8x512xf32>
    %129 = tpu.matmul %124, %128, %cst_61 {dimension_numbers = #tpu.dot_dimension_numbers<[1], [0], [0], [1], [0, 0, 1, 1], [], []>} : vector<8x128xf32>, vector<128x512xf32>, vector<8x512xf32> -> vector<8x512xf32>
    %130 = arith.addf %127, %129 : vector<8x512xf32>
    %131 = vector.extract_strided_slice %130 {offsets = [0, 0], sizes = [8, 128], strides = [1, 1]} : vector<8x512xf32> to vector<8x128xf32>
    %cst_62 = arith.constant 5.000000e-01 : f32
    %132 = vector.broadcast %cst_62 : f32 to vector<8x128xf32>
    %133 = arith.mulf %132, %131 : vector<8x128xf32>
    %134 = math.tanh %133 : vector<8x128xf32>
    %cst_63 = arith.constant 5.000000e-01 : f32
    %135 = vector.broadcast %cst_63 : f32 to vector<8x128xf32>
    %136 = arith.mulf %135, %134 : vector<8x128xf32>
    %cst_64 = arith.constant 5.000000e-01 : f32
    %137 = vector.broadcast %cst_64 : f32 to vector<8x128xf32>
    %138 = arith.addf %136, %137 : vector<8x128xf32>
    %139 = vector.extract_strided_slice %130 {offsets = [0, 128], sizes = [8, 128], strides = [1, 1]} : vector<8x512xf32> to vector<8x128xf32>
    %cst_65 = arith.constant 5.000000e-01 : f32
    %140 = vector.broadcast %cst_65 : f32 to vector<8x128xf32>
    %141 = arith.mulf %140, %139 : vector<8x128xf32>
    %142 = math.tanh %141 : vector<8x128xf32>
    %cst_66 = arith.constant 5.000000e-01 : f32
    %143 = vector.broadcast %cst_66 : f32 to vector<8x128xf32>
    %144 = arith.mulf %143, %142 : vector<8x128xf32>
    %cst_67 = arith.constant 5.000000e-01 : f32
    %145 = vector.broadcast %cst_67 : f32 to vector<8x128xf32>
    %146 = arith.addf %144, %145 : vector<8x128xf32>
    %147 = vector.extract_strided_slice %130 {offsets = [0, 256], sizes = [8, 128], strides = [1, 1]} : vector<8x512xf32> to vector<8x128xf32>
    %148 = math.tanh %147 : vector<8x128xf32>
    %149 = vector.extract_strided_slice %130 {offsets = [0, 384], sizes = [8, 128], strides = [1, 1]} : vector<8x512xf32> to vector<8x128xf32>
    %cst_68 = arith.constant 5.000000e-01 : f32
    %150 = vector.broadcast %cst_68 : f32 to vector<8x128xf32>
    %151 = arith.mulf %150, %149 : vector<8x128xf32>
    %152 = math.tanh %151 : vector<8x128xf32>
    %cst_69 = arith.constant 5.000000e-01 : f32
    %153 = vector.broadcast %cst_69 : f32 to vector<8x128xf32>
    %154 = arith.mulf %153, %152 : vector<8x128xf32>
    %cst_70 = arith.constant 5.000000e-01 : f32
    %155 = vector.broadcast %cst_70 : f32 to vector<8x128xf32>
    %156 = arith.addf %154, %155 : vector<8x128xf32>
    %157 = arith.mulf %146, %122 : vector<8x128xf32>
    %158 = arith.mulf %138, %148 : vector<8x128xf32>
    %159 = arith.addf %157, %158 : vector<8x128xf32>
    %160 = math.tanh %159 : vector<8x128xf32>
    %161 = arith.mulf %156, %160 : vector<8x128xf32>
    %c4_i32 = arith.constant 4 : i32
    %162 = arith.index_cast %c4_i32 : i32 to index
    %c0_71 = arith.constant 0 : index
    %c0_72 = arith.constant 0 : index
    %163 = vector.load %arg14[%162, %c0_71, %c0_72] : memref<8x8x512xf32, #tpu.memory_space<vmem>>, vector<1x8x512xf32>
    %164 = vector.shape_cast %163 : vector<1x8x512xf32> to vector<8x512xf32>
    %c0_73 = arith.constant 0 : index
    %c0_74 = arith.constant 0 : index
    %165 = vector.load %arg5[%c0_73, %c0_74] : memref<128x512xf32, #tpu.memory_space<vmem>>, vector<128x512xf32>
    %cst_75 = arith.constant dense<0.000000e+00> : vector<8x512xf32>
    %166 = tpu.matmul %161, %165, %cst_75 {dimension_numbers = #tpu.dot_dimension_numbers<[1], [0], [0], [1], [0, 0, 1, 1], [], []>} : vector<8x128xf32>, vector<128x512xf32>, vector<8x512xf32> -> vector<8x512xf32>
    %167 = arith.addf %164, %166 : vector<8x512xf32>
    %168 = vector.extract_strided_slice %167 {offsets = [0, 0], sizes = [8, 128], strides = [1, 1]} : vector<8x512xf32> to vector<8x128xf32>
    %cst_76 = arith.constant 5.000000e-01 : f32
    %169 = vector.broadcast %cst_76 : f32 to vector<8x128xf32>
    %170 = arith.mulf %169, %168 : vector<8x128xf32>
    %171 = math.tanh %170 : vector<8x128xf32>
    %cst_77 = arith.constant 5.000000e-01 : f32
    %172 = vector.broadcast %cst_77 : f32 to vector<8x128xf32>
    %173 = arith.mulf %172, %171 : vector<8x128xf32>
    %cst_78 = arith.constant 5.000000e-01 : f32
    %174 = vector.broadcast %cst_78 : f32 to vector<8x128xf32>
    %175 = arith.addf %173, %174 : vector<8x128xf32>
    %176 = vector.extract_strided_slice %167 {offsets = [0, 128], sizes = [8, 128], strides = [1, 1]} : vector<8x512xf32> to vector<8x128xf32>
    %cst_79 = arith.constant 5.000000e-01 : f32
    %177 = vector.broadcast %cst_79 : f32 to vector<8x128xf32>
    %178 = arith.mulf %177, %176 : vector<8x128xf32>
    %179 = math.tanh %178 : vector<8x128xf32>
    %cst_80 = arith.constant 5.000000e-01 : f32
    %180 = vector.broadcast %cst_80 : f32 to vector<8x128xf32>
    %181 = arith.mulf %180, %179 : vector<8x128xf32>
    %cst_81 = arith.constant 5.000000e-01 : f32
    %182 = vector.broadcast %cst_81 : f32 to vector<8x128xf32>
    %183 = arith.addf %181, %182 : vector<8x128xf32>
    %184 = vector.extract_strided_slice %167 {offsets = [0, 256], sizes = [8, 128], strides = [1, 1]} : vector<8x512xf32> to vector<8x128xf32>
    %185 = math.tanh %184 : vector<8x128xf32>
    %186 = vector.extract_strided_slice %167 {offsets = [0, 384], sizes = [8, 128], strides = [1, 1]} : vector<8x512xf32> to vector<8x128xf32>
    %cst_82 = arith.constant 5.000000e-01 : f32
    %187 = vector.broadcast %cst_82 : f32 to vector<8x128xf32>
    %188 = arith.mulf %187, %186 : vector<8x128xf32>
    %189 = math.tanh %188 : vector<8x128xf32>
    %cst_83 = arith.constant 5.000000e-01 : f32
    %190 = vector.broadcast %cst_83 : f32 to vector<8x128xf32>
    %191 = arith.mulf %190, %189 : vector<8x128xf32>
    %cst_84 = arith.constant 5.000000e-01 : f32
    %192 = vector.broadcast %cst_84 : f32 to vector<8x128xf32>
    %193 = arith.addf %191, %192 : vector<8x128xf32>
    %194 = arith.mulf %183, %159 : vector<8x128xf32>
    %195 = arith.mulf %175, %185 : vector<8x128xf32>
    %196 = arith.addf %194, %195 : vector<8x128xf32>
    %197 = math.tanh %196 : vector<8x128xf32>
    %198 = arith.mulf %193, %197 : vector<8x128xf32>
    %c5_i32 = arith.constant 5 : i32
    %199 = arith.index_cast %c5_i32 : i32 to index
    %c0_85 = arith.constant 0 : index
    %c0_86 = arith.constant 0 : index
    %200 = vector.load %arg14[%199, %c0_85, %c0_86] : memref<8x8x512xf32, #tpu.memory_space<vmem>>, vector<1x8x512xf32>
    %201 = vector.shape_cast %200 : vector<1x8x512xf32> to vector<8x512xf32>
    %c0_87 = arith.constant 0 : index
    %c0_88 = arith.constant 0 : index
    %202 = vector.load %arg5[%c0_87, %c0_88] : memref<128x512xf32, #tpu.memory_space<vmem>>, vector<128x512xf32>
    %cst_89 = arith.constant dense<0.000000e+00> : vector<8x512xf32>
    %203 = tpu.matmul %198, %202, %cst_89 {dimension_numbers = #tpu.dot_dimension_numbers<[1], [0], [0], [1], [0, 0, 1, 1], [], []>} : vector<8x128xf32>, vector<128x512xf32>, vector<8x512xf32> -> vector<8x512xf32>
    %204 = arith.addf %201, %203 : vector<8x512xf32>
    %205 = vector.extract_strided_slice %204 {offsets = [0, 0], sizes = [8, 128], strides = [1, 1]} : vector<8x512xf32> to vector<8x128xf32>
    %cst_90 = arith.constant 5.000000e-01 : f32
    %206 = vector.broadcast %cst_90 : f32 to vector<8x128xf32>
    %207 = arith.mulf %206, %205 : vector<8x128xf32>
    %208 = math.tanh %207 : vector<8x128xf32>
    %cst_91 = arith.constant 5.000000e-01 : f32
    %209 = vector.broadcast %cst_91 : f32 to vector<8x128xf32>
    %210 = arith.mulf %209, %208 : vector<8x128xf32>
    %cst_92 = arith.constant 5.000000e-01 : f32
    %211 = vector.broadcast %cst_92 : f32 to vector<8x128xf32>
    %212 = arith.addf %210, %211 : vector<8x128xf32>
    %213 = vector.extract_strided_slice %204 {offsets = [0, 128], sizes = [8, 128], strides = [1, 1]} : vector<8x512xf32> to vector<8x128xf32>
    %cst_93 = arith.constant 5.000000e-01 : f32
    %214 = vector.broadcast %cst_93 : f32 to vector<8x128xf32>
    %215 = arith.mulf %214, %213 : vector<8x128xf32>
    %216 = math.tanh %215 : vector<8x128xf32>
    %cst_94 = arith.constant 5.000000e-01 : f32
    %217 = vector.broadcast %cst_94 : f32 to vector<8x128xf32>
    %218 = arith.mulf %217, %216 : vector<8x128xf32>
    %cst_95 = arith.constant 5.000000e-01 : f32
    %219 = vector.broadcast %cst_95 : f32 to vector<8x128xf32>
    %220 = arith.addf %218, %219 : vector<8x128xf32>
    %221 = vector.extract_strided_slice %204 {offsets = [0, 256], sizes = [8, 128], strides = [1, 1]} : vector<8x512xf32> to vector<8x128xf32>
    %222 = math.tanh %221 : vector<8x128xf32>
    %223 = vector.extract_strided_slice %204 {offsets = [0, 384], sizes = [8, 128], strides = [1, 1]} : vector<8x512xf32> to vector<8x128xf32>
    %cst_96 = arith.constant 5.000000e-01 : f32
    %224 = vector.broadcast %cst_96 : f32 to vector<8x128xf32>
    %225 = arith.mulf %224, %223 : vector<8x128xf32>
    %226 = math.tanh %225 : vector<8x128xf32>
    %cst_97 = arith.constant 5.000000e-01 : f32
    %227 = vector.broadcast %cst_97 : f32 to vector<8x128xf32>
    %228 = arith.mulf %227, %226 : vector<8x128xf32>
    %cst_98 = arith.constant 5.000000e-01 : f32
    %229 = vector.broadcast %cst_98 : f32 to vector<8x128xf32>
    %230 = arith.addf %228, %229 : vector<8x128xf32>
    %231 = arith.mulf %220, %196 : vector<8x128xf32>
    %232 = arith.mulf %212, %222 : vector<8x128xf32>
    %233 = arith.addf %231, %232 : vector<8x128xf32>
    %234 = math.tanh %233 : vector<8x128xf32>
    %235 = arith.mulf %230, %234 : vector<8x128xf32>
    %c6_i32 = arith.constant 6 : i32
    %236 = arith.index_cast %c6_i32 : i32 to index
    %c0_99 = arith.constant 0 : index
    %c0_100 = arith.constant 0 : index
    %237 = vector.load %arg14[%236, %c0_99, %c0_100] : memref<8x8x512xf32, #tpu.memory_space<vmem>>, vector<1x8x512xf32>
    %238 = vector.shape_cast %237 : vector<1x8x512xf32> to vector<8x512xf32>
    %c0_101 = arith.constant 0 : index
    %c0_102 = arith.constant 0 : index
    %239 = vector.load %arg5[%c0_101, %c0_102] : memref<128x512xf32, #tpu.memory_space<vmem>>, vector<128x512xf32>
    %cst_103 = arith.constant dense<0.000000e+00> : vector<8x512xf32>
    %240 = tpu.matmul %235, %239, %cst_103 {dimension_numbers = #tpu.dot_dimension_numbers<[1], [0], [0], [1], [0, 0, 1, 1], [], []>} : vector<8x128xf32>, vector<128x512xf32>, vector<8x512xf32> -> vector<8x512xf32>
    %241 = arith.addf %238, %240 : vector<8x512xf32>
    %242 = vector.extract_strided_slice %241 {offsets = [0, 0], sizes = [8, 128], strides = [1, 1]} : vector<8x512xf32> to vector<8x128xf32>
    %cst_104 = arith.constant 5.000000e-01 : f32
    %243 = vector.broadcast %cst_104 : f32 to vector<8x128xf32>
    %244 = arith.mulf %243, %242 : vector<8x128xf32>
    %245 = math.tanh %244 : vector<8x128xf32>
    %cst_105 = arith.constant 5.000000e-01 : f32
    %246 = vector.broadcast %cst_105 : f32 to vector<8x128xf32>
    %247 = arith.mulf %246, %245 : vector<8x128xf32>
    %cst_106 = arith.constant 5.000000e-01 : f32
    %248 = vector.broadcast %cst_106 : f32 to vector<8x128xf32>
    %249 = arith.addf %247, %248 : vector<8x128xf32>
    %250 = vector.extract_strided_slice %241 {offsets = [0, 128], sizes = [8, 128], strides = [1, 1]} : vector<8x512xf32> to vector<8x128xf32>
    %cst_107 = arith.constant 5.000000e-01 : f32
    %251 = vector.broadcast %cst_107 : f32 to vector<8x128xf32>
    %252 = arith.mulf %251, %250 : vector<8x128xf32>
    %253 = math.tanh %252 : vector<8x128xf32>
    %cst_108 = arith.constant 5.000000e-01 : f32
    %254 = vector.broadcast %cst_108 : f32 to vector<8x128xf32>
    %255 = arith.mulf %254, %253 : vector<8x128xf32>
    %cst_109 = arith.constant 5.000000e-01 : f32
    %256 = vector.broadcast %cst_109 : f32 to vector<8x128xf32>
    %257 = arith.addf %255, %256 : vector<8x128xf32>
    %258 = vector.extract_strided_slice %241 {offsets = [0, 256], sizes = [8, 128], strides = [1, 1]} : vector<8x512xf32> to vector<8x128xf32>
    %259 = math.tanh %258 : vector<8x128xf32>
    %260 = vector.extract_strided_slice %241 {offsets = [0, 384], sizes = [8, 128], strides = [1, 1]} : vector<8x512xf32> to vector<8x128xf32>
    %cst_110 = arith.constant 5.000000e-01 : f32
    %261 = vector.broadcast %cst_110 : f32 to vector<8x128xf32>
    %262 = arith.mulf %261, %260 : vector<8x128xf32>
    %263 = math.tanh %262 : vector<8x128xf32>
    %cst_111 = arith.constant 5.000000e-01 : f32
    %264 = vector.broadcast %cst_111 : f32 to vector<8x128xf32>
    %265 = arith.mulf %264, %263 : vector<8x128xf32>
    %cst_112 = arith.constant 5.000000e-01 : f32
    %266 = vector.broadcast %cst_112 : f32 to vector<8x128xf32>
    %267 = arith.addf %265, %266 : vector<8x128xf32>
    %268 = arith.mulf %257, %233 : vector<8x128xf32>
    %269 = arith.mulf %249, %259 : vector<8x128xf32>
    %270 = arith.addf %268, %269 : vector<8x128xf32>
    %271 = math.tanh %270 : vector<8x128xf32>
    %272 = arith.mulf %267, %271 : vector<8x128xf32>
    %c7_i32 = arith.constant 7 : i32
    %273 = arith.index_cast %c7_i32 : i32 to index
    %c0_113 = arith.constant 0 : index
    %c0_114 = arith.constant 0 : index
    %274 = vector.load %arg14[%273, %c0_113, %c0_114] : memref<8x8x512xf32, #tpu.memory_space<vmem>>, vector<1x8x512xf32>
    %275 = vector.shape_cast %274 : vector<1x8x512xf32> to vector<8x512xf32>
    %c0_115 = arith.constant 0 : index
    %c0_116 = arith.constant 0 : index
    %276 = vector.load %arg5[%c0_115, %c0_116] : memref<128x512xf32, #tpu.memory_space<vmem>>, vector<128x512xf32>
    %cst_117 = arith.constant dense<0.000000e+00> : vector<8x512xf32>
    %277 = tpu.matmul %272, %276, %cst_117 {dimension_numbers = #tpu.dot_dimension_numbers<[1], [0], [0], [1], [0, 0, 1, 1], [], []>} : vector<8x128xf32>, vector<128x512xf32>, vector<8x512xf32> -> vector<8x512xf32>
    %278 = arith.addf %275, %277 : vector<8x512xf32>
    %279 = vector.extract_strided_slice %278 {offsets = [0, 0], sizes = [8, 128], strides = [1, 1]} : vector<8x512xf32> to vector<8x128xf32>
    %cst_118 = arith.constant 5.000000e-01 : f32
    %280 = vector.broadcast %cst_118 : f32 to vector<8x128xf32>
    %281 = arith.mulf %280, %279 : vector<8x128xf32>
    %282 = math.tanh %281 : vector<8x128xf32>
    %cst_119 = arith.constant 5.000000e-01 : f32
    %283 = vector.broadcast %cst_119 : f32 to vector<8x128xf32>
    %284 = arith.mulf %283, %282 : vector<8x128xf32>
    %cst_120 = arith.constant 5.000000e-01 : f32
    %285 = vector.broadcast %cst_120 : f32 to vector<8x128xf32>
    %286 = arith.addf %284, %285 : vector<8x128xf32>
    %287 = vector.extract_strided_slice %278 {offsets = [0, 128], sizes = [8, 128], strides = [1, 1]} : vector<8x512xf32> to vector<8x128xf32>
    %cst_121 = arith.constant 5.000000e-01 : f32
    %288 = vector.broadcast %cst_121 : f32 to vector<8x128xf32>
    %289 = arith.mulf %288, %287 : vector<8x128xf32>
    %290 = math.tanh %289 : vector<8x128xf32>
    %cst_122 = arith.constant 5.000000e-01 : f32
    %291 = vector.broadcast %cst_122 : f32 to vector<8x128xf32>
    %292 = arith.mulf %291, %290 : vector<8x128xf32>
    %cst_123 = arith.constant 5.000000e-01 : f32
    %293 = vector.broadcast %cst_123 : f32 to vector<8x128xf32>
    %294 = arith.addf %292, %293 : vector<8x128xf32>
    %295 = vector.extract_strided_slice %278 {offsets = [0, 256], sizes = [8, 128], strides = [1, 1]} : vector<8x512xf32> to vector<8x128xf32>
    %296 = math.tanh %295 : vector<8x128xf32>
    %297 = vector.extract_strided_slice %278 {offsets = [0, 384], sizes = [8, 128], strides = [1, 1]} : vector<8x512xf32> to vector<8x128xf32>
    %cst_124 = arith.constant 5.000000e-01 : f32
    %298 = vector.broadcast %cst_124 : f32 to vector<8x128xf32>
    %299 = arith.mulf %298, %297 : vector<8x128xf32>
    %300 = math.tanh %299 : vector<8x128xf32>
    %cst_125 = arith.constant 5.000000e-01 : f32
    %301 = vector.broadcast %cst_125 : f32 to vector<8x128xf32>
    %302 = arith.mulf %301, %300 : vector<8x128xf32>
    %cst_126 = arith.constant 5.000000e-01 : f32
    %303 = vector.broadcast %cst_126 : f32 to vector<8x128xf32>
    %304 = arith.addf %302, %303 : vector<8x128xf32>
    %305 = arith.mulf %294, %270 : vector<8x128xf32>
    %306 = arith.mulf %286, %296 : vector<8x128xf32>
    %307 = arith.addf %305, %306 : vector<8x128xf32>
    %308 = math.tanh %307 : vector<8x128xf32>
    %309 = arith.mulf %304, %308 : vector<8x128xf32>
    %c8_i32 = arith.constant 8 : i32
    %c0_127 = arith.constant 0 : index
    %c0_128 = arith.constant 0 : index
    %310 = vector.load %arg12[%c0_127, %c0_128] : memref<8x128xf32, #tpu.memory_space<vmem>>, vector<8x128xf32>
    tpu.vector_store %arg12[%c0_127, %c0_128], %309 {strides = array<i32>} : memref<8x128xf32, #tpu.memory_space<vmem>>, vector<8x128xf32>,
    %c0_129 = arith.constant 0 : index
    %c0_130 = arith.constant 0 : index
    %311 = vector.load %arg13[%c0_129, %c0_130] : memref<8x128xf32, #tpu.memory_space<vmem>>, vector<8x128xf32>
    tpu.vector_store %arg13[%c0_129, %c0_130], %307 {strides = array<i32>} : memref<8x128xf32, #tpu.memory_space<vmem>>, vector<8x128xf32>,
    %c0_i32_131 = arith.constant 0 : i32
    %312 = arith.cmpi eq, %arg0, %c0_i32_131 : i32
    %313 = arith.extui %312 : i1 to i32
    %c0_i32_132 = arith.constant 0 : i32
    %314 = arith.cmpi ne, %313, %c0_i32_132 : i32
    scf.if %314 {
      %c0_133 = arith.constant 0 : index
      %c0_134 = arith.constant 0 : index
      %315 = vector.load %arg10[%c0_133, %c0_134] : memref<8x128xf32, #tpu.memory_space<vmem>>, vector<8x128xf32>
      tpu.vector_store %arg10[%c0_133, %c0_134], %309 {strides = array<i32>} : memref<8x128xf32, #tpu.memory_space<vmem>>, vector<8x128xf32>,
      %c0_135 = arith.constant 0 : index
      %c0_136 = arith.constant 0 : index
      %316 = vector.load %arg11[%c0_135, %c0_136] : memref<8x128xf32, #tpu.memory_space<vmem>>, vector<8x128xf32>
      tpu.vector_store %arg11[%c0_135, %c0_136], %307 {strides = array<i32>} : memref<8x128xf32, #tpu.memory_space<vmem>>, vector<8x128xf32>,
      %c0_137 = arith.constant 0 : index
      %c0_138 = arith.constant 0 : index
      %317 = vector.load %arg7[%c0_137, %c0_138] : memref<128x128xf32, #tpu.memory_space<vmem>>, vector<128x128xf32>
      %cst_139 = arith.constant dense<0.000000e+00> : vector<8x128xf32>
      %318 = tpu.matmul %309, %317, %cst_139 {dimension_numbers = #tpu.dot_dimension_numbers<[1], [0], [0], [1], [0, 0, 1, 1], [], []>} : vector<8x128xf32>, vector<128x128xf32>, vector<8x128xf32> -> vector<8x128xf32>
      %c0_140 = arith.constant 0 : index
      %c0_141 = arith.constant 0 : index
      %319 = vector.load %arg8[%c0_140, %c0_141] : memref<1x128xf32, #tpu.memory_space<vmem>>, vector<1x128xf32>
      %320 = vector.broadcast %319 : vector<1x128xf32> to vector<8x128xf32>
      %321 = arith.addf %318, %320 : vector<8x128xf32>
      %c0_142 = arith.constant 0 : index
      %c0_143 = arith.constant 0 : index
      %322 = vector.load %arg9[%c0_142, %c0_143] : memref<8x128xf32, #tpu.memory_space<vmem>>, vector<8x128xf32>
      tpu.vector_store %arg9[%c0_142, %c0_143], %321 {strides = array<i32>} : memref<8x128xf32, #tpu.memory_space<vmem>>, vector<8x128xf32>,
    } else {
    }
    return
  }
  func.func @transform_0(%arg0: i32) -> (i32, i32, i32) {
    %c0_i32 = arith.constant 0 : i32
    %c0_i32_0 = arith.constant 0 : i32
    %c0_i32_1 = arith.constant 0 : i32
    return %arg0, %c0_i32, %c0_i32_0 : i32, i32, i32
  }
  func.func @transform_1(%arg0: i32) -> (i32, i32) {
    %c0_i32 = arith.constant 0 : i32
    %c0_i32_0 = arith.constant 0 : i32
    %c0_i32_1 = arith.constant 0 : i32
    return %c0_i32, %c0_i32_0 : i32, i32
  }
  func.func @transform_2(%arg0: i32) -> (i32, i32) {
    %c0_i32 = arith.constant 0 : i32
    %c0_i32_0 = arith.constant 0 : i32
    %c0_i32_1 = arith.constant 0 : i32
    return %c0_i32, %c0_i32_0 : i32, i32
  }
  func.func @transform_3(%arg0: i32) -> (i32, i32) {
    %c0_i32 = arith.constant 0 : i32
    %c0_i32_0 = arith.constant 0 : i32
    %c0_i32_1 = arith.constant 0 : i32
    return %c0_i32, %c0_i32_0 : i32, i32
  }
  func.func @transform_4(%arg0: i32) -> (i32, i32) {
    %c0_i32 = arith.constant 0 : i32
    %c0_i32_0 = arith.constant 0 : i32
    %c0_i32_1 = arith.constant 0 : i32
    return %c0_i32, %c0_i32_0 : i32, i32
  }
  func.func @transform_5(%arg0: i32) -> (i32, i32) {
    %c0_i32 = arith.constant 0 : i32
    %c0_i32_0 = arith.constant 0 : i32
    %c0_i32_1 = arith.constant 0 : i32
    return %c0_i32, %c0_i32_0 : i32, i32
  }
  func.func @transform_6(%arg0: i32) -> (i32, i32) {
    %c0_i32 = arith.constant 0 : i32
    %c0_i32_0 = arith.constant 0 : i32
    %c0_i32_1 = arith.constant 0 : i32
    return %c0_i32, %c0_i32_0 : i32, i32
  }
  func.func @transform_7(%arg0: i32) -> (i32, i32) {
    %c0_i32 = arith.constant 0 : i32
    %c0_i32_0 = arith.constant 0 : i32
    %c0_i32_1 = arith.constant 0 : i32
    return %c0_i32, %c0_i32_0 : i32, i32
  }
  func.func @transform_8(%arg0: i32) -> (i32, i32) {
    %c0_i32 = arith.constant 0 : i32
    %c0_i32_0 = arith.constant 0 : i32
    %c0_i32_1 = arith.constant 0 : i32
    return %c0_i32, %c0_i32_0 : i32, i32
  }
  func.func @transform_9(%arg0: i32) -> (i32, i32) {
    %c0_i32 = arith.constant 0 : i32
    %c0_i32_0 = arith.constant 0 : i32
    %c0_i32_1 = arith.constant 0 : i32
    return %c0_i32, %c0_i32_0 : i32, i32
  }
  func.func @transform_10(%arg0: i32) -> (i32, i32) {
    %c0_i32 = arith.constant 0 : i32
    %c0_i32_0 = arith.constant 0 : i32
    %c0_i32_1 = arith.constant 0 : i32
    return %c0_i32, %c0_i32_0 : i32, i32
  }
}

module attributes {stable_mosaic.version = 11 : i64} {
  func.func @kernel(%arg0: i32, %arg1: memref<8x8x16xf32, #tpu.memory_space<vmem>>, %arg2: memref<8x128xf32, #tpu.memory_space<vmem>>, %arg3: memref<8x128xf32, #tpu.memory_space<vmem>>, %arg4: memref<16x512xf32, #tpu.memory_space<vmem>>, %arg5: memref<128x512xf32, #tpu.memory_space<vmem>>, %arg6: memref<1x512xf32, #tpu.memory_space<vmem>>, %arg7: memref<128x128xf32, #tpu.memory_space<vmem>>, %arg8: memref<1x128xf32, #tpu.memory_space<vmem>>, %arg9: memref<8x128xf32, #tpu.memory_space<vmem>>, %arg10: memref<8x128xf32, #tpu.memory_space<vmem>>, %arg11: memref<8x128xf32, #tpu.memory_space<vmem>>, %arg12: memref<8x128xf32, #tpu.memory_space<vmem>>, %arg13: memref<8x128xf32, #tpu.memory_space<vmem>>, %arg14: memref<8x8x512xf32, #tpu.memory_space<vmem>>) attributes {dimension_semantics = [#tpu.dimension_semantics<arbitrary>], iteration_bounds = array<i64: 1>, scalar_prefetch = 0 : i64, scratch_operands = 3 : i64, tpu.core_type = #tpu.core_type<tc>, window_params = [{transform_indices = @transform_0, window_bounds = array<i64: 8, 8, 16>}, {pipeline_mode = #tpu.pipeline_mode<synchronous>, transform_indices = @transform_1, window_bounds = array<i64: 8, 128>}, {pipeline_mode = #tpu.pipeline_mode<synchronous>, transform_indices = @transform_2, window_bounds = array<i64: 8, 128>}, {pipeline_mode = #tpu.pipeline_mode<synchronous>, transform_indices = @transform_3, window_bounds = array<i64: 16, 512>}, {pipeline_mode = #tpu.pipeline_mode<synchronous>, transform_indices = @transform_4, window_bounds = array<i64: 128, 512>}, {pipeline_mode = #tpu.pipeline_mode<synchronous>, transform_indices = @transform_5, window_bounds = array<i64: 1, 512>}, {pipeline_mode = #tpu.pipeline_mode<synchronous>, transform_indices = @transform_6, window_bounds = array<i64: 128, 128>}, {pipeline_mode = #tpu.pipeline_mode<synchronous>, transform_indices = @transform_7, window_bounds = array<i64: 1, 128>}, {pipeline_mode = #tpu.pipeline_mode<synchronous>, transform_indices = @transform_8, window_bounds = array<i64: 8, 128>}, {pipeline_mode = #tpu.pipeline_mode<synchronous>, transform_indices = @transform_9, window_bounds = array<i64: 8, 128>}, {pipeline_mode = #tpu.pipeline_mode<synchronous>, transform_indices = @transform_10, window_bounds = array<i64: 8, 128>}]} {
    %c0_i32 = arith.constant 0 : i32
    %0 = arith.cmpi eq, %arg0, %c0_i32 : i32
    %1 = arith.extui %0 : i1 to i32
    %c0_i32_0 = arith.constant 0 : i32
    %2 = arith.cmpi ne, %1, %c0_i32_0 : i32
    scf.if %2 {
      %c0_133 = arith.constant 0 : index
      %c0_134 = arith.constant 0 : index
      %315 = vector.load %arg2[%c0_133, %c0_134] : memref<8x128xf32, #tpu.memory_space<vmem>>, vector<8x128xf32>
      %c0_135 = arith.constant 0 : index
      %c0_136 = arith.constant 0 : index
      %316 = vector.load %arg12[%c0_135, %c0_136] : memref<8x128xf32, #tpu.memory_space<vmem>>, vector<8x128xf32>
      tpu.vector_store %arg12[%c0_135, %c0_136], %315 {strides = array<i32>} : memref<8x128xf32, #tpu.memory_space<vmem>>, vector<8x128xf32>,
      %c0_137 = arith.constant 0 : index
      %c0_138 = arith.constant 0 : index
      %317 = vector.load %arg3[%c0_137, %c0_138] : memref<8x128xf32, #tpu.memory_space<vmem>>, vector<8x128xf32>
      %c0_139 = arith.constant 0 : index
      %c0_140 = arith.constant 0 : index
      %318 = vector.load %arg13[%c0_139, %c0_140] : memref<8x128xf32, #tpu.memory_space<vmem>>, vector<8x128xf32>
      tpu.vector_store %arg13[%c0_139, %c0_140], %317 {strides = array<i32>} : memref<8x128xf32, #tpu.memory_space<vmem>>, vector<8x128xf32>,
    } else {
    }
    %c0 = arith.constant 0 : index
    %c0_1 = arith.constant 0 : index
    %c0_2 = arith.constant 0 : index
    %3 = vector.load %arg1[%c0, %c0_1, %c0_2] : memref<8x8x16xf32, #tpu.memory_space<vmem>>, vector<8x8x16xf32>
    %4 = vector.shape_cast %3 : vector<8x8x16xf32> to vector<64x16xf32>
    %c0_3 = arith.constant 0 : index
    %c0_4 = arith.constant 0 : index
    %5 = vector.load %arg4[%c0_3, %c0_4] : memref<16x512xf32, #tpu.memory_space<vmem>>, vector<16x512xf32>
    %cst = arith.constant dense<0.000000e+00> : vector<64x512xf32>
    %6 = tpu.matmul %4, %5, %cst {dimension_numbers = #tpu.dot_dimension_numbers<[1], [0], [0], [1], [0, 0, 1, 1], [], []>} : vector<64x16xf32>, vector<16x512xf32>, vector<64x512xf32> -> vector<64x512xf32>
    %c0_5 = arith.constant 0 : index
    %c0_6 = arith.constant 0 : index
    %7 = vector.load %arg6[%c0_5, %c0_6] : memref<1x512xf32, #tpu.memory_space<vmem>>, vector<1x512xf32>
    %8 = vector.broadcast %7 : vector<1x512xf32> to vector<64x512xf32>
    %9 = arith.addf %6, %8 : vector<64x512xf32>
    %10 = vector.shape_cast %9 : vector<64x512xf32> to vector<8x8x512xf32>
    %c0_7 = arith.constant 0 : index
    %c0_8 = arith.constant 0 : index
    %c0_9 = arith.constant 0 : index
    %11 = vector.load %arg14[%c0_7, %c0_8, %c0_9] : memref<8x8x512xf32, #tpu.memory_space<vmem>>, vector<8x8x512xf32>
    tpu.vector_store %arg14[%c0_7, %c0_8, %c0_9], %10 {strides = array<i32>} : memref<8x8x512xf32, #tpu.memory_space<vmem>>, vector<8x8x512xf32>,
    %c0_10 = arith.constant 0 : index
    %c0_11 = arith.constant 0 : index
    %12 = vector.load %arg12[%c0_10, %c0_11] : memref<8x128xf32, #tpu.memory_space<vmem>>, vector<8x128xf32>
    %c0_12 = arith.constant 0 : index
    %c0_13 = arith.constant 0 : index
    %13 = vector.load %arg13[%c0_12, %c0_13] : memref<8x128xf32, #tpu.memory_space<vmem>>, vector<8x128xf32>
    %c0_i32_14 = arith.constant 0 : i32
    %14 = arith.index_cast %c0_i32_14 : i32 to index
    %c0_15 = arith.constant 0 : index
    %c0_16 = arith.constant 0 : index
    %15 = vector.load %arg14[%14, %c0_15, %c0_16] : memref<8x8x512xf32, #tpu.memory_space<vmem>>, vector<1x8x512xf32>
    %16 = vector.shape_cast %15 : vector<1x8x512xf32> to vector<8x512xf32>
    %c0_17 = arith.constant 0 : index
    %c0_18 = arith.constant 0 : index
    %17 = vector.load %arg5[%c0_17, %c0_18] : memref<128x512xf32, #tpu.memory_space<vmem>>, vector<128x512xf32>
    %cst_19 = arith.constant dense<0.000000e+00> : vector<8x512xf32>
    %18 = tpu.matmul %12, %17, %cst_19 {dimension_numbers = #tpu.dot_dimension_numbers<[1], [0], [0], [1], [0, 0, 1, 1], [], []>} : vector<8x128xf32>, vector<128x512xf32>, vector<8x512xf32> -> vector<8x512xf32>
    %19 = arith.addf %16, %18 : vector<8x512xf32>
    %20 = vector.extract_strided_slice %19 {offsets = [0, 0], sizes = [8, 128], strides = [1, 1]} : vector<8x512xf32> to vector<8x128xf32>
    %cst_20 = arith.constant 5.000000e-01 : f32
    %21 = vector.broadcast %cst_20 : f32 to vector<8x128xf32>
    %22 = arith.mulf %21, %20 : vector<8x128xf32>
    %23 = math.tanh %22 : vector<8x128xf32>
    %cst_21 = arith.constant 5.000000e-01 : f32
    %24 = vector.broadcast %cst_21 : f32 to vector<8x128xf32>
    %25 = arith.mulf %24, %23 : vector<8x128xf32>
    %cst_22 = arith.constant 5.000000e-01 : f32
    %26 = vector.broadcast %cst_22 : f32 to vector<8x128xf32>
    %27 = arith.addf %25, %26 : vector<8x128xf32>
    %28 = vector.extract_strided_slice %19 {offsets = [0, 128], sizes = [8, 128], strides = [1, 1]} : vector<8x512xf32> to vector<8x128xf32>
    %cst_23 = arith.constant 5.000000e-01 : f32
    %29 = vector.broadcast %cst_23 : f32 to vector<8x128xf32>
    %30 = arith.mulf %29, %28 : vector<8x128xf32>
    %31 = math.tanh %30 : vector<8x128xf32>
    %cst_24 = arith.constant 5.000000e-01 : f32
    %32 = vector.broadcast %cst_24 : f32 to vector<8x128xf32>
    %33 = arith.mulf %32, %31 : vector<8x128xf32>
    %cst_25 = arith.constant 5.000000e-01 : f32
    %34 = vector.broadcast %cst_25 : f32 to vector<8x128xf32>
    %35 = arith.addf %33, %34 : vector<8x128xf32>
    %36 = vector.extract_strided_slice %19 {offsets = [0, 256], sizes = [8, 128], strides = [1, 1]} : vector<8x512xf32> to vector<8x128xf32>
    %37 = math.tanh %36 : vector<8x128xf32>
    %38 = vector.extract_strided_slice %19 {offsets = [0, 384], sizes = [8, 128], strides = [1, 1]} : vector<8x512xf32> to vector<8x128xf32>
    %cst_26 = arith.constant 5.000000e-01 : f32
    %39 = vector.broadcast %cst_26 : f32 to vector<8x128xf32>
    %40 = arith.mulf %39, %38 : vector<8x128xf32>
    %41 = math.tanh %40 : vector<8x128xf32>
    %cst_27 = arith.constant 5.000000e-01 : f32
    %42 = vector.broadcast %cst_27 : f32 to vector<8x128xf32>
    %43 = arith.mulf %42, %41 : vector<8x128xf32>
    %cst_28 = arith.constant 5.000000e-01 : f32
    %44 = vector.broadcast %cst_28 : f32 to vector<8x128xf32>
    %45 = arith.addf %43, %44 : vector<8x128xf32>
    %46 = arith.mulf %35, %13 : vector<8x128xf32>
    %47 = arith.mulf %27, %37 : vector<8x128xf32>
    %48 = arith.addf %46, %47 : vector<8x128xf32>
    %49 = math.tanh %48 : vector<8x128xf32>
    %50 = arith.mulf %45, %49 : vector<8x128xf32>
    %c1_i32 = arith.constant 1 : i32
    %51 = arith.index_cast %c1_i32 : i32 to index
    %c0_29 = arith.constant 0 : index
    %c0_30 = arith.constant 0 : index
    %52 = vector.load %arg14[%51, %c0_29, %c0_30] : memref<8x8x512xf32, #tpu.memory_space<vmem>>, vector<1x8x512xf32>
    %53 = vector.shape_cast %52 : vector<1x8x512xf32> to vector<8x512xf32>
    %c0_31 = arith.constant 0 : index
    %c0_32 = arith.constant 0 : index
    %54 = vector.load %arg5[%c0_31, %c0_32] : memref<128x512xf32, #tpu.memory_space<vmem>>, vector<128x512xf32>
    %cst_33 = arith.constant dense<0.000000e+00> : vector<8x512xf32>
    %55 = tpu.matmul %50, %54, %cst_33 {dimension_numbers = #tpu.dot_dimension_numbers<[1], [0], [0], [1], [0, 0, 1, 1], [], []>} : vector<8x128xf32>, vector<128x512xf32>, vector<8x512xf32> -> vector<8x512xf32>
    %56 = arith.addf %53, %55 : vector<8x512xf32>
    %57 = vector.extract_strided_slice %56 {offsets = [0, 0], sizes = [8, 128], strides = [1, 1]} : vector<8x512xf32> to vector<8x128xf32>
    %cst_34 = arith.constant 5.000000e-01 : f32
    %58 = vector.broadcast %cst_34 : f32 to vector<8x128xf32>
    %59 = arith.mulf %58, %57 : vector<8x128xf32>
    %60 = math.tanh %59 : vector<8x128xf32>
    %cst_35 = arith.constant 5.000000e-01 : f32
    %61 = vector.broadcast %cst_35 : f32 to vector<8x128xf32>
    %62 = arith.mulf %61, %60 : vector<8x128xf32>
    %cst_36 = arith.constant 5.000000e-01 : f32
    %63 = vector.broadcast %cst_36 : f32 to vector<8x128xf32>
    %64 = arith.addf %62, %63 : vector<8x128xf32>
    %65 = vector.extract_strided_slice %56 {offsets = [0, 128], sizes = [8, 128], strides = [1, 1]} : vector<8x512xf32> to vector<8x128xf32>
    %cst_37 = arith.constant 5.000000e-01 : f32
    %66 = vector.broadcast %cst_37 : f32 to vector<8x128xf32>
    %67 = arith.mulf %66, %65 : vector<8x128xf32>
    %68 = math.tanh %67 : vector<8x128xf32>
    %cst_38 = arith.constant 5.000000e-01 : f32
    %69 = vector.broadcast %cst_38 : f32 to vector<8x128xf32>
    %70 = arith.mulf %69, %68 : vector<8x128xf32>
    %cst_39 = arith.constant 5.000000e-01 : f32
    %71 = vector.broadcast %cst_39 : f32 to vector<8x128xf32>
    %72 = arith.addf %70, %71 : vector<8x128xf32>
    %73 = vector.extract_strided_slice %56 {offsets = [0, 256], sizes = [8, 128], strides = [1, 1]} : vector<8x512xf32> to vector<8x128xf32>
    %74 = math.tanh %73 : vector<8x128xf32>
    %75 = vector.extract_strided_slice %56 {offsets = [0, 384], sizes = [8, 128], strides = [1, 1]} : vector<8x512xf32> to vector<8x128xf32>
    %cst_40 = arith.constant 5.000000e-01 : f32
    %76 = vector.broadcast %cst_40 : f32 to vector<8x128xf32>
    %77 = arith.mulf %76, %75 : vector<8x128xf32>
    %78 = math.tanh %77 : vector<8x128xf32>
    %cst_41 = arith.constant 5.000000e-01 : f32
    %79 = vector.broadcast %cst_41 : f32 to vector<8x128xf32>
    %80 = arith.mulf %79, %78 : vector<8x128xf32>
    %cst_42 = arith.constant 5.000000e-01 : f32
    %81 = vector.broadcast %cst_42 : f32 to vector<8x128xf32>
    %82 = arith.addf %80, %81 : vector<8x128xf32>
    %83 = arith.mulf %72, %48 : vector<8x128xf32>
    %84 = arith.mulf %64, %74 : vector<8x128xf32>
    %85 = arith.addf %83, %84 : vector<8x128xf32>
    %86 = math.tanh %85 : vector<8x128xf32>
    %87 = arith.mulf %82, %86 : vector<8x128xf32>
    %c2_i32 = arith.constant 2 : i32
    %88 = arith.index_cast %c2_i32 : i32 to index
    %c0_43 = arith.constant 0 : index
    %c0_44 = arith.constant 0 : index
    %89 = vector.load %arg14[%88, %c0_43, %c0_44] : memref<8x8x512xf32, #tpu.memory_space<vmem>>, vector<1x8x512xf32>
    %90 = vector.shape_cast %89 : vector<1x8x512xf32> to vector<8x512xf32>
    %c0_45 = arith.constant 0 : index
    %c0_46 = arith.constant 0 : index
    %91 = vector.load %arg5[%c0_45, %c0_46] : memref<128x512xf32, #tpu.memory_space<vmem>>, vector<128x512xf32>
    %cst_47 = arith.constant dense<0.000000e+00> : vector<8x512xf32>
    %92 = tpu.matmul %87, %91, %cst_47 {dimension_numbers = #tpu.dot_dimension_numbers<[1], [0], [0], [1], [0, 0, 1, 1], [], []>} : vector<8x128xf32>, vector<128x512xf32>, vector<8x512xf32> -> vector<8x512xf32>
    %93 = arith.addf %90, %92 : vector<8x512xf32>
    %94 = vector.extract_strided_slice %93 {offsets = [0, 0], sizes = [8, 128], strides = [1, 1]} : vector<8x512xf32> to vector<8x128xf32>
    %cst_48 = arith.constant 5.000000e-01 : f32
    %95 = vector.broadcast %cst_48 : f32 to vector<8x128xf32>
    %96 = arith.mulf %95, %94 : vector<8x128xf32>
    %97 = math.tanh %96 : vector<8x128xf32>
    %cst_49 = arith.constant 5.000000e-01 : f32
    %98 = vector.broadcast %cst_49 : f32 to vector<8x128xf32>
    %99 = arith.mulf %98, %97 : vector<8x128xf32>
    %cst_50 = arith.constant 5.000000e-01 : f32
    %100 = vector.broadcast %cst_50 : f32 to vector<8x128xf32>
    %101 = arith.addf %99, %100 : vector<8x128xf32>
    %102 = vector.extract_strided_slice %93 {offsets = [0, 128], sizes = [8, 128], strides = [1, 1]} : vector<8x512xf32> to vector<8x128xf32>
    %cst_51 = arith.constant 5.000000e-01 : f32
    %103 = vector.broadcast %cst_51 : f32 to vector<8x128xf32>
    %104 = arith.mulf %103, %102 : vector<8x128xf32>
    %105 = math.tanh %104 : vector<8x128xf32>
    %cst_52 = arith.constant 5.000000e-01 : f32
    %106 = vector.broadcast %cst_52 : f32 to vector<8x128xf32>
    %107 = arith.mulf %106, %105 : vector<8x128xf32>
    %cst_53 = arith.constant 5.000000e-01 : f32
    %108 = vector.broadcast %cst_53 : f32 to vector<8x128xf32>
    %109 = arith.addf %107, %108 : vector<8x128xf32>
    %110 = vector.extract_strided_slice %93 {offsets = [0, 256], sizes = [8, 128], strides = [1, 1]} : vector<8x512xf32> to vector<8x128xf32>
    %111 = math.tanh %110 : vector<8x128xf32>
    %112 = vector.extract_strided_slice %93 {offsets = [0, 384], sizes = [8, 128], strides = [1, 1]} : vector<8x512xf32> to vector<8x128xf32>
    %cst_54 = arith.constant 5.000000e-01 : f32
    %113 = vector.broadcast %cst_54 : f32 to vector<8x128xf32>
    %114 = arith.mulf %113, %112 : vector<8x128xf32>
    %115 = math.tanh %114 : vector<8x128xf32>
    %cst_55 = arith.constant 5.000000e-01 : f32
    %116 = vector.broadcast %cst_55 : f32 to vector<8x128xf32>
    %117 = arith.mulf %116, %115 : vector<8x128xf32>
    %cst_56 = arith.constant 5.000000e-01 : f32
    %118 = vector.broadcast %cst_56 : f32 to vector<8x128xf32>
    %119 = arith.addf %117, %118 : vector<8x128xf32>
    %120 = arith.mulf %109, %85 : vector<8x128xf32>
    %121 = arith.mulf %101, %111 : vector<8x128xf32>
    %122 = arith.addf %120, %121 : vector<8x128xf32>
    %123 = math.tanh %122 : vector<8x128xf32>
    %124 = arith.mulf %119, %123 : vector<8x128xf32>
    %c3_i32 = arith.constant 3 : i32
    %125 = arith.index_cast %c3_i32 : i32 to index
    %c0_57 = arith.constant 0 : index
    %c0_58 = arith.constant 0 : index
    %126 = vector.load %arg14[%125, %c0_57, %c0_58] : memref<8x8x512xf32, #tpu.memory_space<vmem>>, vector<1x8x512xf32>
    %127 = vector.shape_cast %126 : vector<1x8x512xf32> to vector<8x512xf32>
    %c0_59 = arith.constant 0 : index
    %c0_60 = arith.constant 0 : index
    %128 = vector.load %arg5[%c0_59, %c0_60] : memref<128x512xf32, #tpu.memory_space<vmem>>, vector<128x512xf32>
    %cst_61 = arith.constant dense<0.000000e+00> : vector<8x512xf32>
    %129 = tpu.matmul %124, %128, %cst_61 {dimension_numbers = #tpu.dot_dimension_numbers<[1], [0], [0], [1], [0, 0, 1, 1], [], []>} : vector<8x128xf32>, vector<128x512xf32>, vector<8x512xf32> -> vector<8x512xf32>
    %130 = arith.addf %127, %129 : vector<8x512xf32>
    %131 = vector.extract_strided_slice %130 {offsets = [0, 0], sizes = [8, 128], strides = [1, 1]} : vector<8x512xf32> to vector<8x128xf32>
    %cst_62 = arith.constant 5.000000e-01 : f32
    %132 = vector.broadcast %cst_62 : f32 to vector<8x128xf32>
    %133 = arith.mulf %132, %131 : vector<8x128xf32>
    %134 = math.tanh %133 : vector<8x128xf32>
    %cst_63 = arith.constant 5.000000e-01 : f32
    %135 = vector.broadcast %cst_63 : f32 to vector<8x128xf32>
    %136 = arith.mulf %135, %134 : vector<8x128xf32>
    %cst_64 = arith.constant 5.000000e-01 : f32
    %137 = vector.broadcast %cst_64 : f32 to vector<8x128xf32>
    %138 = arith.addf %136, %137 : vector<8x128xf32>
    %139 = vector.extract_strided_slice %130 {offsets = [0, 128], sizes = [8, 128], strides = [1, 1]} : vector<8x512xf32> to vector<8x128xf32>
    %cst_65 = arith.constant 5.000000e-01 : f32
    %140 = vector.broadcast %cst_65 : f32 to vector<8x128xf32>
    %141 = arith.mulf %140, %139 : vector<8x128xf32>
    %142 = math.tanh %141 : vector<8x128xf32>
    %cst_66 = arith.constant 5.000000e-01 : f32
    %143 = vector.broadcast %cst_66 : f32 to vector<8x128xf32>
    %144 = arith.mulf %143, %142 : vector<8x128xf32>
    %cst_67 = arith.constant 5.000000e-01 : f32
    %145 = vector.broadcast %cst_67 : f32 to vector<8x128xf32>
    %146 = arith.addf %144, %145 : vector<8x128xf32>
    %147 = vector.extract_strided_slice %130 {offsets = [0, 256], sizes = [8, 128], strides = [1, 1]} : vector<8x512xf32> to vector<8x128xf32>
    %148 = math.tanh %147 : vector<8x128xf32>
    %149 = vector.extract_strided_slice %130 {offsets = [0, 384], sizes = [8, 128], strides = [1, 1]} : vector<8x512xf32> to vector<8x128xf32>
    %cst_68 = arith.constant 5.000000e-01 : f32
    %150 = vector.broadcast %cst_68 : f32 to vector<8x128xf32>
    %151 = arith.mulf %150, %149 : vector<8x128xf32>
    %152 = math.tanh %151 : vector<8x128xf32>
    %cst_69 = arith.constant 5.000000e-01 : f32
    %153 = vector.broadcast %cst_69 : f32 to vector<8x128xf32>
    %154 = arith.mulf %153, %152 : vector<8x128xf32>
    %cst_70 = arith.constant 5.000000e-01 : f32
    %155 = vector.broadcast %cst_70 : f32 to vector<8x128xf32>
    %156 = arith.addf %154, %155 : vector<8x128xf32>
    %157 = arith.mulf %146, %122 : vector<8x128xf32>
    %158 = arith.mulf %138, %148 : vector<8x128xf32>
    %159 = arith.addf %157, %158 : vector<8x128xf32>
    %160 = math.tanh %159 : vector<8x128xf32>
    %161 = arith.mulf %156, %160 : vector<8x128xf32>
    %c4_i32 = arith.constant 4 : i32
    %162 = arith.index_cast %c4_i32 : i32 to index
    %c0_71 = arith.constant 0 : index
    %c0_72 = arith.constant 0 : index
    %163 = vector.load %arg14[%162, %c0_71, %c0_72] : memref<8x8x512xf32, #tpu.memory_space<vmem>>, vector<1x8x512xf32>
    %164 = vector.shape_cast %163 : vector<1x8x512xf32> to vector<8x512xf32>
    %c0_73 = arith.constant 0 : index
    %c0_74 = arith.constant 0 : index
    %165 = vector.load %arg5[%c0_73, %c0_74] : memref<128x512xf32, #tpu.memory_space<vmem>>, vector<128x512xf32>
    %cst_75 = arith.constant dense<0.000000e+00> : vector<8x512xf32>
    %166 = tpu.matmul %161, %165, %cst_75 {dimension_numbers = #tpu.dot_dimension_numbers<[1], [0], [0], [1], [0, 0, 1, 1], [], []>} : vector<8x128xf32>, vector<128x512xf32>, vector<8x512xf32> -> vector<8x512xf32>
    %167 = arith.addf %164, %166 : vector<8x512xf32>
    %168 = vector.extract_strided_slice %167 {offsets = [0, 0], sizes = [8, 128], strides = [1, 1]} : vector<8x512xf32> to vector<8x128xf32>
    %cst_76 = arith.constant 5.000000e-01 : f32
    %169 = vector.broadcast %cst_76 : f32 to vector<8x128xf32>
    %170 = arith.mulf %169, %168 : vector<8x128xf32>
    %171 = math.tanh %170 : vector<8x128xf32>
    %cst_77 = arith.constant 5.000000e-01 : f32
    %172 = vector.broadcast %cst_77 : f32 to vector<8x128xf32>
    %173 = arith.mulf %172, %171 : vector<8x128xf32>
    %cst_78 = arith.constant 5.000000e-01 : f32
    %174 = vector.broadcast %cst_78 : f32 to vector<8x128xf32>
    %175 = arith.addf %173, %174 : vector<8x128xf32>
    %176 = vector.extract_strided_slice %167 {offsets = [0, 128], sizes = [8, 128], strides = [1, 1]} : vector<8x512xf32> to vector<8x128xf32>
    %cst_79 = arith.constant 5.000000e-01 : f32
    %177 = vector.broadcast %cst_79 : f32 to vector<8x128xf32>
    %178 = arith.mulf %177, %176 : vector<8x128xf32>
    %179 = math.tanh %178 : vector<8x128xf32>
    %cst_80 = arith.constant 5.000000e-01 : f32
    %180 = vector.broadcast %cst_80 : f32 to vector<8x128xf32>
    %181 = arith.mulf %180, %179 : vector<8x128xf32>
    %cst_81 = arith.constant 5.000000e-01 : f32
    %182 = vector.broadcast %cst_81 : f32 to vector<8x128xf32>
    %183 = arith.addf %181, %182 : vector<8x128xf32>
    %184 = vector.extract_strided_slice %167 {offsets = [0, 256], sizes = [8, 128], strides = [1, 1]} : vector<8x512xf32> to vector<8x128xf32>
    %185 = math.tanh %184 : vector<8x128xf32>
    %186 = vector.extract_strided_slice %167 {offsets = [0, 384], sizes = [8, 128], strides = [1, 1]} : vector<8x512xf32> to vector<8x128xf32>
    %cst_82 = arith.constant 5.000000e-01 : f32
    %187 = vector.broadcast %cst_82 : f32 to vector<8x128xf32>
    %188 = arith.mulf %187, %186 : vector<8x128xf32>
    %189 = math.tanh %188 : vector<8x128xf32>
    %cst_83 = arith.constant 5.000000e-01 : f32
    %190 = vector.broadcast %cst_83 : f32 to vector<8x128xf32>
    %191 = arith.mulf %190, %189 : vector<8x128xf32>
    %cst_84 = arith.constant 5.000000e-01 : f32
    %192 = vector.broadcast %cst_84 : f32 to vector<8x128xf32>
    %193 = arith.addf %191, %192 : vector<8x128xf32>
    %194 = arith.mulf %183, %159 : vector<8x128xf32>
    %195 = arith.mulf %175, %185 : vector<8x128xf32>
    %196 = arith.addf %194, %195 : vector<8x128xf32>
    %197 = math.tanh %196 : vector<8x128xf32>
    %198 = arith.mulf %193, %197 : vector<8x128xf32>
    %c5_i32 = arith.constant 5 : i32
    %199 = arith.index_cast %c5_i32 : i32 to index
    %c0_85 = arith.constant 0 : index
    %c0_86 = arith.constant 0 : index
    %200 = vector.load %arg14[%199, %c0_85, %c0_86] : memref<8x8x512xf32, #tpu.memory_space<vmem>>, vector<1x8x512xf32>
    %201 = vector.shape_cast %200 : vector<1x8x512xf32> to vector<8x512xf32>
    %c0_87 = arith.constant 0 : index
    %c0_88 = arith.constant 0 : index
    %202 = vector.load %arg5[%c0_87, %c0_88] : memref<128x512xf32, #tpu.memory_space<vmem>>, vector<128x512xf32>
    %cst_89 = arith.constant dense<0.000000e+00> : vector<8x512xf32>
    %203 = tpu.matmul %198, %202, %cst_89 {dimension_numbers = #tpu.dot_dimension_numbers<[1], [0], [0], [1], [0, 0, 1, 1], [], []>} : vector<8x128xf32>, vector<128x512xf32>, vector<8x512xf32> -> vector<8x512xf32>
    %204 = arith.addf %201, %203 : vector<8x512xf32>
    %205 = vector.extract_strided_slice %204 {offsets = [0, 0], sizes = [8, 128], strides = [1, 1]} : vector<8x512xf32> to vector<8x128xf32>
    %cst_90 = arith.constant 5.000000e-01 : f32
    %206 = vector.broadcast %cst_90 : f32 to vector<8x128xf32>
    %207 = arith.mulf %206, %205 : vector<8x128xf32>
    %208 = math.tanh %207 : vector<8x128xf32>
    %cst_91 = arith.constant 5.000000e-01 : f32
    %209 = vector.broadcast %cst_91 : f32 to vector<8x128xf32>
    %210 = arith.mulf %209, %208 : vector<8x128xf32>
    %cst_92 = arith.constant 5.000000e-01 : f32
    %211 = vector.broadcast %cst_92 : f32 to vector<8x128xf32>
    %212 = arith.addf %210, %211 : vector<8x128xf32>
    %213 = vector.extract_strided_slice %204 {offsets = [0, 128], sizes = [8, 128], strides = [1, 1]} : vector<8x512xf32> to vector<8x128xf32>
    %cst_93 = arith.constant 5.000000e-01 : f32
    %214 = vector.broadcast %cst_93 : f32 to vector<8x128xf32>
    %215 = arith.mulf %214, %213 : vector<8x128xf32>
    %216 = math.tanh %215 : vector<8x128xf32>
    %cst_94 = arith.constant 5.000000e-01 : f32
    %217 = vector.broadcast %cst_94 : f32 to vector<8x128xf32>
    %218 = arith.mulf %217, %216 : vector<8x128xf32>
    %cst_95 = arith.constant 5.000000e-01 : f32
    %219 = vector.broadcast %cst_95 : f32 to vector<8x128xf32>
    %220 = arith.addf %218, %219 : vector<8x128xf32>
    %221 = vector.extract_strided_slice %204 {offsets = [0, 256], sizes = [8, 128], strides = [1, 1]} : vector<8x512xf32> to vector<8x128xf32>
    %222 = math.tanh %221 : vector<8x128xf32>
    %223 = vector.extract_strided_slice %204 {offsets = [0, 384], sizes = [8, 128], strides = [1, 1]} : vector<8x512xf32> to vector<8x128xf32>
    %cst_96 = arith.constant 5.000000e-01 : f32
    %224 = vector.broadcast %cst_96 : f32 to vector<8x128xf32>
    %225 = arith.mulf %224, %223 : vector<8x128xf32>
    %226 = math.tanh %225 : vector<8x128xf32>
    %cst_97 = arith.constant 5.000000e-01 : f32
    %227 = vector.broadcast %cst_97 : f32 to vector<8x128xf32>
    %228 = arith.mulf %227, %226 : vector<8x128xf32>
    %cst_98 = arith.constant 5.000000e-01 : f32
    %229 = vector.broadcast %cst_98 : f32 to vector<8x128xf32>
    %230 = arith.addf %228, %229 : vector<8x128xf32>
    %231 = arith.mulf %220, %196 : vector<8x128xf32>
    %232 = arith.mulf %212, %222 : vector<8x128xf32>
    %233 = arith.addf %231, %232 : vector<8x128xf32>
    %234 = math.tanh %233 : vector<8x128xf32>
    %235 = arith.mulf %230, %234 : vector<8x128xf32>
    %c6_i32 = arith.constant 6 : i32
    %236 = arith.index_cast %c6_i32 : i32 to index
    %c0_99 = arith.constant 0 : index
    %c0_100 = arith.constant 0 : index
    %237 = vector.load %arg14[%236, %c0_99, %c0_100] : memref<8x8x512xf32, #tpu.memory_space<vmem>>, vector<1x8x512xf32>
    %238 = vector.shape_cast %237 : vector<1x8x512xf32> to vector<8x512xf32>
    %c0_101 = arith.constant 0 : index
    %c0_102 = arith.constant 0 : index
    %239 = vector.load %arg5[%c0_101, %c0_102] : memref<128x512xf32, #tpu.memory_space<vmem>>, vector<128x512xf32>
    %cst_103 = arith.constant dense<0.000000e+00> : vector<8x512xf32>
    %240 = tpu.matmul %235, %239, %cst_103 {dimension_numbers = #tpu.dot_dimension_numbers<[1], [0], [0], [1], [0, 0, 1, 1], [], []>} : vector<8x128xf32>, vector<128x512xf32>, vector<8x512xf32> -> vector<8x512xf32>
    %241 = arith.addf %238, %240 : vector<8x512xf32>
    %242 = vector.extract_strided_slice %241 {offsets = [0, 0], sizes = [8, 128], strides = [1, 1]} : vector<8x512xf32> to vector<8x128xf32>
    %cst_104 = arith.constant 5.000000e-01 : f32
    %243 = vector.broadcast %cst_104 : f32 to vector<8x128xf32>
    %244 = arith.mulf %243, %242 : vector<8x128xf32>
    %245 = math.tanh %244 : vector<8x128xf32>
    %cst_105 = arith.constant 5.000000e-01 : f32
    %246 = vector.broadcast %cst_105 : f32 to vector<8x128xf32>
    %247 = arith.mulf %246, %245 : vector<8x128xf32>
    %cst_106 = arith.constant 5.000000e-01 : f32
    %248 = vector.broadcast %cst_106 : f32 to vector<8x128xf32>
    %249 = arith.addf %247, %248 : vector<8x128xf32>
    %250 = vector.extract_strided_slice %241 {offsets = [0, 128], sizes = [8, 128], strides = [1, 1]} : vector<8x512xf32> to vector<8x128xf32>
    %cst_107 = arith.constant 5.000000e-01 : f32
    %251 = vector.broadcast %cst_107 : f32 to vector<8x128xf32>
    %252 = arith.mulf %251, %250 : vector<8x128xf32>
    %253 = math.tanh %252 : vector<8x128xf32>
    %cst_108 = arith.constant 5.000000e-01 : f32
    %254 = vector.broadcast %cst_108 : f32 to vector<8x128xf32>
    %255 = arith.mulf %254, %253 : vector<8x128xf32>
    %cst_109 = arith.constant 5.000000e-01 : f32
    %256 = vector.broadcast %cst_109 : f32 to vector<8x128xf32>
    %257 = arith.addf %255, %256 : vector<8x128xf32>
    %258 = vector.extract_strided_slice %241 {offsets = [0, 256], sizes = [8, 128], strides = [1, 1]} : vector<8x512xf32> to vector<8x128xf32>
    %259 = math.tanh %258 : vector<8x128xf32>
    %260 = vector.extract_strided_slice %241 {offsets = [0, 384], sizes = [8, 128], strides = [1, 1]} : vector<8x512xf32> to vector<8x128xf32>
    %cst_110 = arith.constant 5.000000e-01 : f32
    %261 = vector.broadcast %cst_110 : f32 to vector<8x128xf32>
    %262 = arith.mulf %261, %260 : vector<8x128xf32>
    %263 = math.tanh %262 : vector<8x128xf32>
    %cst_111 = arith.constant 5.000000e-01 : f32
    %264 = vector.broadcast %cst_111 : f32 to vector<8x128xf32>
    %265 = arith.mulf %264, %263 : vector<8x128xf32>
    %cst_112 = arith.constant 5.000000e-01 : f32
    %266 = vector.broadcast %cst_112 : f32 to vector<8x128xf32>
    %267 = arith.addf %265, %266 : vector<8x128xf32>
    %268 = arith.mulf %257, %233 : vector<8x128xf32>
    %269 = arith.mulf %249, %259 : vector<8x128xf32>
    %270 = arith.addf %268, %269 : vector<8x128xf32>
    %271 = math.tanh %270 : vector<8x128xf32>
    %272 = arith.mulf %267, %271 : vector<8x128xf32>
    %c7_i32 = arith.constant 7 : i32
    %273 = arith.index_cast %c7_i32 : i32 to index
    %c0_113 = arith.constant 0 : index
    %c0_114 = arith.constant 0 : index
    %274 = vector.load %arg14[%273, %c0_113, %c0_114] : memref<8x8x512xf32, #tpu.memory_space<vmem>>, vector<1x8x512xf32>
    %275 = vector.shape_cast %274 : vector<1x8x512xf32> to vector<8x512xf32>
    %c0_115 = arith.constant 0 : index
    %c0_116 = arith.constant 0 : index
    %276 = vector.load %arg5[%c0_115, %c0_116] : memref<128x512xf32, #tpu.memory_space<vmem>>, vector<128x512xf32>
    %cst_117 = arith.constant dense<0.000000e+00> : vector<8x512xf32>
    %277 = tpu.matmul %272, %276, %cst_117 {dimension_numbers = #tpu.dot_dimension_numbers<[1], [0], [0], [1], [0, 0, 1, 1], [], []>} : vector<8x128xf32>, vector<128x512xf32>, vector<8x512xf32> -> vector<8x512xf32>
    %278 = arith.addf %275, %277 : vector<8x512xf32>
    %279 = vector.extract_strided_slice %278 {offsets = [0, 0], sizes = [8, 128], strides = [1, 1]} : vector<8x512xf32> to vector<8x128xf32>
    %cst_118 = arith.constant 5.000000e-01 : f32
    %280 = vector.broadcast %cst_118 : f32 to vector<8x128xf32>
    %281 = arith.mulf %280, %279 : vector<8x128xf32>
    %282 = math.tanh %281 : vector<8x128xf32>
    %cst_119 = arith.constant 5.000000e-01 : f32
    %283 = vector.broadcast %cst_119 : f32 to vector<8x128xf32>
    %284 = arith.mulf %283, %282 : vector<8x128xf32>
    %cst_120 = arith.constant 5.000000e-01 : f32
    %285 = vector.broadcast %cst_120 : f32 to vector<8x128xf32>
    %286 = arith.addf %284, %285 : vector<8x128xf32>
    %287 = vector.extract_strided_slice %278 {offsets = [0, 128], sizes = [8, 128], strides = [1, 1]} : vector<8x512xf32> to vector<8x128xf32>
    %cst_121 = arith.constant 5.000000e-01 : f32
    %288 = vector.broadcast %cst_121 : f32 to vector<8x128xf32>
    %289 = arith.mulf %288, %287 : vector<8x128xf32>
    %290 = math.tanh %289 : vector<8x128xf32>
    %cst_122 = arith.constant 5.000000e-01 : f32
    %291 = vector.broadcast %cst_122 : f32 to vector<8x128xf32>
    %292 = arith.mulf %291, %290 : vector<8x128xf32>
    %cst_123 = arith.constant 5.000000e-01 : f32
    %293 = vector.broadcast %cst_123 : f32 to vector<8x128xf32>
    %294 = arith.addf %292, %293 : vector<8x128xf32>
    %295 = vector.extract_strided_slice %278 {offsets = [0, 256], sizes = [8, 128], strides = [1, 1]} : vector<8x512xf32> to vector<8x128xf32>
    %296 = math.tanh %295 : vector<8x128xf32>
    %297 = vector.extract_strided_slice %278 {offsets = [0, 384], sizes = [8, 128], strides = [1, 1]} : vector<8x512xf32> to vector<8x128xf32>
    %cst_124 = arith.constant 5.000000e-01 : f32
    %298 = vector.broadcast %cst_124 : f32 to vector<8x128xf32>
    %299 = arith.mulf %298, %297 : vector<8x128xf32>
    %300 = math.tanh %299 : vector<8x128xf32>
    %cst_125 = arith.constant 5.000000e-01 : f32
    %301 = vector.broadcast %cst_125 : f32 to vector<8x128xf32>
    %302 = arith.mulf %301, %300 : vector<8x128xf32>
    %cst_126 = arith.constant 5.000000e-01 : f32
    %303 = vector.broadcast %cst_126 : f32 to vector<8x128xf32>
    %304 = arith.addf %302, %303 : vector<8x128xf32>
    %305 = arith.mulf %294, %270 : vector<8x128xf32>
    %306 = arith.mulf %286, %296 : vector<8x128xf32>
    %307 = arith.addf %305, %306 : vector<8x128xf32>
    %308 = math.tanh %307 : vector<8x128xf32>
    %309 = arith.mulf %304, %308 : vector<8x128xf32>
    %c8_i32 = arith.constant 8 : i32
    %c0_127 = arith.constant 0 : index
    %c0_128 = arith.constant 0 : index
    %310 = vector.load %arg12[%c0_127, %c0_128] : memref<8x128xf32, #tpu.memory_space<vmem>>, vector<8x128xf32>
    tpu.vector_store %arg12[%c0_127, %c0_128], %309 {strides = array<i32>} : memref<8x128xf32, #tpu.memory_space<vmem>>, vector<8x128xf32>,
    %c0_129 = arith.constant 0 : index
    %c0_130 = arith.constant 0 : index
    %311 = vector.load %arg13[%c0_129, %c0_130] : memref<8x128xf32, #tpu.memory_space<vmem>>, vector<8x128xf32>
    tpu.vector_store %arg13[%c0_129, %c0_130], %307 {strides = array<i32>} : memref<8x128xf32, #tpu.memory_space<vmem>>, vector<8x128xf32>,
    %c0_i32_131 = arith.constant 0 : i32
    %312 = arith.cmpi eq, %arg0, %c0_i32_131 : i32
    %313 = arith.extui %312 : i1 to i32
    %c0_i32_132 = arith.constant 0 : i32
    %314 = arith.cmpi ne, %313, %c0_i32_132 : i32
    scf.if %314 {
      %c0_133 = arith.constant 0 : index
      %c0_134 = arith.constant 0 : index
      %315 = vector.load %arg10[%c0_133, %c0_134] : memref<8x128xf32, #tpu.memory_space<vmem>>, vector<8x128xf32>
      tpu.vector_store %arg10[%c0_133, %c0_134], %309 {strides = array<i32>} : memref<8x128xf32, #tpu.memory_space<vmem>>, vector<8x128xf32>,
      %c0_135 = arith.constant 0 : index
      %c0_136 = arith.constant 0 : index
      %316 = vector.load %arg11[%c0_135, %c0_136] : memref<8x128xf32, #tpu.memory_space<vmem>>, vector<8x128xf32>
      tpu.vector_store %arg11[%c0_135, %c0_136], %307 {strides = array<i32>} : memref<8x128xf32, #tpu.memory_space<vmem>>, vector<8x128xf32>,
      %c0_137 = arith.constant 0 : index
      %c0_138 = arith.constant 0 : index
      %317 = vector.load %arg7[%c0_137, %c0_138] : memref<128x128xf32, #tpu.memory_space<vmem>>, vector<128x128xf32>
      %cst_139 = arith.constant dense<0.000000e+00> : vector<8x128xf32>
      %318 = tpu.matmul %309, %317, %cst_139 {dimension_numbers = #tpu.dot_dimension_numbers<[1], [0], [0], [1], [0, 0, 1, 1], [], []>} : vector<8x128xf32>, vector<128x128xf32>, vector<8x128xf32> -> vector<8x128xf32>
      %c0_140 = arith.constant 0 : index
      %c0_141 = arith.constant 0 : index
      %319 = vector.load %arg8[%c0_140, %c0_141] : memref<1x128xf32, #tpu.memory_space<vmem>>, vector<1x128xf32>
      %320 = vector.broadcast %319 : vector<1x128xf32> to vector<8x128xf32>
      %321 = arith.addf %318, %320 : vector<8x128xf32>
      %c0_142 = arith.constant 0 : index
      %c0_143 = arith.constant 0 : index
      %322 = vector.load %arg9[%c0_142, %c0_143] : memref<8x128xf32, #tpu.memory_space<vmem>>, vector<8x128xf32>
      tpu.vector_store %arg9[%c0_142, %c0_143], %321 {strides = array<i32>} : memref<8x128xf32, #tpu.memory_space<vmem>>, vector<8x128xf32>,
    } else {
    }
    return
  }
  func.func @transform_0(%arg0: i32) -> (i32, i32, i32) {
    %c0_i32 = arith.constant 0 : i32
    %c0_i32_0 = arith.constant 0 : i32
    %c0_i32_1 = arith.constant 0 : i32
    return %arg0, %c0_i32, %c0_i32_0 : i32, i32, i32
  }
  func.func @transform_1(%arg0: i32) -> (i32, i32) {
    %c0_i32 = arith.constant 0 : i32
    %c0_i32_0 = arith.constant 0 : i32
    %c0_i32_1 = arith.constant 0 : i32
    return %c0_i32, %c0_i32_0 : i32, i32
  }
  func.func @transform_2(%arg0: i32) -> (i32, i32) {
    %c0_i32 = arith.constant 0 : i32
    %c0_i32_0 = arith.constant 0 : i32
    %c0_i32_1 = arith.constant 0 : i32
    return %c0_i32, %c0_i32_0 : i32, i32
  }
  func.func @transform_3(%arg0: i32) -> (i32, i32) {
    %c0_i32 = arith.constant 0 : i32
    %c0_i32_0 = arith.constant 0 : i32
    %c0_i32_1 = arith.constant 0 : i32
    return %c0_i32, %c0_i32_0 : i32, i32
  }
  func.func @transform_4(%arg0: i32) -> (i32, i32) {
    %c0_i32 = arith.constant 0 : i32
    %c0_i32_0 = arith.constant 0 : i32
    %c0_i32_1 = arith.constant 0 : i32
    return %c0_i32, %c0_i32_0 : i32, i32
  }
  func.func @transform_5(%arg0: i32) -> (i32, i32) {
    %c0_i32 = arith.constant 0 : i32
    %c0_i32_0 = arith.constant 0 : i32
    %c0_i32_1 = arith.constant 0 : i32
    return %c0_i32, %c0_i32_0 : i32, i32
  }
  func.func @transform_6(%arg0: i32) -> (i32, i32) {
    %c0_i32 = arith.constant 0 : i32
    %c0_i32_0 = arith.constant 0 : i32
    %c0_i32_1 = arith.constant 0 : i32
    return %c0_i32, %c0_i32_0 : i32, i32
  }
  func.func @transform_7(%arg0: i32) -> (i32, i32) {
    %c0_i32 = arith.constant 0 : i32
    %c0_i32_0 = arith.constant 0 : i32
    %c0_i32_1 = arith.constant 0 : i32
    return %c0_i32, %c0_i32_0 : i32, i32
  }
  func.func @transform_8(%arg0: i32) -> (i32, i32) {
    %c0_i32 = arith.constant 0 : i32
    %c0_i32_0 = arith.constant 0 : i32
    %c0_i32_1 = arith.constant 0 : i32
    return %c0_i32, %c0_i32_0 : i32, i32
  }
  func.func @transform_9(%arg0: i32) -> (i32, i32) {
    %c0_i32 = arith.constant 0 : i32
    %c0_i32_0 = arith.constant 0 : i32
    %c0_i32_1 = arith.constant 0 : i32
    return %c0_i32, %c0_i32_0 : i32, i32
  }
  func.func @transform_10(%arg0: i32) -> (i32, i32) {
    %c0_i32 = arith.constant 0 : i32
    %c0_i32_0 = arith.constant 0 : i32
    %c0_i32_1 = arith.constant 0 : i32
    return %c0_i32, %c0_i32_0 : i32, i32
  }
}

</mosaic_0001>

<llo_original>
// kernel: tpu_custom_call.1
$region0: #{tpu_custom_call.1}
  #allocation0 [shape = 'u32[]', space=smem, size = 0x4, offset = 0x4, fixed_abs, tag = 'smem constant byte address 0x4 - core index']
  #allocation1 [shape = 'u32[72,128]{1,0:T(1,128)}', space=vmem, size = 0x9000, scoped, tag = 'internal scratch']
  #allocation2 [shape = 'f32[8,128]{1,0:T(8,128)}', space=vmem, size = 0x1000, scoped, tag = 'scratch operand']
  #allocation3 [shape = 'f32[8,128]{1,0:T(8,128)}', space=vmem, size = 0x1000, scoped, tag = 'scratch operand']
  #allocation4 [shape = 'f32[8,8,512]{2,1,0:T(8,128)}', space=vmem, size = 0x20000, scoped, tag = 'scratch operand']
  %s0 = inlined_call_operand.hbm [shape: f32[8,8,16], index: 0, kind: input, shape index: {}]
  %s1 = inlined_call_operand.hbm [shape: f32[8,128], index: 1, kind: input, shape index: {}]
  %s2 = inlined_call_operand.hbm [shape: f32[8,128], index: 2, kind: input, shape index: {}]
  %s3 = inlined_call_operand.hbm [shape: f32[16,512], index: 3, kind: input, shape index: {}]
  %s4 = inlined_call_operand.hbm [shape: f32[128,512], index: 4, kind: input, shape index: {}]
  %s5 = inlined_call_operand.vmem [shape: f32[1,512], index: 5, kind: input, shape index: {}]
  %s6 = inlined_call_operand.hbm [shape: f32[128,128], index: 6, kind: input, shape index: {}]
  %s7 = inlined_call_operand.vmem [shape: f32[1,128], index: 7, kind: input, shape index: {}]
  %s8 = inlined_call_operand.hbm [shape: f32[8,128], index: 8, kind: output, shape index: {0}]
  %s9 = inlined_call_operand.hbm [shape: f32[8,128], index: 9, kind: output, shape index: {1}]
  %s10 = inlined_call_operand.hbm [shape: f32[8,128], index: 10, kind: output, shape index: {2}]
  %11 = xla_tuple %s8, %s9, %s10
  %s12 = sld [smem:[#allocation0]]
  $region90: #{tpu_custom_call.1} parent=0
    _
  %s14 = ssub.s32 1, %s12
  %s15 = scalar_select 0, %s14, %s12
  $region1: #{tpu_custom_call.1} parent=0
    #allocation5 [shape = 'u8[32768]{0}', space=vmem, size = 0x8000, scoped, tag = 'input window, operand 0, single buffered']
    #allocation6 [shape = 's32[1]{0}', space=sflag, size = 0x4, scoped, tag = 'scoped memory for tpu_custom_call.1']
    #allocation7 [shape = 's32[1]{0}', space=sflag, size = 0x4, scoped, tag = 'scoped memory for tpu_custom_call.1']
    #allocation8 [shape = 'u8[4096]{0}', space=vmem, size = 0x1000, scoped, tag = 'input window, operand 1, single buffered']
    #allocation9 [shape = 's32[1]{0}', space=sflag, size = 0x4, scoped, tag = 'scoped memory for tpu_custom_call.1']
    #allocation10 [shape = 'u8[4096]{0}', space=vmem, size = 0x1000, scoped, tag = 'input window, operand 2, single buffered']
    #allocation11 [shape = 'u8[32768]{0}', space=vmem, size = 0x8000, scoped, tag = 'input window, operand 3, single buffered']
    #allocation12 [shape = 's32[1]{0}', space=sflag, size = 0x4, scoped, tag = 'scoped memory for tpu_custom_call.1']
    #allocation13 [shape = 'u8[262144]{0}', space=vmem, size = 0x40000, scoped, tag = 'input window, operand 4, single buffered']
    #allocation14 [shape = 'u8[65536]{0}', space=vmem, size = 0x10000, scoped, tag = 'input window, operand 6, single buffered']
    #allocation15 [shape = 's32[1]{0}', space=sflag, size = 0x4, scoped, tag = 'scoped memory for tpu_custom_call.1']
    #allocation16 [shape = 'u8[4096]{0}', space=vmem, size = 0x1000, scoped, tag = 'output window, operand 0, single buffered']
    #allocation17 [shape = 'u8[4096]{0}', space=vmem, size = 0x1000, scoped, tag = 'output window, operand 1, single buffered']
    #allocation18 [shape = 's32[1]{0}', space=sflag, size = 0x4, scoped, tag = 'scoped memory for tpu_custom_call.1']
    #allocation19 [shape = 'u8[4096]{0}', space=vmem, size = 0x1000, scoped, tag = 'output window, operand 2, single buffered']
    %16 = vsyncpa [#allocation6], 0
    %17 = vsyncpa [#allocation9], 0
    %18 = vsyncpa [#allocation12], 0
    %19 = vsyncpa [#allocation15], 0
    %20 = vsyncpa [#allocation7], 0
    %21 = vsyncpa [#allocation18], 0
    // Predicated region
    $region2: #{tpu_custom_call.1} parent=1 // pred_check
      _
    $region3: #{tpu_custom_call.1} parent=1 // pred_check_branch
      %23 = sbr.rel (0) target = $region5
    $region4: #{tpu_custom_call.1} parent=1 // pred_region
      %25 = vsyncadd [#allocation6], 0
      %s26 = sshll.u32 %s0, 4
      %s27 = int_to_ptr.hbm [resolvable:$true] %s26
      %s28 = sshll.u32 [#allocation5], 4
      %s29 = int_to_ptr.vmem [resolvable:$true] %s28
      %34 = dma.hbm_to_vmem [thread:$0]  %s27, 1024, %s29, [#allocation6], 128, 128, 8
    $region5: #{tpu_custom_call.1} parent=1 // pred_fallthru
      _
    // Predicated region
    $region6: #{tpu_custom_call.1} parent=1 // pred_check
      _
    $region7: #{tpu_custom_call.1} parent=1 // pred_check_branch
      %36 = sbr.rel (0) target = $region9
    $region8: #{tpu_custom_call.1} parent=1 // pred_region
      %38 = vsyncadd [#allocation9], 0
      %s40 = sshll.u32 %s1, 4
      %s41 = int_to_ptr.hbm [resolvable:$true] %s40
      %s42 = sshll.u32 [#allocation8], 4
      %s43 = int_to_ptr.vmem [resolvable:$true] %s42
      %45 = dma.hbm_to_vmem [thread:$0]  %s41, 128, %s43, [#allocation9]
    $region9: #{tpu_custom_call.1} parent=1 // pred_fallthru
      _
    // Predicated region
    $region10: #{tpu_custom_call.1} parent=1 // pred_check
      _
    $region11: #{tpu_custom_call.1} parent=1 // pred_check_branch
      %47 = sbr.rel (0) target = $region13
    $region12: #{tpu_custom_call.1} parent=1 // pred_region
      %49 = vsyncadd [#allocation9], 0
      %s51 = sshll.u32 %s2, 4
      %s52 = int_to_ptr.hbm [resolvable:$true] %s51
      %s53 = sshll.u32 [#allocation10], 4
      %s54 = int_to_ptr.vmem [resolvable:$true] %s53
      %56 = dma.hbm_to_vmem [thread:$0]  %s52, 128, %s54, [#allocation9]
    $region13: #{tpu_custom_call.1} parent=1 // pred_fallthru
      _
    // Predicated region
    $region14: #{tpu_custom_call.1} parent=1 // pred_check
      _
    $region15: #{tpu_custom_call.1} parent=1 // pred_check_branch
      %58 = sbr.rel (0) target = $region17
    $region16: #{tpu_custom_call.1} parent=1 // pred_region
      %60 = vsyncadd [#allocation12], 0
      %s61 = sshll.u32 %s3, 4
      %s62 = int_to_ptr.hbm [resolvable:$true] %s61
      %s63 = sshll.u32 [#allocation11], 4
      %s64 = int_to_ptr.vmem [resolvable:$true] %s63
      %69 = dma.hbm_to_vmem [thread:$0]  %s62, 1024, %s64, [#allocation12], 512, 512, 32
    $region17: #{tpu_custom_call.1} parent=1 // pred_fallthru
      _
    // Predicated region
    $region18: #{tpu_custom_call.1} parent=1 // pred_check
      _
    $region19: #{tpu_custom_call.1} parent=1 // pred_check_branch
      %71 = sbr.rel (0) target = $region21
    $region20: #{tpu_custom_call.1} parent=1 // pred_region
      %73 = vsyncadd [#allocation12], 0
      %s74 = sshll.u32 %s4, 4
      %s75 = int_to_ptr.hbm [resolvable:$true] %s74
      %s76 = sshll.u32 [#allocation13], 4
      %s77 = int_to_ptr.vmem [resolvable:$true] %s76
      %82 = dma.hbm_to_vmem [thread:$0]  %s75, 8192, %s77, [#allocation12], 512, 512, 32
    $region21: #{tpu_custom_call.1} parent=1 // pred_fallthru
      _
    // Predicated region
    $region22: #{tpu_custom_call.1} parent=1 // pred_check
      _
    $region23: #{tpu_custom_call.1} parent=1 // pred_check_branch
      %84 = sbr.rel (0) target = $region25
    $region24: #{tpu_custom_call.1} parent=1 // pred_region
      _
    $region25: #{tpu_custom_call.1} parent=1 // pred_fallthru
      _
    // Predicated region
    $region26: #{tpu_custom_call.1} parent=1 // pred_check
      _
    $region27: #{tpu_custom_call.1} parent=1 // pred_check_branch
      %86 = sbr.rel (0) target = $region29
    $region28: #{tpu_custom_call.1} parent=1 // pred_region
      %88 = vsyncadd [#allocation15], 0
      %s89 = sshll.u32 %s6, 4
      %s90 = int_to_ptr.hbm [resolvable:$true] %s89
      %s91 = sshll.u32 [#allocation14], 4
      %s92 = int_to_ptr.vmem [resolvable:$true] %s91
      %97 = dma.hbm_to_vmem [thread:$0]  %s90, 2048, %s92, [#allocation15], 128, 128, 8
    $region29: #{tpu_custom_call.1} parent=1 // pred_fallthru
      _
    // Predicated region
    $region30: #{tpu_custom_call.1} parent=1 // pred_check
      _
    $region31: #{tpu_custom_call.1} parent=1 // pred_check_branch
      %99 = sbr.rel (0) target = $region33
    $region32: #{tpu_custom_call.1} parent=1 // pred_region
      _
    $region33: #{tpu_custom_call.1} parent=1 // pred_fallthru
      _
    // Predicated region
    $region34: #{tpu_custom_call.1} parent=1 // pred_check
      _
    $region35: #{tpu_custom_call.1} parent=1 // pred_check_branch
      %101 = sbr.rel (0) target = $region37
    $region36: #{tpu_custom_call.1} parent=1 // pred_region
      %103 = dma.done [#allocation6], 1024
    $region37: #{tpu_custom_call.1} parent=1 // pred_fallthru
      _
    // Predicated region
    $region38: #{tpu_custom_call.1} parent=1 // pred_check
      _
    $region39: #{tpu_custom_call.1} parent=1 // pred_check_branch
      %105 = sbr.rel (0) target = $region41
    $region40: #{tpu_custom_call.1} parent=1 // pred_region
      %107 = dma.done [#allocation9], 128
    $region41: #{tpu_custom_call.1} parent=1 // pred_fallthru
      _
    // Predicated region
    $region42: #{tpu_custom_call.1} parent=1 // pred_check
      _
    $region43: #{tpu_custom_call.1} parent=1 // pred_check_branch
      %109 = sbr.rel (0) target = $region45
    $region44: #{tpu_custom_call.1} parent=1 // pred_region
      %111 = dma.done [#allocation9], 128
    $region45: #{tpu_custom_call.1} parent=1 // pred_fallthru
      _
    // Predicated region
    $region46: #{tpu_custom_call.1} parent=1 // pred_check
      _
    $region47: #{tpu_custom_call.1} parent=1 // pred_check_branch
      %113 = sbr.rel (0) target = $region49
    $region48: #{tpu_custom_call.1} parent=1 // pred_region
      %115 = dma.done [#allocation12], 1024
    $region49: #{tpu_custom_call.1} parent=1 // pred_fallthru
      _
    // Predicated region
    $region50: #{tpu_custom_call.1} parent=1 // pred_check
      _
    $region51: #{tpu_custom_call.1} parent=1 // pred_check_branch
      %117 = sbr.rel (0) target = $region53
    $region52: #{tpu_custom_call.1} parent=1 // pred_region
      %119 = dma.done [#allocation12], 8192
    $region53: #{tpu_custom_call.1} parent=1 // pred_fallthru
      _
    // Predicated region
    $region54: #{tpu_custom_call.1} parent=1 // pred_check
      _
    $region55: #{tpu_custom_call.1} parent=1 // pred_check_branch
      %121 = sbr.rel (0) target = $region57
    $region56: #{tpu_custom_call.1} parent=1 // pred_region
      %123 = dma.done [#allocation15], 2048
    $region57: #{tpu_custom_call.1} parent=1 // pred_fallthru
      _
    %p124 = scmp.eq.s32.totalorder 0, 0
    // Predicated region
    $region58: #{tpu_custom_call.1} parent=1 // pred_check
      %p125 = pneg %p124
    $region59: #{tpu_custom_call.1} parent=1 // pred_check_branch
      %127 = sbr.rel (%p125) target = $region61
    $region60: #{tpu_custom_call.1} parent=1 // pred_region
      %v128 = vld [vmem:[#allocation8] sm:$0xff]
      %129 = vst [vmem:[#allocation2] sm:$0xff] %v128
      %v130 = vld [vmem:[#allocation10] sm:$0xff]
      %131 = vst [vmem:[#allocation3] sm:$0xff] %v130
    $region61: #{tpu_custom_call.1} parent=1 // pred_fallthru
      _
    %v132 = vld [vmem:[#allocation5] sm:$0xff]
    %v133 = vld [vmem:[#allocation5 + $0x8] sm:$0xff]
    %v134 = vld [vmem:[#allocation5 + $0x10] sm:$0xff]
    %v135 = vld [vmem:[#allocation5 + $0x18] sm:$0xff]
    %v136 = vld [vmem:[#allocation5 + $0x20] sm:$0xff]
    %v137 = vld [vmem:[#allocation5 + $0x28] sm:$0xff]
    %v138 = vld [vmem:[#allocation5 + $0x30] sm:$0xff]
    %v139 = vld [vmem:[#allocation5 + $0x38] sm:$0xff]
    %v140 = vld [vmem:[#allocation11] sm:$0xff]
    %v141 = vld [vmem:[#allocation11 + $0x8] sm:$0xff]
    %v142 = vld [vmem:[#allocation11 + $0x10] sm:$0xff]
    %v143 = vld [vmem:[#allocation11 + $0x18] sm:$0xff]
    %v144 = vld [vmem:[#allocation11 + $0x20] sm:$0xff]
    %v145 = vld [vmem:[#allocation11 + $0x28] sm:$0xff]
    %v146 = vld [vmem:[#allocation11 + $0x30] sm:$0xff]
    %v147 = vld [vmem:[#allocation11 + $0x38] sm:$0xff]
    %v148 = vld [vmem:[%s5] sm:$0xf]
    %v150 = vperm.slane %v148, 0
    %v151 = vperm.slane %v148, 1
    %v152 = vperm.slane %v148, 2
    %v153 = vperm.slane %v148, 3
    %vm158 = vcmask 130048
    %v160 = vsel %vm158, %v132, 0
    %v163 = vsel %vm158, %v133, 0
    %v166 = vsel %vm158, %v134, 0
    %v169 = vsel %vm158, %v135, 0
    %v172 = vsel %vm158, %v136, 0
    %v175 = vsel %vm158, %v137, 0
    %v178 = vsel %vm158, %v138, 0
    %v181 = vsel %vm158, %v139, 0
    %183 = vmatpush.msra.mxu0 0.0
    %184 = vmatpush.msra.mxu0 0.0
    %185 = vmatpush.msra.mxu0 0.0
    %186 = vmatpush.msra.mxu0 0.0
    %187 = vmatpush.msra.mxu0 0.0
    %188 = vmatpush.msra.mxu0 0.0
    %189 = vmatpush.msra.mxu0 0.0
    %190 = vmatpush.msra.mxu0 0.0
    %191 = vmatpush.msra.mxu0 0.0
    %192 = vmatpush.msra.mxu0 0.0
    %193 = vmatpush.msra.mxu0 0.0
    %194 = vmatpush.msra.mxu0 0.0
    %195 = vmatpush.msra.mxu0 0.0
    %196 = vmatpush.msra.mxu0 0.0
    %197 = vmatpush.msra.mxu0 %v144
    %198 = vmatpush.msra.mxu0 %v140
    %199 = vmatmul.f32.gmra.mxu0 %v160
    %v200 = vpop.f32.mrf.mxu0
    %v201 = vadd.f32 %v150, %v200
    %202 = vmatmul.f32.gmra.mxu0 %v163
    %v203 = vpop.f32.mrf.mxu0
    %v204 = vadd.f32 %v150, %v203
    %205 = vmatmul.f32.gmra.mxu0 %v166
    %v206 = vpop.f32.mrf.mxu0
    %v207 = vadd.f32 %v150, %v206
    %208 = vmatmul.f32.gmra.mxu0 %v169
    %v209 = vpop.f32.mrf.mxu0
    %v210 = vadd.f32 %v150, %v209
    %211 = vmatmul.f32.gmra.mxu0 %v172
    %v212 = vpop.f32.mrf.mxu0
    %v213 = vadd.f32 %v150, %v212
    %214 = vmatmul.f32.gmra.mxu0 %v175
    %v215 = vpop.f32.mrf.mxu0
    %v216 = vadd.f32 %v150, %v215
    %217 = vmatmul.f32.gmra.mxu0 %v178
    %v218 = vpop.f32.mrf.mxu0
    %v219 = vadd.f32 %v150, %v218
    %220 = vmatmul.f32.gmra.mxu0 %v181
    %v221 = vpop.f32.mrf.mxu0
    %v222 = vadd.f32 %v150, %v221
    %223 = vdwg.mxu0
    %224 = vmatpush.msra.mxu0 0.0
    %225 = vmatpush.msra.mxu0 0.0
    %226 = vmatpush.msra.mxu0 0.0
    %227 = vmatpush.msra.mxu0 0.0
    %228 = vmatpush.msra.mxu0 0.0
    %229 = vmatpush.msra.mxu0 0.0
    %230 = vmatpush.msra.mxu0 0.0
    %231 = vmatpush.msra.mxu0 0.0
    %232 = vmatpush.msra.mxu0 0.0
    %233 = vmatpush.msra.mxu0 0.0
    %234 = vmatpush.msra.mxu0 0.0
    %235 = vmatpush.msra.mxu0 0.0
    %236 = vmatpush.msra.mxu0 0.0
    %237 = vmatpush.msra.mxu0 0.0
    %238 = vmatpush.msra.mxu0 %v145
    %239 = vmatpush.msra.mxu0 %v141
    %240 = vmatmul.f32.gmra.mxu0 %v160
    %v241 = vpop.f32.mrf.mxu0
    %v242 = vadd.f32 %v151, %v241
    %243 = vmatmul.f32.gmra.mxu0 %v163
    %v244 = vpop.f32.mrf.mxu0
    %v245 = vadd.f32 %v151, %v244
    %246 = vmatmul.f32.gmra.mxu0 %v166
    %v247 = vpop.f32.mrf.mxu0
    %v248 = vadd.f32 %v151, %v247
    %249 = vmatmul.f32.gmra.mxu0 %v169
    %v250 = vpop.f32.mrf.mxu0
    %v251 = vadd.f32 %v151, %v250
    %252 = vmatmul.f32.gmra.mxu0 %v172
    %v253 = vpop.f32.mrf.mxu0
    %v254 = vadd.f32 %v151, %v253
    %255 = vmatmul.f32.gmra.mxu0 %v175
    %v256 = vpop.f32.mrf.mxu0
    %v257 = vadd.f32 %v151, %v256
    %258 = vmatmul.f32.gmra.mxu0 %v178
    %v259 = vpop.f32.mrf.mxu0
    %v260 = vadd.f32 %v151, %v259
    %261 = vmatmul.f32.gmra.mxu0 %v181
    %v262 = vpop.f32.mrf.mxu0
    %v263 = vadd.f32 %v151, %v262
    %264 = vdwg.mxu0
    %265 = vmatpush.msra.mxu0 0.0
    %266 = vmatpush.msra.mxu0 0.0
    %267 = vmatpush.msra.mxu0 0.0
    %268 = vmatpush.msra.mxu0 0.0
    %269 = vmatpush.msra.mxu0 0.0
    %270 = vmatpush.msra.mxu0 0.0
    %271 = vmatpush.msra.mxu0 0.0
    %272 = vmatpush.msra.mxu0 0.0
    %273 = vmatpush.msra.mxu0 0.0
    %274 = vmatpush.msra.mxu0 0.0
    %275 = vmatpush.msra.mxu0 0.0
    %276 = vmatpush.msra.mxu0 0.0
    %277 = vmatpush.msra.mxu0 0.0
    %278 = vmatpush.msra.mxu0 0.0
    %279 = vmatpush.msra.mxu0 %v146
    %280 = vmatpush.msra.mxu0 %v142
    %281 = vmatmul.f32.gmra.mxu0 %v160
    %v282 = vpop.f32.mrf.mxu0
    %v283 = vadd.f32 %v152, %v282
    %284 = vmatmul.f32.gmra.mxu0 %v163
    %v285 = vpop.f32.mrf.mxu0
    %v286 = vadd.f32 %v152, %v285
    %287 = vmatmul.f32.gmra.mxu0 %v166
    %v288 = vpop.f32.mrf.mxu0
    %v289 = vadd.f32 %v152, %v288
    %290 = vmatmul.f32.gmra.mxu0 %v169
    %v291 = vpop.f32.mrf.mxu0
    %v292 = vadd.f32 %v152, %v291
    %293 = vmatmul.f32.gmra.mxu0 %v172
    %v294 = vpop.f32.mrf.mxu0
    %v295 = vadd.f32 %v152, %v294
    %296 = vmatmul.f32.gmra.mxu0 %v175
    %v297 = vpop.f32.mrf.mxu0
    %v298 = vadd.f32 %v152, %v297
    %299 = vmatmul.f32.gmra.mxu0 %v178
    %v300 = vpop.f32.mrf.mxu0
    %v301 = vadd.f32 %v152, %v300
    %302 = vmatmul.f32.gmra.mxu0 %v181
    %v303 = vpop.f32.mrf.mxu0
    %v304 = vadd.f32 %v152, %v303
    %305 = vdwg.mxu0
    %306 = vmatpush.msra.mxu0 0.0
    %307 = vmatpush.msra.mxu0 0.0
    %308 = vmatpush.msra.mxu0 0.0
    %309 = vmatpush.msra.mxu0 0.0
    %310 = vmatpush.msra.mxu0 0.0
    %311 = vmatpush.msra.mxu0 0.0
    %312 = vmatpush.msra.mxu0 0.0
    %313 = vmatpush.msra.mxu0 0.0
    %314 = vmatpush.msra.mxu0 0.0
    %315 = vmatpush.msra.mxu0 0.0
    %316 = vmatpush.msra.mxu0 0.0
    %317 = vmatpush.msra.mxu0 0.0
    %318 = vmatpush.msra.mxu0 0.0
    %319 = vmatpush.msra.mxu0 0.0
    %320 = vmatpush.msra.mxu0 %v147
    %321 = vmatpush.msra.mxu0 %v143
    %322 = vmatmul.f32.gmra.mxu0 %v160
    %v323 = vpop.f32.mrf.mxu0
    %v324 = vadd.f32 %v153, %v323
    %325 = vmatmul.f32.gmra.mxu0 %v163
    %v326 = vpop.f32.mrf.mxu0
    %v327 = vadd.f32 %v153, %v326
    %328 = vmatmul.f32.gmra.mxu0 %v166
    %v329 = vpop.f32.mrf.mxu0
    %v330 = vadd.f32 %v153, %v329
    %331 = vmatmul.f32.gmra.mxu0 %v169
    %v332 = vpop.f32.mrf.mxu0
    %v333 = vadd.f32 %v153, %v332
    %334 = vmatmul.f32.gmra.mxu0 %v172
    %v335 = vpop.f32.mrf.mxu0
    %v336 = vadd.f32 %v153, %v335
    %337 = vmatmul.f32.gmra.mxu0 %v175
    %v338 = vpop.f32.mrf.mxu0
    %v339 = vadd.f32 %v153, %v338
    %340 = vmatmul.f32.gmra.mxu0 %v178
    %v341 = vpop.f32.mrf.mxu0
    %v342 = vadd.f32 %v153, %v341
    %343 = vmatmul.f32.gmra.mxu0 %v181
    %v344 = vpop.f32.mrf.mxu0
    %v345 = vadd.f32 %v153, %v344
    %346 = vdwg.mxu0
    %347 = vst [vmem:[#allocation4] sm:$0xff] %v201
    %348 = vst [vmem:[#allocation4 + $0x8] sm:$0xff] %v242
    %349 = vst [vmem:[#allocation4 + $0x10] sm:$0xff] %v283
    %350 = vst [vmem:[#allocation4 + $0x18] sm:$0xff] %v324
    %351 = vst [vmem:[#allocation4 + $0x20] sm:$0xff] %v204
    %352 = vst [vmem:[#allocation4 + $0x28] sm:$0xff] %v245
    %353 = vst [vmem:[#allocation4 + $0x30] sm:$0xff] %v286
    %354 = vst [vmem:[#allocation4 + $0x38] sm:$0xff] %v327
    %355 = vst [vmem:[#allocation4 + $0x40] sm:$0xff] %v207
    %356 = vst [vmem:[#allocation4 + $0x48] sm:$0xff] %v248
    %357 = vst [vmem:[#allocation4 + $0x50] sm:$0xff] %v289
    %358 = vst [vmem:[#allocation4 + $0x58] sm:$0xff] %v330
    %359 = vst [vmem:[#allocation4 + $0x60] sm:$0xff] %v210
    %360 = vst [vmem:[#allocation4 + $0x68] sm:$0xff] %v251
    %361 = vst [vmem:[#allocation4 + $0x70] sm:$0xff] %v292
    %362 = vst [vmem:[#allocation4 + $0x78] sm:$0xff] %v333
    %363 = vst [vmem:[#allocation4 + $0x80] sm:$0xff] %v213
    %364 = vst [vmem:[#allocation4 + $0x88] sm:$0xff] %v254
    %365 = vst [vmem:[#allocation4 + $0x90] sm:$0xff] %v295
    %366 = vst [vmem:[#allocation4 + $0x98] sm:$0xff] %v336
    %367 = vst [vmem:[#allocation4 + $0xa0] sm:$0xff] %v216
    %368 = vst [vmem:[#allocation4 + $0xa8] sm:$0xff] %v257
    %369 = vst [vmem:[#allocation4 + $0xb0] sm:$0xff] %v298
    %370 = vst [vmem:[#allocation4 + $0xb8] sm:$0xff] %v339
    %371 = vst [vmem:[#allocation4 + $0xc0] sm:$0xff] %v219
    %372 = vst [vmem:[#allocation4 + $0xc8] sm:$0xff] %v260
    %373 = vst [vmem:[#allocation4 + $0xd0] sm:$0xff] %v301
    %374 = vst [vmem:[#allocation4 + $0xd8] sm:$0xff] %v342
    %375 = vst [vmem:[#allocation4 + $0xe0] sm:$0xff] %v222
    %376 = vst [vmem:[#allocation4 + $0xe8] sm:$0xff] %v263
    %377 = vst [vmem:[#allocation4 + $0xf0] sm:$0xff] %v304
    %378 = vst [vmem:[#allocation4 + $0xf8] sm:$0xff] %v345
    %v379 = vld [vmem:[#allocation2] sm:$0xff]
    %v380 = vld [vmem:[#allocation3] sm:$0xff]
    %v381 = vld [vmem:[#allocation4] sm:$0xff]
    %v382 = vld [vmem:[#allocation4 + $0x8] sm:$0xff]
    %v383 = vld [vmem:[#allocation4 + $0x10] sm:$0xff]
    %v384 = vld [vmem:[#allocation4 + $0x18] sm:$0xff]
    %v385 = vld [vmem:[#allocation13] sm:$0xff]
    %v386 = vld [vmem:[#allocation13 + $0x8] sm:$0xff]
    %v387 = vld [vmem:[#allocation13 + $0x10] sm:$0xff]
    %v388 = vld [vmem:[#allocation13 + $0x18] sm:$0xff]
    %v389 = vld [vmem:[#allocation13 + $0x20] sm:$0xff]
    %v390 = vld [vmem:[#allocation13 + $0x28] sm:$0xff]
    %v391 = vld [vmem:[#allocation13 + $0x30] sm:$0xff]
    %v392 = vld [vmem:[#allocation13 + $0x38] sm:$0xff]
    %v393 = vld [vmem:[#allocation13 + $0x40] sm:$0xff]
    %v394 = vld [vmem:[#allocation13 + $0x48] sm:$0xff]
    %v395 = vld [vmem:[#allocation13 + $0x50] sm:$0xff]
    %v396 = vld [vmem:[#allocation13 + $0x58] sm:$0xff]
    %v397 = vld [vmem:[#allocation13 + $0x60] sm:$0xff]
    %v398 = vld [vmem:[#allocation13 + $0x68] sm:$0xff]
    %v399 = vld [vmem:[#allocation13 + $0x70] sm:$0xff]
    %v400 = vld [vmem:[#allocation13 + $0x78] sm:$0xff]
    %v401 = vld [vmem:[#allocation13 + $0x80] sm:$0xff]
    %v402 = vld [vmem:[#allocation13 + $0x88] sm:$0xff]
    %v403 = vld [vmem:[#allocation13 + $0x90] sm:$0xff]
    %v404 = vld [vmem:[#allocation13 + $0x98] sm:$0xff]
    %v405 = vld [vmem:[#allocation13 + $0xa0] sm:$0xff]
    %v406 = vld [vmem:[#allocation13 + $0xa8] sm:$0xff]
    %v407 = vld [vmem:[#allocation13 + $0xb0] sm:$0xff]
    %v408 = vld [vmem:[#allocation13 + $0xb8] sm:$0xff]
    %v409 = vld [vmem:[#allocation13 + $0xc0] sm:$0xff]
    %v410 = vld [vmem:[#allocation13 + $0xc8] sm:$0xff]
    %v411 = vld [vmem:[#allocation13 + $0xd0] sm:$0xff]
    %v412 = vld [vmem:[#allocation13 + $0xd8] sm:$0xff]
    %v413 = vld [vmem:[#allocation13 + $0xe0] sm:$0xff]
    %v414 = vld [vmem:[#allocation13 + $0xe8] sm:$0xff]
    %v415 = vld [vmem:[#allocation13 + $0xf0] sm:$0xff]
    %v416 = vld [vmem:[#allocation13 + $0xf8] sm:$0xff]
    %v417 = vld [vmem:[#allocation13 + $0x100] sm:$0xff]
    %v418 = vld [vmem:[#allocation13 + $0x108] sm:$0xff]
    %v419 = vld [vmem:[#allocation13 + $0x110] sm:$0xff]
    %v420 = vld [vmem:[#allocation13 + $0x118] sm:$0xff]
    %v421 = vld [vmem:[#allocation13 + $0x120] sm:$0xff]
    %v422 = vld [vmem:[#allocation13 + $0x128] sm:$0xff]
    %v423 = vld [vmem:[#allocation13 + $0x130] sm:$0xff]
    %v424 = vld [vmem:[#allocation13 + $0x138] sm:$0xff]
    %v425 = vld [vmem:[#allocation13 + $0x140] sm:$0xff]
    %v426 = vld [vmem:[#allocation13 + $0x148] sm:$0xff]
    %v427 = vld [vmem:[#allocation13 + $0x150] sm:$0xff]
    %v428 = vld [vmem:[#allocation13 + $0x158] sm:$0xff]
    %v429 = vld [vmem:[#allocation13 + $0x160] sm:$0xff]
    %v430 = vld [vmem:[#allocation13 + $0x168] sm:$0xff]
    %v431 = vld [vmem:[#allocation13 + $0x170] sm:$0xff]
    %v432 = vld [vmem:[#allocation13 + $0x178] sm:$0xff]
    %v433 = vld [vmem:[#allocation13 + $0x180] sm:$0xff]
    %v434 = vld [vmem:[#allocation13 + $0x188] sm:$0xff]
    %v435 = vld [vmem:[#allocation13 + $0x190] sm:$0xff]
    %v436 = vld [vmem:[#allocation13 + $0x198] sm:$0xff]
    %v437 = vld [vmem:[#allocation13 + $0x1a0] sm:$0xff]
    %v438 = vld [vmem:[#allocation13 + $0x1a8] sm:$0xff]
    %v439 = vld [vmem:[#allocation13 + $0x1b0] sm:$0xff]
    %v440 = vld [vmem:[#allocation13 + $0x1b8] sm:$0xff]
    %v441 = vld [vmem:[#allocation13 + $0x1c0] sm:$0xff]
    %v442 = vld [vmem:[#allocation13 + $0x1c8] sm:$0xff]
    %v443 = vld [vmem:[#allocation13 + $0x1d0] sm:$0xff]
    %v444 = vld [vmem:[#allocation13 + $0x1d8] sm:$0xff]
    %v445 = vld [vmem:[#allocation13 + $0x1e0] sm:$0xff]
    %v446 = vld [vmem:[#allocation13 + $0x1e8] sm:$0xff]
    %v447 = vld [vmem:[#allocation13 + $0x1f0] sm:$0xff]
    %v448 = vld [vmem:[#allocation13 + $0x1f8] sm:$0xff]
    %449 = vmatpush.msra.mxu0 %v445
    %450 = vmatpush.msra.mxu0 %v441
    %451 = vmatpush.msra.mxu0 %v437
    %452 = vmatpush.msra.mxu0 %v433
    %453 = vmatpush.msra.mxu0 %v429
    %454 = vmatpush.msra.mxu0 %v425
    %455 = vmatpush.msra.mxu0 %v421
    %456 = vmatpush.msra.mxu0 %v417
    %457 = vmatpush.msra.mxu0 %v413
    %458 = vmatpush.msra.mxu0 %v409
    %459 = vmatpush.msra.mxu0 %v405
    %460 = vmatpush.msra.mxu0 %v401
    %461 = vmatpush.msra.mxu0 %v397
    %462 = vmatpush.msra.mxu0 %v393
    %463 = vmatpush.msra.mxu0 %v389
    %464 = vmatpush.msra.mxu0 %v385
    %465 = vmatmul.f32.gmra.mxu0 %v379
    %v466 = vpop.f32.mrf.mxu0
    %v467 = vadd.f32 0.0, %v466
    %468 = vdwg.mxu0
    %469 = vmatpush.msra.mxu0 %v446
    %470 = vmatpush.msra.mxu0 %v442
    %471 = vmatpush.msra.mxu0 %v438
    %472 = vmatpush.msra.mxu0 %v434
    %473 = vmatpush.msra.mxu0 %v430
    %474 = vmatpush.msra.mxu0 %v426
    %475 = vmatpush.msra.mxu0 %v422
    %476 = vmatpush.msra.mxu0 %v418
    %477 = vmatpush.msra.mxu0 %v414
    %478 = vmatpush.msra.mxu0 %v410
    %479 = vmatpush.msra.mxu0 %v406
    %480 = vmatpush.msra.mxu0 %v402
    %481 = vmatpush.msra.mxu0 %v398
    %482 = vmatpush.msra.mxu0 %v394
    %483 = vmatpush.msra.mxu0 %v390
    %484 = vmatpush.msra.mxu0 %v386
    %485 = vmatmul.f32.gmra.mxu0 %v379
    %v486 = vpop.f32.mrf.mxu0
    %v487 = vadd.f32 0.0, %v486
    %488 = vdwg.mxu0
    %489 = vmatpush.msra.mxu0 %v447
    %490 = vmatpush.msra.mxu0 %v443
    %491 = vmatpush.msra.mxu0 %v439
    %492 = vmatpush.msra.mxu0 %v435
    %493 = vmatpush.msra.mxu0 %v431
    %494 = vmatpush.msra.mxu0 %v427
    %495 = vmatpush.msra.mxu0 %v423
    %496 = vmatpush.msra.mxu0 %v419
    %497 = vmatpush.msra.mxu0 %v415
    %498 = vmatpush.msra.mxu0 %v411
    %499 = vmatpush.msra.mxu0 %v407
    %500 = vmatpush.msra.mxu0 %v403
    %501 = vmatpush.msra.mxu0 %v399
    %502 = vmatpush.msra.mxu0 %v395
    %503 = vmatpush.msra.mxu0 %v391
    %504 = vmatpush.msra.mxu0 %v387
    %505 = vmatmul.f32.gmra.mxu0 %v379
    %v506 = vpop.f32.mrf.mxu0
    %v507 = vadd.f32 0.0, %v506
    %508 = vdwg.mxu0
    %509 = vmatpush.msra.mxu0 %v448
    %510 = vmatpush.msra.mxu0 %v444
    %511 = vmatpush.msra.mxu0 %v440
    %512 = vmatpush.msra.mxu0 %v436
    %513 = vmatpush.msra.mxu0 %v432
    %514 = vmatpush.msra.mxu0 %v428
    %515 = vmatpush.msra.mxu0 %v424
    %516 = vmatpush.msra.mxu0 %v420
    %517 = vmatpush.msra.mxu0 %v416
    %518 = vmatpush.msra.mxu0 %v412
    %519 = vmatpush.msra.mxu0 %v408
    %520 = vmatpush.msra.mxu0 %v404
    %521 = vmatpush.msra.mxu0 %v400
    %522 = vmatpush.msra.mxu0 %v396
    %523 = vmatpush.msra.mxu0 %v392
    %524 = vmatpush.msra.mxu0 %v388
    %525 = vmatmul.f32.gmra.mxu0 %v379
    %v526 = vpop.f32.mrf.mxu0
    %v527 = vadd.f32 0.0, %v526
    %528 = vdwg.mxu0
    %v529 = vadd.f32 %v381, %v467
    %v530 = vadd.f32 %v382, %v487
    %v531 = vadd.f32 %v383, %v507
    %v532 = vadd.f32 %v384, %v527
    %v533 = vmul.f32 %v529, 0.5
    %v534 = vtanh.pop %v533
    %v535 = vmul.f32 %v534, 0.5
    %v536 = vadd.f32 %v535, 0.5
    %v537 = vmul.f32 %v530, 0.5
    %v538 = vtanh.pop %v537
    %v539 = vmul.f32 %v538, 0.5
    %v540 = vadd.f32 %v539, 0.5
    %v541 = vtanh.pop %v531
    %v542 = vmul.f32 %v532, 0.5
    %v543 = vtanh.pop %v542
    %v544 = vmul.f32 %v543, 0.5
    %v545 = vadd.f32 %v544, 0.5
    %v546 = vmul.f32 %v540, %v380
    %v547 = vmul.f32 %v536, %v541
    %v548 = vadd.f32 %v546, %v547
    %v549 = vtanh.pop %v548
    %v550 = vmul.f32 %v545, %v549
    %s551 = scalar_lea.vmem [#allocation4], 32
    %v552 = vld [vmem:[%s551] sm:$0xff]
    %v553 = vld [vmem:[%s551 + $0x8] sm:$0xff]
    %v554 = vld [vmem:[%s551 + $0x10] sm:$0xff]
    %v555 = vld [vmem:[%s551 + $0x18] sm:$0xff]
    %556 = vmatpush.msra.mxu0 %v445
    %557 = vmatpush.msra.mxu0 %v441
    %558 = vmatpush.msra.mxu0 %v437
    %559 = vmatpush.msra.mxu0 %v433
    %560 = vmatpush.msra.mxu0 %v429
    %561 = vmatpush.msra.mxu0 %v425
    %562 = vmatpush.msra.mxu0 %v421
    %563 = vmatpush.msra.mxu0 %v417
    %564 = vmatpush.msra.mxu0 %v413
    %565 = vmatpush.msra.mxu0 %v409
    %566 = vmatpush.msra.mxu0 %v405
    %567 = vmatpush.msra.mxu0 %v401
    %568 = vmatpush.msra.mxu0 %v397
    %569 = vmatpush.msra.mxu0 %v393
    %570 = vmatpush.msra.mxu0 %v389
    %571 = vmatpush.msra.mxu0 %v385
    %572 = vmatmul.f32.gmra.mxu0 %v550
    %v573 = vpop.f32.mrf.mxu0
    %v574 = vadd.f32 0.0, %v573
    %575 = vdwg.mxu0
    %576 = vmatpush.msra.mxu0 %v446
    %577 = vmatpush.msra.mxu0 %v442
    %578 = vmatpush.msra.mxu0 %v438
    %579 = vmatpush.msra.mxu0 %v434
    %580 = vmatpush.msra.mxu0 %v430
    %581 = vmatpush.msra.mxu0 %v426
    %582 = vmatpush.msra.mxu0 %v422
    %583 = vmatpush.msra.mxu0 %v418
    %584 = vmatpush.msra.mxu0 %v414
    %585 = vmatpush.msra.mxu0 %v410
    %586 = vmatpush.msra.mxu0 %v406
    %587 = vmatpush.msra.mxu0 %v402
    %588 = vmatpush.msra.mxu0 %v398
    %589 = vmatpush.msra.mxu0 %v394
    %590 = vmatpush.msra.mxu0 %v390
    %591 = vmatpush.msra.mxu0 %v386
    %592 = vmatmul.f32.gmra.mxu0 %v550
    %v593 = vpop.f32.mrf.mxu0
    %v594 = vadd.f32 0.0, %v593
    %595 = vdwg.mxu0
    %596 = vmatpush.msra.mxu0 %v447
    %597 = vmatpush.msra.mxu0 %v443
    %598 = vmatpush.msra.mxu0 %v439
    %599 = vmatpush.msra.mxu0 %v435
    %600 = vmatpush.msra.mxu0 %v431
    %601 = vmatpush.msra.mxu0 %v427
    %602 = vmatpush.msra.mxu0 %v423
    %603 = vmatpush.msra.mxu0 %v419
    %604 = vmatpush.msra.mxu0 %v415
    %605 = vmatpush.msra.mxu0 %v411
    %606 = vmatpush.msra.mxu0 %v407
    %607 = vmatpush.msra.mxu0 %v403
    %608 = vmatpush.msra.mxu0 %v399
    %609 = vmatpush.msra.mxu0 %v395
    %610 = vmatpush.msra.mxu0 %v391
    %611 = vmatpush.msra.mxu0 %v387
    %612 = vmatmul.f32.gmra.mxu0 %v550
    %v613 = vpop.f32.mrf.mxu0
    %v614 = vadd.f32 0.0, %v613
    %615 = vdwg.mxu0
    %616 = vmatpush.msra.mxu0 %v448
    %617 = vmatpush.msra.mxu0 %v444
    %618 = vmatpush.msra.mxu0 %v440
    %619 = vmatpush.msra.mxu0 %v436
    %620 = vmatpush.msra.mxu0 %v432
    %621 = vmatpush.msra.mxu0 %v428
    %622 = vmatpush.msra.mxu0 %v424
    %623 = vmatpush.msra.mxu0 %v420
    %624 = vmatpush.msra.mxu0 %v416
    %625 = vmatpush.msra.mxu0 %v412
    %626 = vmatpush.msra.mxu0 %v408
    %627 = vmatpush.msra.mxu0 %v404
    %628 = vmatpush.msra.mxu0 %v400
    %629 = vmatpush.msra.mxu0 %v396
    %630 = vmatpush.msra.mxu0 %v392
    %631 = vmatpush.msra.mxu0 %v388
    %632 = vmatmul.f32.gmra.mxu0 %v550
    %v633 = vpop.f32.mrf.mxu0
    %v634 = vadd.f32 0.0, %v633
    %635 = vdwg.mxu0
    %v636 = vadd.f32 %v552, %v574
    %v637 = vadd.f32 %v553, %v594
    %v638 = vadd.f32 %v554, %v614
    %v639 = vadd.f32 %v555, %v634
    %v640 = vmul.f32 %v636, 0.5
    %v641 = vtanh.pop %v640
    %v642 = vmul.f32 %v641, 0.5
    %v643 = vadd.f32 %v642, 0.5
    %v644 = vmul.f32 %v637, 0.5
    %v645 = vtanh.pop %v644
    %v646 = vmul.f32 %v645, 0.5
    %v647 = vadd.f32 %v646, 0.5
    %v648 = vtanh.pop %v638
    %v649 = vmul.f32 %v639, 0.5
    %v650 = vtanh.pop %v649
    %v651 = vmul.f32 %v650, 0.5
    %v652 = vadd.f32 %v651, 0.5
    %v653 = vmul.f32 %v647, %v548
    %v654 = vmul.f32 %v643, %v648
    %v655 = vadd.f32 %v653, %v654
    %v656 = vtanh.pop %v655
    %v657 = vmul.f32 %v652, %v656
    %s658 = scalar_lea.vmem [#allocation4], 64
    %v659 = vld [vmem:[%s658] sm:$0xff]
    %v660 = vld [vmem:[%s658 + $0x8] sm:$0xff]
    %v661 = vld [vmem:[%s658 + $0x10] sm:$0xff]
    %v662 = vld [vmem:[%s658 + $0x18] sm:$0xff]
    %663 = vmatpush.msra.mxu0 %v445
    %664 = vmatpush.msra.mxu0 %v441
    %665 = vmatpush.msra.mxu0 %v437
    %666 = vmatpush.msra.mxu0 %v433
    %667 = vmatpush.msra.mxu0 %v429
    %668 = vmatpush.msra.mxu0 %v425
    %669 = vmatpush.msra.mxu0 %v421
    %670 = vmatpush.msra.mxu0 %v417
    %671 = vmatpush.msra.mxu0 %v413
    %672 = vmatpush.msra.mxu0 %v409
    %673 = vmatpush.msra.mxu0 %v405
    %674 = vmatpush.msra.mxu0 %v401
    %675 = vmatpush.msra.mxu0 %v397
    %676 = vmatpush.msra.mxu0 %v393
    %677 = vmatpush.msra.mxu0 %v389
    %678 = vmatpush.msra.mxu0 %v385
    %679 = vmatmul.f32.gmra.mxu0 %v657
    %v680 = vpop.f32.mrf.mxu0
    %v681 = vadd.f32 0.0, %v680
    %682 = vdwg.mxu0
    %683 = vmatpush.msra.mxu0 %v446
    %684 = vmatpush.msra.mxu0 %v442
    %685 = vmatpush.msra.mxu0 %v438
    %686 = vmatpush.msra.mxu0 %v434
    %687 = vmatpush.msra.mxu0 %v430
    %688 = vmatpush.msra.mxu0 %v426
    %689 = vmatpush.msra.mxu0 %v422
    %690 = vmatpush.msra.mxu0 %v418
    %691 = vmatpush.msra.mxu0 %v414
    %692 = vmatpush.msra.mxu0 %v410
    %693 = vmatpush.msra.mxu0 %v406
    %694 = vmatpush.msra.mxu0 %v402
    %695 = vmatpush.msra.mxu0 %v398
    %696 = vmatpush.msra.mxu0 %v394
    %697 = vmatpush.msra.mxu0 %v390
    %698 = vmatpush.msra.mxu0 %v386
    %699 = vmatmul.f32.gmra.mxu0 %v657
    %v700 = vpop.f32.mrf.mxu0
    %v701 = vadd.f32 0.0, %v700
    %702 = vdwg.mxu0
    %703 = vmatpush.msra.mxu0 %v447
    %704 = vmatpush.msra.mxu0 %v443
    %705 = vmatpush.msra.mxu0 %v439
    %706 = vmatpush.msra.mxu0 %v435
    %707 = vmatpush.msra.mxu0 %v431
    %708 = vmatpush.msra.mxu0 %v427
    %709 = vmatpush.msra.mxu0 %v423
    %710 = vmatpush.msra.mxu0 %v419
    %711 = vmatpush.msra.mxu0 %v415
    %712 = vmatpush.msra.mxu0 %v411
    %713 = vmatpush.msra.mxu0 %v407
    %714 = vmatpush.msra.mxu0 %v403
    %715 = vmatpush.msra.mxu0 %v399
    %716 = vmatpush.msra.mxu0 %v395
    %717 = vmatpush.msra.mxu0 %v391
    %718 = vmatpush.msra.mxu0 %v387
    %719 = vmatmul.f32.gmra.mxu0 %v657
    %v720 = vpop.f32.mrf.mxu0
    %v721 = vadd.f32 0.0, %v720
    %722 = vdwg.mxu0
    %723 = vmatpush.msra.mxu0 %v448
    %724 = vmatpush.msra.mxu0 %v444
    %725 = vmatpush.msra.mxu0 %v440
    %726 = vmatpush.msra.mxu0 %v436
    %727 = vmatpush.msra.mxu0 %v432
    %728 = vmatpush.msra.mxu0 %v428
    %729 = vmatpush.msra.mxu0 %v424
    %730 = vmatpush.msra.mxu0 %v420
    %731 = vmatpush.msra.mxu0 %v416
    %732 = vmatpush.msra.mxu0 %v412
    %733 = vmatpush.msra.mxu0 %v408
    %734 = vmatpush.msra.mxu0 %v404
    %735 = vmatpush.msra.mxu0 %v400
    %736 = vmatpush.msra.mxu0 %v396
    %737 = vmatpush.msra.mxu0 %v392
    %738 = vmatpush.msra.mxu0 %v388
    %739 = vmatmul.f32.gmra.mxu0 %v657
    %v740 = vpop.f32.mrf.mxu0
    %v741 = vadd.f32 0.0, %v740
    %742 = vdwg.mxu0
    %v743 = vadd.f32 %v659, %v681
    %v744 = vadd.f32 %v660, %v701
    %v745 = vadd.f32 %v661, %v721
    %v746 = vadd.f32 %v662, %v741
    %v747 = vmul.f32 %v743, 0.5
    %v748 = vtanh.pop %v747
    %v749 = vmul.f32 %v748, 0.5
    %v750 = vadd.f32 %v749, 0.5
    %v751 = vmul.f32 %v744, 0.5
    %v752 = vtanh.pop %v751
    %v753 = vmul.f32 %v752, 0.5
    %v754 = vadd.f32 %v753, 0.5
    %v755 = vtanh.pop %v745
    %v756 = vmul.f32 %v746, 0.5
    %v757 = vtanh.pop %v756
    %v758 = vmul.f32 %v757, 0.5
    %v759 = vadd.f32 %v758, 0.5
    %v760 = vmul.f32 %v754, %v655
    %v761 = vmul.f32 %v750, %v755
    %v762 = vadd.f32 %v760, %v761
    %v763 = vtanh.pop %v762
    %v764 = vmul.f32 %v759, %v763
    %s765 = scalar_lea.vmem [#allocation4], 96
    %v766 = vld [vmem:[%s765] sm:$0xff]
    %v767 = vld [vmem:[%s765 + $0x8] sm:$0xff]
    %v768 = vld [vmem:[%s765 + $0x10] sm:$0xff]
    %v769 = vld [vmem:[%s765 + $0x18] sm:$0xff]
    %770 = vmatpush.msra.mxu0 %v445
    %771 = vmatpush.msra.mxu0 %v441
    %772 = vmatpush.msra.mxu0 %v437
    %773 = vmatpush.msra.mxu0 %v433
    %774 = vmatpush.msra.mxu0 %v429
    %775 = vmatpush.msra.mxu0 %v425
    %776 = vmatpush.msra.mxu0 %v421
    %777 = vmatpush.msra.mxu0 %v417
    %778 = vmatpush.msra.mxu0 %v413
    %779 = vmatpush.msra.mxu0 %v409
    %780 = vmatpush.msra.mxu0 %v405
    %781 = vmatpush.msra.mxu0 %v401
    %782 = vmatpush.msra.mxu0 %v397
    %783 = vmatpush.msra.mxu0 %v393
    %784 = vmatpush.msra.mxu0 %v389
    %785 = vmatpush.msra.mxu0 %v385
    %786 = vmatmul.f32.gmra.mxu0 %v764
    %v787 = vpop.f32.mrf.mxu0
    %v788 = vadd.f32 0.0, %v787
    %789 = vdwg.mxu0
    %790 = vmatpush.msra.mxu0 %v446
    %791 = vmatpush.msra.mxu0 %v442
    %792 = vmatpush.msra.mxu0 %v438
    %793 = vmatpush.msra.mxu0 %v434
    %794 = vmatpush.msra.mxu0 %v430
    %795 = vmatpush.msra.mxu0 %v426
    %796 = vmatpush.msra.mxu0 %v422
    %797 = vmatpush.msra.mxu0 %v418
    %798 = vmatpush.msra.mxu0 %v414
    %799 = vmatpush.msra.mxu0 %v410
    %800 = vmatpush.msra.mxu0 %v406
    %801 = vmatpush.msra.mxu0 %v402
    %802 = vmatpush.msra.mxu0 %v398
    %803 = vmatpush.msra.mxu0 %v394
    %804 = vmatpush.msra.mxu0 %v390
    %805 = vmatpush.msra.mxu0 %v386
    %806 = vmatmul.f32.gmra.mxu0 %v764
    %v807 = vpop.f32.mrf.mxu0
    %v808 = vadd.f32 0.0, %v807
    %809 = vdwg.mxu0
    %810 = vmatpush.msra.mxu0 %v447
    %811 = vmatpush.msra.mxu0 %v443
    %812 = vmatpush.msra.mxu0 %v439
    %813 = vmatpush.msra.mxu0 %v435
    %814 = vmatpush.msra.mxu0 %v431
    %815 = vmatpush.msra.mxu0 %v427
    %816 = vmatpush.msra.mxu0 %v423
    %817 = vmatpush.msra.mxu0 %v419
    %818 = vmatpush.msra.mxu0 %v415
    %819 = vmatpush.msra.mxu0 %v411
    %820 = vmatpush.msra.mxu0 %v407
    %821 = vmatpush.msra.mxu0 %v403
    %822 = vmatpush.msra.mxu0 %v399
    %823 = vmatpush.msra.mxu0 %v395
    %824 = vmatpush.msra.mxu0 %v391
    %825 = vmatpush.msra.mxu0 %v387
    %826 = vmatmul.f32.gmra.mxu0 %v764
    %v827 = vpop.f32.mrf.mxu0
    %v828 = vadd.f32 0.0, %v827
    %829 = vdwg.mxu0
    %830 = vmatpush.msra.mxu0 %v448
    %831 = vmatpush.msra.mxu0 %v444
    %832 = vmatpush.msra.mxu0 %v440
    %833 = vmatpush.msra.mxu0 %v436
    %834 = vmatpush.msra.mxu0 %v432
    %835 = vmatpush.msra.mxu0 %v428
    %836 = vmatpush.msra.mxu0 %v424
    %837 = vmatpush.msra.mxu0 %v420
    %838 = vmatpush.msra.mxu0 %v416
    %839 = vmatpush.msra.mxu0 %v412
    %840 = vmatpush.msra.mxu0 %v408
    %841 = vmatpush.msra.mxu0 %v404
    %842 = vmatpush.msra.mxu0 %v400
    %843 = vmatpush.msra.mxu0 %v396
    %844 = vmatpush.msra.mxu0 %v392
    %845 = vmatpush.msra.mxu0 %v388
    %846 = vmatmul.f32.gmra.mxu0 %v764
    %v847 = vpop.f32.mrf.mxu0
    %v848 = vadd.f32 0.0, %v847
    %849 = vdwg.mxu0
    %v850 = vadd.f32 %v766, %v788
    %v851 = vadd.f32 %v767, %v808
    %v852 = vadd.f32 %v768, %v828
    %v853 = vadd.f32 %v769, %v848
    %v854 = vmul.f32 %v850, 0.5
    %v855 = vtanh.pop %v854
    %v856 = vmul.f32 %v855, 0.5
    %v857 = vadd.f32 %v856, 0.5
    %v858 = vmul.f32 %v851, 0.5
    %v859 = vtanh.pop %v858
    %v860 = vmul.f32 %v859, 0.5
    %v861 = vadd.f32 %v860, 0.5
    %v862 = vtanh.pop %v852
    %v863 = vmul.f32 %v853, 0.5
    %v864 = vtanh.pop %v863
    %v865 = vmul.f32 %v864, 0.5
    %v866 = vadd.f32 %v865, 0.5
    %v867 = vmul.f32 %v861, %v762
    %v868 = vmul.f32 %v857, %v862
    %v869 = vadd.f32 %v867, %v868
    %v870 = vtanh.pop %v869
    %v871 = vmul.f32 %v866, %v870
    %s872 = scalar_lea.vmem [#allocation4], 128
    %v873 = vld [vmem:[%s872] sm:$0xff]
    %v874 = vld [vmem:[%s872 + $0x8] sm:$0xff]
    %v875 = vld [vmem:[%s872 + $0x10] sm:$0xff]
    %v876 = vld [vmem:[%s872 + $0x18] sm:$0xff]
    %877 = vmatpush.msra.mxu0 %v445
    %878 = vmatpush.msra.mxu0 %v441
    %879 = vmatpush.msra.mxu0 %v437
    %880 = vmatpush.msra.mxu0 %v433
    %881 = vmatpush.msra.mxu0 %v429
    %882 = vmatpush.msra.mxu0 %v425
    %883 = vmatpush.msra.mxu0 %v421
    %884 = vmatpush.msra.mxu0 %v417
    %885 = vmatpush.msra.mxu0 %v413
    %886 = vmatpush.msra.mxu0 %v409
    %887 = vmatpush.msra.mxu0 %v405
    %888 = vmatpush.msra.mxu0 %v401
    %889 = vmatpush.msra.mxu0 %v397
    %890 = vmatpush.msra.mxu0 %v393
    %891 = vmatpush.msra.mxu0 %v389
    %892 = vmatpush.msra.mxu0 %v385
    %893 = vmatmul.f32.gmra.mxu0 %v871
    %v894 = vpop.f32.mrf.mxu0
    %v895 = vadd.f32 0.0, %v894
    %896 = vdwg.mxu0
    %897 = vmatpush.msra.mxu0 %v446
    %898 = vmatpush.msra.mxu0 %v442
    %899 = vmatpush.msra.mxu0 %v438
    %900 = vmatpush.msra.mxu0 %v434
    %901 = vmatpush.msra.mxu0 %v430
    %902 = vmatpush.msra.mxu0 %v426
    %903 = vmatpush.msra.mxu0 %v422
    %904 = vmatpush.msra.mxu0 %v418
    %905 = vmatpush.msra.mxu0 %v414
    %906 = vmatpush.msra.mxu0 %v410
    %907 = vmatpush.msra.mxu0 %v406
    %908 = vmatpush.msra.mxu0 %v402
    %909 = vmatpush.msra.mxu0 %v398
    %910 = vmatpush.msra.mxu0 %v394
    %911 = vmatpush.msra.mxu0 %v390
    %912 = vmatpush.msra.mxu0 %v386
    %913 = vmatmul.f32.gmra.mxu0 %v871
    %v914 = vpop.f32.mrf.mxu0
    %v915 = vadd.f32 0.0, %v914
    %916 = vdwg.mxu0
    %917 = vmatpush.msra.mxu0 %v447
    %918 = vmatpush.msra.mxu0 %v443
    %919 = vmatpush.msra.mxu0 %v439
    %920 = vmatpush.msra.mxu0 %v435
    %921 = vmatpush.msra.mxu0 %v431
    %922 = vmatpush.msra.mxu0 %v427
    %923 = vmatpush.msra.mxu0 %v423
    %924 = vmatpush.msra.mxu0 %v419
    %925 = vmatpush.msra.mxu0 %v415
    %926 = vmatpush.msra.mxu0 %v411
    %927 = vmatpush.msra.mxu0 %v407
    %928 = vmatpush.msra.mxu0 %v403
    %929 = vmatpush.msra.mxu0 %v399
    %930 = vmatpush.msra.mxu0 %v395
    %931 = vmatpush.msra.mxu0 %v391
    %932 = vmatpush.msra.mxu0 %v387
    %933 = vmatmul.f32.gmra.mxu0 %v871
    %v934 = vpop.f32.mrf.mxu0
    %v935 = vadd.f32 0.0, %v934
    %936 = vdwg.mxu0
    %937 = vmatpush.msra.mxu0 %v448
    %938 = vmatpush.msra.mxu0 %v444
    %939 = vmatpush.msra.mxu0 %v440
    %940 = vmatpush.msra.mxu0 %v436
    %941 = vmatpush.msra.mxu0 %v432
    %942 = vmatpush.msra.mxu0 %v428
    %943 = vmatpush.msra.mxu0 %v424
    %944 = vmatpush.msra.mxu0 %v420
    %945 = vmatpush.msra.mxu0 %v416
    %946 = vmatpush.msra.mxu0 %v412
    %947 = vmatpush.msra.mxu0 %v408
    %948 = vmatpush.msra.mxu0 %v404
    %949 = vmatpush.msra.mxu0 %v400
    %950 = vmatpush.msra.mxu0 %v396
    %951 = vmatpush.msra.mxu0 %v392
    %952 = vmatpush.msra.mxu0 %v388
    %953 = vmatmul.f32.gmra.mxu0 %v871
    %v954 = vpop.f32.mrf.mxu0
    %v955 = vadd.f32 0.0, %v954
    %956 = vdwg.mxu0
    %v957 = vadd.f32 %v873, %v895
    %v958 = vadd.f32 %v874, %v915
    %v959 = vadd.f32 %v875, %v935
    %v960 = vadd.f32 %v876, %v955
    %v961 = vmul.f32 %v957, 0.5
    %v962 = vtanh.pop %v961
    %v963 = vmul.f32 %v962, 0.5
    %v964 = vadd.f32 %v963, 0.5
    %v965 = vmul.f32 %v958, 0.5
    %v966 = vtanh.pop %v965
    %v967 = vmul.f32 %v966, 0.5
    %v968 = vadd.f32 %v967, 0.5
    %v969 = vtanh.pop %v959
    %v970 = vmul.f32 %v960, 0.5
    %v971 = vtanh.pop %v970
    %v972 = vmul.f32 %v971, 0.5
    %v973 = vadd.f32 %v972, 0.5
    %v974 = vmul.f32 %v968, %v869
    %v975 = vmul.f32 %v964, %v969
    %v976 = vadd.f32 %v974, %v975
    %v977 = vtanh.pop %v976
    %v978 = vmul.f32 %v973, %v977
    %s979 = scalar_lea.vmem [#allocation4], 160
    %v980 = vld [vmem:[%s979] sm:$0xff]
    %v981 = vld [vmem:[%s979 + $0x8] sm:$0xff]
    %v982 = vld [vmem:[%s979 + $0x10] sm:$0xff]
    %v983 = vld [vmem:[%s979 + $0x18] sm:$0xff]
    %984 = vmatpush.msra.mxu0 %v445
    %985 = vmatpush.msra.mxu0 %v441
    %986 = vmatpush.msra.mxu0 %v437
    %987 = vmatpush.msra.mxu0 %v433
    %988 = vmatpush.msra.mxu0 %v429
    %989 = vmatpush.msra.mxu0 %v425
    %990 = vmatpush.msra.mxu0 %v421
    %991 = vmatpush.msra.mxu0 %v417
    %992 = vmatpush.msra.mxu0 %v413
    %993 = vmatpush.msra.mxu0 %v409
    %994 = vmatpush.msra.mxu0 %v405
    %995 = vmatpush.msra.mxu0 %v401
    %996 = vmatpush.msra.mxu0 %v397
    %997 = vmatpush.msra.mxu0 %v393
    %998 = vmatpush.msra.mxu0 %v389
    %999 = vmatpush.msra.mxu0 %v385
    %1000 = vmatmul.f32.gmra.mxu0 %v978
    %v1001 = vpop.f32.mrf.mxu0
    %v1002 = vadd.f32 0.0, %v1001
    %1003 = vdwg.mxu0
    %1004 = vmatpush.msra.mxu0 %v446
    %1005 = vmatpush.msra.mxu0 %v442
    %1006 = vmatpush.msra.mxu0 %v438
    %1007 = vmatpush.msra.mxu0 %v434
    %1008 = vmatpush.msra.mxu0 %v430
    %1009 = vmatpush.msra.mxu0 %v426
    %1010 = vmatpush.msra.mxu0 %v422
    %1011 = vmatpush.msra.mxu0 %v418
    %1012 = vmatpush.msra.mxu0 %v414
    %1013 = vmatpush.msra.mxu0 %v410
    %1014 = vmatpush.msra.mxu0 %v406
    %1015 = vmatpush.msra.mxu0 %v402
    %1016 = vmatpush.msra.mxu0 %v398
    %1017 = vmatpush.msra.mxu0 %v394
    %1018 = vmatpush.msra.mxu0 %v390
    %1019 = vmatpush.msra.mxu0 %v386
    %1020 = vmatmul.f32.gmra.mxu0 %v978
    %v1021 = vpop.f32.mrf.mxu0
    %v1022 = vadd.f32 0.0, %v1021
    %1023 = vdwg.mxu0
    %1024 = vmatpush.msra.mxu0 %v447
    %1025 = vmatpush.msra.mxu0 %v443
    %1026 = vmatpush.msra.mxu0 %v439
    %1027 = vmatpush.msra.mxu0 %v435
    %1028 = vmatpush.msra.mxu0 %v431
    %1029 = vmatpush.msra.mxu0 %v427
    %1030 = vmatpush.msra.mxu0 %v423
    %1031 = vmatpush.msra.mxu0 %v419
    %1032 = vmatpush.msra.mxu0 %v415
    %1033 = vmatpush.msra.mxu0 %v411
    %1034 = vmatpush.msra.mxu0 %v407
    %1035 = vmatpush.msra.mxu0 %v403
    %1036 = vmatpush.msra.mxu0 %v399
    %1037 = vmatpush.msra.mxu0 %v395
    %1038 = vmatpush.msra.mxu0 %v391
    %1039 = vmatpush.msra.mxu0 %v387
    %1040 = vmatmul.f32.gmra.mxu0 %v978
    %v1041 = vpop.f32.mrf.mxu0
    %v1042 = vadd.f32 0.0, %v1041
    %1043 = vdwg.mxu0
    %1044 = vmatpush.msra.mxu0 %v448
    %1045 = vmatpush.msra.mxu0 %v444
    %1046 = vmatpush.msra.mxu0 %v440
    %1047 = vmatpush.msra.mxu0 %v436
    %1048 = vmatpush.msra.mxu0 %v432
    %1049 = vmatpush.msra.mxu0 %v428
    %1050 = vmatpush.msra.mxu0 %v424
    %1051 = vmatpush.msra.mxu0 %v420
    %1052 = vmatpush.msra.mxu0 %v416
    %1053 = vmatpush.msra.mxu0 %v412
    %1054 = vmatpush.msra.mxu0 %v408
    %1055 = vmatpush.msra.mxu0 %v404
    %1056 = vmatpush.msra.mxu0 %v400
    %1057 = vmatpush.msra.mxu0 %v396
    %1058 = vmatpush.msra.mxu0 %v392
    %1059 = vmatpush.msra.mxu0 %v388
    %1060 = vmatmul.f32.gmra.mxu0 %v978
    %v1061 = vpop.f32.mrf.mxu0
    %v1062 = vadd.f32 0.0, %v1061
    %1063 = vdwg.mxu0
    %v1064 = vadd.f32 %v980, %v1002
    %v1065 = vadd.f32 %v981, %v1022
    %v1066 = vadd.f32 %v982, %v1042
    %v1067 = vadd.f32 %v983, %v1062
    %v1068 = vmul.f32 %v1064, 0.5
    %v1069 = vtanh.pop %v1068
    %v1070 = vmul.f32 %v1069, 0.5
    %v1071 = vadd.f32 %v1070, 0.5
    %v1072 = vmul.f32 %v1065, 0.5
    %v1073 = vtanh.pop %v1072
    %v1074 = vmul.f32 %v1073, 0.5
    %v1075 = vadd.f32 %v1074, 0.5
    %v1076 = vtanh.pop %v1066
    %v1077 = vmul.f32 %v1067, 0.5
    %v1078 = vtanh.pop %v1077
    %v1079 = vmul.f32 %v1078, 0.5
    %v1080 = vadd.f32 %v1079, 0.5
    %v1081 = vmul.f32 %v1075, %v976
    %v1082 = vmul.f32 %v1071, %v1076
    %v1083 = vadd.f32 %v1081, %v1082
    %v1084 = vtanh.pop %v1083
    %v1085 = vmul.f32 %v1080, %v1084
    %s1086 = scalar_lea.vmem [#allocation4], 192
    %v1087 = vld [vmem:[%s1086] sm:$0xff]
    %v1088 = vld [vmem:[%s1086 + $0x8] sm:$0xff]
    %v1089 = vld [vmem:[%s1086 + $0x10] sm:$0xff]
    %v1090 = vld [vmem:[%s1086 + $0x18] sm:$0xff]
    %1091 = vmatpush.msra.mxu0 %v445
    %1092 = vmatpush.msra.mxu0 %v441
    %1093 = vmatpush.msra.mxu0 %v437
    %1094 = vmatpush.msra.mxu0 %v433
    %1095 = vmatpush.msra.mxu0 %v429
    %1096 = vmatpush.msra.mxu0 %v425
    %1097 = vmatpush.msra.mxu0 %v421
    %1098 = vmatpush.msra.mxu0 %v417
    %1099 = vmatpush.msra.mxu0 %v413
    %1100 = vmatpush.msra.mxu0 %v409
    %1101 = vmatpush.msra.mxu0 %v405
    %1102 = vmatpush.msra.mxu0 %v401
    %1103 = vmatpush.msra.mxu0 %v397
    %1104 = vmatpush.msra.mxu0 %v393
    %1105 = vmatpush.msra.mxu0 %v389
    %1106 = vmatpush.msra.mxu0 %v385
    %1107 = vmatmul.f32.gmra.mxu0 %v1085
    %v1108 = vpop.f32.mrf.mxu0
    %v1109 = vadd.f32 0.0, %v1108
    %1110 = vdwg.mxu0
    %1111 = vmatpush.msra.mxu0 %v446
    %1112 = vmatpush.msra.mxu0 %v442
    %1113 = vmatpush.msra.mxu0 %v438
    %1114 = vmatpush.msra.mxu0 %v434
    %1115 = vmatpush.msra.mxu0 %v430
    %1116 = vmatpush.msra.mxu0 %v426
    %1117 = vmatpush.msra.mxu0 %v422
    %1118 = vmatpush.msra.mxu0 %v418
    %1119 = vmatpush.msra.mxu0 %v414
    %1120 = vmatpush.msra.mxu0 %v410
    %1121 = vmatpush.msra.mxu0 %v406
    %1122 = vmatpush.msra.mxu0 %v402
    %1123 = vmatpush.msra.mxu0 %v398
    %1124 = vmatpush.msra.mxu0 %v394
    %1125 = vmatpush.msra.mxu0 %v390
    %1126 = vmatpush.msra.mxu0 %v386
    %1127 = vmatmul.f32.gmra.mxu0 %v1085
    %v1128 = vpop.f32.mrf.mxu0
    %v1129 = vadd.f32 0.0, %v1128
    %1130 = vdwg.mxu0
    %1131 = vmatpush.msra.mxu0 %v447
    %1132 = vmatpush.msra.mxu0 %v443
    %1133 = vmatpush.msra.mxu0 %v439
    %1134 = vmatpush.msra.mxu0 %v435
    %1135 = vmatpush.msra.mxu0 %v431
    %1136 = vmatpush.msra.mxu0 %v427
    %1137 = vmatpush.msra.mxu0 %v423
    %1138 = vmatpush.msra.mxu0 %v419
    %1139 = vmatpush.msra.mxu0 %v415
    %1140 = vmatpush.msra.mxu0 %v411
    %1141 = vmatpush.msra.mxu0 %v407
    %1142 = vmatpush.msra.mxu0 %v403
    %1143 = vmatpush.msra.mxu0 %v399
    %1144 = vmatpush.msra.mxu0 %v395
    %1145 = vmatpush.msra.mxu0 %v391
    %1146 = vmatpush.msra.mxu0 %v387
    %1147 = vmatmul.f32.gmra.mxu0 %v1085
    %v1148 = vpop.f32.mrf.mxu0
    %v1149 = vadd.f32 0.0, %v1148
    %1150 = vdwg.mxu0
    %1151 = vmatpush.msra.mxu0 %v448
    %1152 = vmatpush.msra.mxu0 %v444
    %1153 = vmatpush.msra.mxu0 %v440
    %1154 = vmatpush.msra.mxu0 %v436
    %1155 = vmatpush.msra.mxu0 %v432
    %1156 = vmatpush.msra.mxu0 %v428
    %1157 = vmatpush.msra.mxu0 %v424
    %1158 = vmatpush.msra.mxu0 %v420
    %1159 = vmatpush.msra.mxu0 %v416
    %1160 = vmatpush.msra.mxu0 %v412
    %1161 = vmatpush.msra.mxu0 %v408
    %1162 = vmatpush.msra.mxu0 %v404
    %1163 = vmatpush.msra.mxu0 %v400
    %1164 = vmatpush.msra.mxu0 %v396
    %1165 = vmatpush.msra.mxu0 %v392
    %1166 = vmatpush.msra.mxu0 %v388
    %1167 = vmatmul.f32.gmra.mxu0 %v1085
    %v1168 = vpop.f32.mrf.mxu0
    %v1169 = vadd.f32 0.0, %v1168
    %1170 = vdwg.mxu0
    %v1171 = vadd.f32 %v1087, %v1109
    %v1172 = vadd.f32 %v1088, %v1129
    %v1173 = vadd.f32 %v1089, %v1149
    %v1174 = vadd.f32 %v1090, %v1169
    %v1175 = vmul.f32 %v1171, 0.5
    %v1176 = vtanh.pop %v1175
    %v1177 = vmul.f32 %v1176, 0.5
    %v1178 = vadd.f32 %v1177, 0.5
    %v1179 = vmul.f32 %v1172, 0.5
    %v1180 = vtanh.pop %v1179
    %v1181 = vmul.f32 %v1180, 0.5
    %v1182 = vadd.f32 %v1181, 0.5
    %v1183 = vtanh.pop %v1173
    %v1184 = vmul.f32 %v1174, 0.5
    %v1185 = vtanh.pop %v1184
    %v1186 = vmul.f32 %v1185, 0.5
    %v1187 = vadd.f32 %v1186, 0.5
    %v1188 = vmul.f32 %v1182, %v1083
    %v1189 = vmul.f32 %v1178, %v1183
    %v1190 = vadd.f32 %v1188, %v1189
    %v1191 = vtanh.pop %v1190
    %v1192 = vmul.f32 %v1187, %v1191
    %s1193 = scalar_lea.vmem [#allocation4], 224
    %v1194 = vld [vmem:[%s1193] sm:$0xff]
    %v1195 = vld [vmem:[%s1193 + $0x8] sm:$0xff]
    %v1196 = vld [vmem:[%s1193 + $0x10] sm:$0xff]
    %v1197 = vld [vmem:[%s1193 + $0x18] sm:$0xff]
    %1198 = vmatpush.msra.mxu0 %v445
    %1199 = vmatpush.msra.mxu0 %v441
    %1200 = vmatpush.msra.mxu0 %v437
    %1201 = vmatpush.msra.mxu0 %v433
    %1202 = vmatpush.msra.mxu0 %v429
    %1203 = vmatpush.msra.mxu0 %v425
    %1204 = vmatpush.msra.mxu0 %v421
    %1205 = vmatpush.msra.mxu0 %v417
    %1206 = vmatpush.msra.mxu0 %v413
    %1207 = vmatpush.msra.mxu0 %v409
    %1208 = vmatpush.msra.mxu0 %v405
    %1209 = vmatpush.msra.mxu0 %v401
    %1210 = vmatpush.msra.mxu0 %v397
    %1211 = vmatpush.msra.mxu0 %v393
    %1212 = vmatpush.msra.mxu0 %v389
    %1213 = vmatpush.msra.mxu0 %v385
    %1214 = vmatmul.f32.gmra.mxu0 %v1192
    %v1215 = vpop.f32.mrf.mxu0
    %v1216 = vadd.f32 0.0, %v1215
    %1217 = vdwg.mxu0
    %1218 = vmatpush.msra.mxu0 %v446
    %1219 = vmatpush.msra.mxu0 %v442
    %1220 = vmatpush.msra.mxu0 %v438
    %1221 = vmatpush.msra.mxu0 %v434
    %1222 = vmatpush.msra.mxu0 %v430
    %1223 = vmatpush.msra.mxu0 %v426
    %1224 = vmatpush.msra.mxu0 %v422
    %1225 = vmatpush.msra.mxu0 %v418
    %1226 = vmatpush.msra.mxu0 %v414
    %1227 = vmatpush.msra.mxu0 %v410
    %1228 = vmatpush.msra.mxu0 %v406
    %1229 = vmatpush.msra.mxu0 %v402
    %1230 = vmatpush.msra.mxu0 %v398
    %1231 = vmatpush.msra.mxu0 %v394
    %1232 = vmatpush.msra.mxu0 %v390
    %1233 = vmatpush.msra.mxu0 %v386
    %1234 = vmatmul.f32.gmra.mxu0 %v1192
    %v1235 = vpop.f32.mrf.mxu0
    %v1236 = vadd.f32 0.0, %v1235
    %1237 = vdwg.mxu0
    %1238 = vmatpush.msra.mxu0 %v447
    %1239 = vmatpush.msra.mxu0 %v443
    %1240 = vmatpush.msra.mxu0 %v439
    %1241 = vmatpush.msra.mxu0 %v435
    %1242 = vmatpush.msra.mxu0 %v431
    %1243 = vmatpush.msra.mxu0 %v427
    %1244 = vmatpush.msra.mxu0 %v423
    %1245 = vmatpush.msra.mxu0 %v419
    %1246 = vmatpush.msra.mxu0 %v415
    %1247 = vmatpush.msra.mxu0 %v411
    %1248 = vmatpush.msra.mxu0 %v407
    %1249 = vmatpush.msra.mxu0 %v403
    %1250 = vmatpush.msra.mxu0 %v399
    %1251 = vmatpush.msra.mxu0 %v395
    %1252 = vmatpush.msra.mxu0 %v391
    %1253 = vmatpush.msra.mxu0 %v387
    %1254 = vmatmul.f32.gmra.mxu0 %v1192
    %v1255 = vpop.f32.mrf.mxu0
    %v1256 = vadd.f32 0.0, %v1255
    %1257 = vdwg.mxu0
    %1258 = vmatpush.msra.mxu0 %v448
    %1259 = vmatpush.msra.mxu0 %v444
    %1260 = vmatpush.msra.mxu0 %v440
    %1261 = vmatpush.msra.mxu0 %v436
    %1262 = vmatpush.msra.mxu0 %v432
    %1263 = vmatpush.msra.mxu0 %v428
    %1264 = vmatpush.msra.mxu0 %v424
    %1265 = vmatpush.msra.mxu0 %v420
    %1266 = vmatpush.msra.mxu0 %v416
    %1267 = vmatpush.msra.mxu0 %v412
    %1268 = vmatpush.msra.mxu0 %v408
    %1269 = vmatpush.msra.mxu0 %v404
    %1270 = vmatpush.msra.mxu0 %v400
    %1271 = vmatpush.msra.mxu0 %v396
    %1272 = vmatpush.msra.mxu0 %v392
    %1273 = vmatpush.msra.mxu0 %v388
    %1274 = vmatmul.f32.gmra.mxu0 %v1192
    %v1275 = vpop.f32.mrf.mxu0
    %v1276 = vadd.f32 0.0, %v1275
    %1277 = vdwg.mxu0
    %v1278 = vadd.f32 %v1194, %v1216
    %v1279 = vadd.f32 %v1195, %v1236
    %v1280 = vadd.f32 %v1196, %v1256
    %v1281 = vadd.f32 %v1197, %v1276
    %v1282 = vmul.f32 %v1278, 0.5
    %v1283 = vtanh.pop %v1282
    %v1284 = vmul.f32 %v1283, 0.5
    %v1285 = vadd.f32 %v1284, 0.5
    %v1286 = vmul.f32 %v1279, 0.5
    %v1287 = vtanh.pop %v1286
    %v1288 = vmul.f32 %v1287, 0.5
    %v1289 = vadd.f32 %v1288, 0.5
    %v1290 = vtanh.pop %v1280
    %v1291 = vmul.f32 %v1281, 0.5
    %v1292 = vtanh.pop %v1291
    %v1293 = vmul.f32 %v1292, 0.5
    %v1294 = vadd.f32 %v1293, 0.5
    %v1295 = vmul.f32 %v1289, %v1190
    %v1296 = vmul.f32 %v1285, %v1290
    %v1297 = vadd.f32 %v1295, %v1296
    %v1298 = vtanh.pop %v1297
    %v1299 = vmul.f32 %v1294, %v1298
    %1300 = vst [vmem:[#allocation2] sm:$0xff] %v1299
    %1301 = vst [vmem:[#allocation3] sm:$0xff] %v1297
    // Predicated region
    $region62: #{tpu_custom_call.1} parent=1 // pred_check
      %p1302 = pneg %p124
    $region63: #{tpu_custom_call.1} parent=1 // pred_check_branch
      %1304 = sbr.rel (%p1302) target = $region65
    $region64: #{tpu_custom_call.1} parent=1 // pred_region
      %1305 = vst [vmem:[#allocation17] sm:$0xff] %v1299
      %1306 = vst [vmem:[#allocation19] sm:$0xff] %v1297
      %v1307 = vld [vmem:[#allocation14] sm:$0xff]
      %v1308 = vld [vmem:[#allocation14 + $0x8] sm:$0xff]
      %v1309 = vld [vmem:[#allocation14 + $0x10] sm:$0xff]
      %v1310 = vld [vmem:[#allocation14 + $0x18] sm:$0xff]
      %v1311 = vld [vmem:[#allocation14 + $0x20] sm:$0xff]
      %v1312 = vld [vmem:[#allocation14 + $0x28] sm:$0xff]
      %v1313 = vld [vmem:[#allocation14 + $0x30] sm:$0xff]
      %v1314 = vld [vmem:[#allocation14 + $0x38] sm:$0xff]
      %v1315 = vld [vmem:[#allocation14 + $0x40] sm:$0xff]
      %v1316 = vld [vmem:[#allocation14 + $0x48] sm:$0xff]
      %v1317 = vld [vmem:[#allocation14 + $0x50] sm:$0xff]
      %v1318 = vld [vmem:[#allocation14 + $0x58] sm:$0xff]
      %v1319 = vld [vmem:[#allocation14 + $0x60] sm:$0xff]
      %v1320 = vld [vmem:[#allocation14 + $0x68] sm:$0xff]
      %v1321 = vld [vmem:[#allocation14 + $0x70] sm:$0xff]
      %v1322 = vld [vmem:[#allocation14 + $0x78] sm:$0xff]
      %v1323 = vld [vmem:[%s7] sm:$0x1]
      %v1325 = vperm.slane %v1323, 0
      %1327 = vmatpush.msra.mxu0 %v1322
      %1328 = vmatpush.msra.mxu0 %v1321
      %1329 = vmatpush.msra.mxu0 %v1320
      %1330 = vmatpush.msra.mxu0 %v1319
      %1331 = vmatpush.msra.mxu0 %v1318
      %1332 = vmatpush.msra.mxu0 %v1317
      %1333 = vmatpush.msra.mxu0 %v1316
      %1334 = vmatpush.msra.mxu0 %v1315
      %1335 = vmatpush.msra.mxu0 %v1314
      %1336 = vmatpush.msra.mxu0 %v1313
      %1337 = vmatpush.msra.mxu0 %v1312
      %1338 = vmatpush.msra.mxu0 %v1311
      %1339 = vmatpush.msra.mxu0 %v1310
      %1340 = vmatpush.msra.mxu0 %v1309
      %1341 = vmatpush.msra.mxu0 %v1308
      %1342 = vmatpush.msra.mxu0 %v1307
      %1343 = vmatmul.f32.gmra.mxu0 %v1299
      %v1344 = vpop.f32.mrf.mxu0
      %v1345 = vadd.f32 %v1325, %v1344
      %1346 = vdwg.mxu0
      %1347 = vst [vmem:[#allocation16] sm:$0xff] %v1345
    $region65: #{tpu_custom_call.1} parent=1 // pred_fallthru
      _
    // Predicated region
    $region66: #{tpu_custom_call.1} parent=1 // pred_check
      _
    $region67: #{tpu_custom_call.1} parent=1 // pred_check_branch
      %1349 = sbr.rel (0) target = $region69
    $region68: #{tpu_custom_call.1} parent=1 // pred_region
      %1351 = vsyncadd [#allocation7], 0
      %s1353 = sshll.u32 [#allocation16], 4
      %s1354 = int_to_ptr.vmem [resolvable:$true] %s1353
      %s1355 = sshll.u32 %s8, 4
      %s1356 = int_to_ptr.hbm [resolvable:$true] %s1355
      %1358 = dma.vmem_to_hbm [thread:$0]  %s1354, 128, %s1356, [#allocation7]
    $region69: #{tpu_custom_call.1} parent=1 // pred_fallthru
      _
    // Predicated region
    $region70: #{tpu_custom_call.1} parent=1 // pred_check
      _
    $region71: #{tpu_custom_call.1} parent=1 // pred_check_branch
      %1360 = sbr.rel (0) target = $region73
    $region72: #{tpu_custom_call.1} parent=1 // pred_region
      %1362 = vsyncadd [#allocation18], 0
      %s1364 = sshll.u32 [#allocation17], 4
      %s1365 = int_to_ptr.vmem [resolvable:$true] %s1364
      %s1366 = sshll.u32 %s9, 4
      %s1367 = int_to_ptr.hbm [resolvable:$true] %s1366
      %1369 = dma.vmem_to_hbm [thread:$0]  %s1365, 128, %s1367, [#allocation18]
    $region73: #{tpu_custom_call.1} parent=1 // pred_fallthru
      _
    // Predicated region
    $region74: #{tpu_custom_call.1} parent=1 // pred_check
      _
    $region75: #{tpu_custom_call.1} parent=1 // pred_check_branch
      %1371 = sbr.rel (0) target = $region77
    $region76: #{tpu_custom_call.1} parent=1 // pred_region
      %1373 = vsyncadd [#allocation18], 0
      %s1375 = sshll.u32 [#allocation19], 4
      %s1376 = int_to_ptr.vmem [resolvable:$true] %s1375
      %s1377 = sshll.u32 %s10, 4
      %s1378 = int_to_ptr.hbm [resolvable:$true] %s1377
      %1380 = dma.vmem_to_hbm [thread:$0]  %s1376, 128, %s1378, [#allocation18]
    $region77: #{tpu_custom_call.1} parent=1 // pred_fallthru
      _
    // Predicated region
    $region78: #{tpu_custom_call.1} parent=1 // pred_check
      _
    $region79: #{tpu_custom_call.1} parent=1 // pred_check_branch
      %1382 = sbr.rel (0) target = $region81
    $region80: #{tpu_custom_call.1} parent=1 // pred_region
      %1384 = dma.done [#allocation7], 128
    $region81: #{tpu_custom_call.1} parent=1 // pred_fallthru
      _
    // Predicated region
    $region82: #{tpu_custom_call.1} parent=1 // pred_check
      _
    $region83: #{tpu_custom_call.1} parent=1 // pred_check_branch
      %1386 = sbr.rel (0) target = $region85
    $region84: #{tpu_custom_call.1} parent=1 // pred_region
      %1388 = dma.done [#allocation18], 128
    $region85: #{tpu_custom_call.1} parent=1 // pred_fallthru
      _
    // Predicated region
    $region86: #{tpu_custom_call.1} parent=1 // pred_check
      _
    $region87: #{tpu_custom_call.1} parent=1 // pred_check_branch
      %1390 = sbr.rel (0) target = $region89
    $region88: #{tpu_custom_call.1} parent=1 // pred_region
      %1392 = dma.done [#allocation18], 128
    $region89: #{tpu_custom_call.1} parent=1 // pred_fallthru
      _
    %1393 = vsyncpa [#allocation6], 1
    %1394 = vsyncpa [#allocation9], 1
    %1395 = vsyncpa [#allocation12], 1
    %1396 = vsyncpa [#allocation15], 1
    %1397 = vsyncpa [#allocation7], 1
    %1398 = vsyncpa [#allocation18], 1

// kernel: tpu_custom_call.1
$region0: #{tpu_custom_call.1}
  #allocation0 [shape = 'u32[]', space=smem, size = 0x4, offset = 0x4, fixed_abs, tag = 'smem constant byte address 0x4 - core index']
  #allocation1 [shape = 'u32[72,128]{1,0:T(1,128)}', space=vmem, size = 0x9000, scoped, tag = 'internal scratch']
  #allocation2 [shape = 'f32[8,128]{1,0:T(8,128)}', space=vmem, size = 0x1000, scoped, tag = 'scratch operand']
  #allocation3 [shape = 'f32[8,128]{1,0:T(8,128)}', space=vmem, size = 0x1000, scoped, tag = 'scratch operand']
  #allocation4 [shape = 'f32[8,8,512]{2,1,0:T(8,128)}', space=vmem, size = 0x20000, scoped, tag = 'scratch operand']
  %s0 = inlined_call_operand.hbm [shape: f32[8,8,16], index: 0, kind: input, shape index: {}]
  %s1 = inlined_call_operand.hbm [shape: f32[8,128], index: 1, kind: input, shape index: {}]
  %s2 = inlined_call_operand.hbm [shape: f32[8,128], index: 2, kind: input, shape index: {}]
  %s3 = inlined_call_operand.hbm [shape: f32[16,512], index: 3, kind: input, shape index: {}]
  %s4 = inlined_call_operand.hbm [shape: f32[128,512], index: 4, kind: input, shape index: {}]
  %s5 = inlined_call_operand.vmem [shape: f32[1,512], index: 5, kind: input, shape index: {}]
  %s6 = inlined_call_operand.hbm [shape: f32[128,128], index: 6, kind: input, shape index: {}]
  %s7 = inlined_call_operand.vmem [shape: f32[1,128], index: 7, kind: input, shape index: {}]
  %s8 = inlined_call_operand.hbm [shape: f32[8,128], index: 8, kind: output, shape index: {0}]
  %s9 = inlined_call_operand.hbm [shape: f32[8,128], index: 9, kind: output, shape index: {1}]
  %s10 = inlined_call_operand.hbm [shape: f32[8,128], index: 10, kind: output, shape index: {2}]
  %11 = xla_tuple %s8, %s9, %s10
  %s12 = sld [smem:[#allocation0]]
  $region90: #{tpu_custom_call.1} parent=0
    _
  %s14 = ssub.s32 1, %s12
  %s15 = scalar_select 0, %s14, %s12
  $region1: #{tpu_custom_call.1} parent=0
    #allocation5 [shape = 'u8[32768]{0}', space=vmem, size = 0x8000, scoped, tag = 'input window, operand 0, single buffered']
    #allocation6 [shape = 's32[1]{0}', space=sflag, size = 0x4, scoped, tag = 'scoped memory for tpu_custom_call.1']
    #allocation7 [shape = 's32[1]{0}', space=sflag, size = 0x4, scoped, tag = 'scoped memory for tpu_custom_call.1']
    #allocation8 [shape = 'u8[4096]{0}', space=vmem, size = 0x1000, scoped, tag = 'input window, operand 1, single buffered']
    #allocation9 [shape = 's32[1]{0}', space=sflag, size = 0x4, scoped, tag = 'scoped memory for tpu_custom_call.1']
    #allocation10 [shape = 'u8[4096]{0}', space=vmem, size = 0x1000, scoped, tag = 'input window, operand 2, single buffered']
    #allocation11 [shape = 'u8[32768]{0}', space=vmem, size = 0x8000, scoped, tag = 'input window, operand 3, single buffered']
    #allocation12 [shape = 's32[1]{0}', space=sflag, size = 0x4, scoped, tag = 'scoped memory for tpu_custom_call.1']
    #allocation13 [shape = 'u8[262144]{0}', space=vmem, size = 0x40000, scoped, tag = 'input window, operand 4, single buffered']
    #allocation14 [shape = 'u8[65536]{0}', space=vmem, size = 0x10000, scoped, tag = 'input window, operand 6, single buffered']
    #allocation15 [shape = 's32[1]{0}', space=sflag, size = 0x4, scoped, tag = 'scoped memory for tpu_custom_call.1']
    #allocation16 [shape = 'u8[4096]{0}', space=vmem, size = 0x1000, scoped, tag = 'output window, operand 0, single buffered']
    #allocation17 [shape = 'u8[4096]{0}', space=vmem, size = 0x1000, scoped, tag = 'output window, operand 1, single buffered']
    #allocation18 [shape = 's32[1]{0}', space=sflag, size = 0x4, scoped, tag = 'scoped memory for tpu_custom_call.1']
    #allocation19 [shape = 'u8[4096]{0}', space=vmem, size = 0x1000, scoped, tag = 'output window, operand 2, single buffered']
    %16 = vsyncpa [#allocation6], 0
    %17 = vsyncpa [#allocation9], 0
    %18 = vsyncpa [#allocation12], 0
    %19 = vsyncpa [#allocation15], 0
    %20 = vsyncpa [#allocation7], 0
    %21 = vsyncpa [#allocation18], 0
    // Predicated region
    $region2: #{tpu_custom_call.1} parent=1 // pred_check
      _
    $region3: #{tpu_custom_call.1} parent=1 // pred_check_branch
      %23 = sbr.rel (0) target = $region5
    $region4: #{tpu_custom_call.1} parent=1 // pred_region
      %25 = vsyncadd [#allocation6], 0
      %s26 = sshll.u32 %s0, 4
      %s27 = int_to_ptr.hbm [resolvable:$true] %s26
      %s28 = sshll.u32 [#allocation5], 4
      %s29 = int_to_ptr.vmem [resolvable:$true] %s28
      %34 = dma.hbm_to_vmem [thread:$0]  %s27, 1024, %s29, [#allocation6], 128, 128, 8
    $region5: #{tpu_custom_call.1} parent=1 // pred_fallthru
      _
    // Predicated region
    $region6: #{tpu_custom_call.1} parent=1 // pred_check
      _
    $region7: #{tpu_custom_call.1} parent=1 // pred_check_branch
      %36 = sbr.rel (0) target = $region9
    $region8: #{tpu_custom_call.1} parent=1 // pred_region
      %38 = vsyncadd [#allocation9], 0
      %s40 = sshll.u32 %s1, 4
      %s41 = int_to_ptr.hbm [resolvable:$true] %s40
      %s42 = sshll.u32 [#allocation8], 4
      %s43 = int_to_ptr.vmem [resolvable:$true] %s42
      %45 = dma.hbm_to_vmem [thread:$0]  %s41, 128, %s43, [#allocation9]
    $region9: #{tpu_custom_call.1} parent=1 // pred_fallthru
      _
    // Predicated region
    $region10: #{tpu_custom_call.1} parent=1 // pred_check
      _
    $region11: #{tpu_custom_call.1} parent=1 // pred_check_branch
      %47 = sbr.rel (0) target = $region13
    $region12: #{tpu_custom_call.1} parent=1 // pred_region
      %49 = vsyncadd [#allocation9], 0
      %s51 = sshll.u32 %s2, 4
      %s52 = int_to_ptr.hbm [resolvable:$true] %s51
      %s53 = sshll.u32 [#allocation10], 4
      %s54 = int_to_ptr.vmem [resolvable:$true] %s53
      %56 = dma.hbm_to_vmem [thread:$0]  %s52, 128, %s54, [#allocation9]
    $region13: #{tpu_custom_call.1} parent=1 // pred_fallthru
      _
    // Predicated region
    $region14: #{tpu_custom_call.1} parent=1 // pred_check
      _
    $region15: #{tpu_custom_call.1} parent=1 // pred_check_branch
      %58 = sbr.rel (0) target = $region17
    $region16: #{tpu_custom_call.1} parent=1 // pred_region
      %60 = vsyncadd [#allocation12], 0
      %s61 = sshll.u32 %s3, 4
      %s62 = int_to_ptr.hbm [resolvable:$true] %s61
      %s63 = sshll.u32 [#allocation11], 4
      %s64 = int_to_ptr.vmem [resolvable:$true] %s63
      %69 = dma.hbm_to_vmem [thread:$0]  %s62, 1024, %s64, [#allocation12], 512, 512, 32
    $region17: #{tpu_custom_call.1} parent=1 // pred_fallthru
      _
    // Predicated region
    $region18: #{tpu_custom_call.1} parent=1 // pred_check
      _
    $region19: #{tpu_custom_call.1} parent=1 // pred_check_branch
      %71 = sbr.rel (0) target = $region21
    $region20: #{tpu_custom_call.1} parent=1 // pred_region
      %73 = vsyncadd [#allocation12], 0
      %s74 = sshll.u32 %s4, 4
      %s75 = int_to_ptr.hbm [resolvable:$true] %s74
      %s76 = sshll.u32 [#allocation13], 4
      %s77 = int_to_ptr.vmem [resolvable:$true] %s76
      %82 = dma.hbm_to_vmem [thread:$0]  %s75, 8192, %s77, [#allocation12], 512, 512, 32
    $region21: #{tpu_custom_call.1} parent=1 // pred_fallthru
      _
    // Predicated region
    $region22: #{tpu_custom_call.1} parent=1 // pred_check
      _
    $region23: #{tpu_custom_call.1} parent=1 // pred_check_branch
      %84 = sbr.rel (0) target = $region25
    $region24: #{tpu_custom_call.1} parent=1 // pred_region
      _
    $region25: #{tpu_custom_call.1} parent=1 // pred_fallthru
      _
    // Predicated region
    $region26: #{tpu_custom_call.1} parent=1 // pred_check
      _
    $region27: #{tpu_custom_call.1} parent=1 // pred_check_branch
      %86 = sbr.rel (0) target = $region29
    $region28: #{tpu_custom_call.1} parent=1 // pred_region
      %88 = vsyncadd [#allocation15], 0
      %s89 = sshll.u32 %s6, 4
      %s90 = int_to_ptr.hbm [resolvable:$true] %s89
      %s91 = sshll.u32 [#allocation14], 4
      %s92 = int_to_ptr.vmem [resolvable:$true] %s91
      %97 = dma.hbm_to_vmem [thread:$0]  %s90, 2048, %s92, [#allocation15], 128, 128, 8
    $region29: #{tpu_custom_call.1} parent=1 // pred_fallthru
      _
    // Predicated region
    $region30: #{tpu_custom_call.1} parent=1 // pred_check
      _
    $region31: #{tpu_custom_call.1} parent=1 // pred_check_branch
      %99 = sbr.rel (0) target = $region33
    $region32: #{tpu_custom_call.1} parent=1 // pred_region
      _
    $region33: #{tpu_custom_call.1} parent=1 // pred_fallthru
      _
    // Predicated region
    $region34: #{tpu_custom_call.1} parent=1 // pred_check
      _
    $region35: #{tpu_custom_call.1} parent=1 // pred_check_branch
      %101 = sbr.rel (0) target = $region37
    $region36: #{tpu_custom_call.1} parent=1 // pred_region
      %103 = dma.done [#allocation6], 1024
    $region37: #{tpu_custom_call.1} parent=1 // pred_fallthru
      _
    // Predicated region
    $region38: #{tpu_custom_call.1} parent=1 // pred_check
      _
    $region39: #{tpu_custom_call.1} parent=1 // pred_check_branch
      %105 = sbr.rel (0) target = $region41
    $region40: #{tpu_custom_call.1} parent=1 // pred_region
      %107 = dma.done [#allocation9], 128
    $region41: #{tpu_custom_call.1} parent=1 // pred_fallthru
      _
    // Predicated region
    $region42: #{tpu_custom_call.1} parent=1 // pred_check
      _
    $region43: #{tpu_custom_call.1} parent=1 // pred_check_branch
      %109 = sbr.rel (0) target = $region45
    $region44: #{tpu_custom_call.1} parent=1 // pred_region
      %111 = dma.done [#allocation9], 128
    $region45: #{tpu_custom_call.1} parent=1 // pred_fallthru
      _
    // Predicated region
    $region46: #{tpu_custom_call.1} parent=1 // pred_check
      _
    $region47: #{tpu_custom_call.1} parent=1 // pred_check_branch
      %113 = sbr.rel (0) target = $region49
    $region48: #{tpu_custom_call.1} parent=1 // pred_region
      %115 = dma.done [#allocation12], 1024
    $region49: #{tpu_custom_call.1} parent=1 // pred_fallthru
      _
    // Predicated region
    $region50: #{tpu_custom_call.1} parent=1 // pred_check
      _
    $region51: #{tpu_custom_call.1} parent=1 // pred_check_branch
      %117 = sbr.rel (0) target = $region53
    $region52: #{tpu_custom_call.1} parent=1 // pred_region
      %119 = dma.done [#allocation12], 8192
    $region53: #{tpu_custom_call.1} parent=1 // pred_fallthru
      _
    // Predicated region
    $region54: #{tpu_custom_call.1} parent=1 // pred_check
      _
    $region55: #{tpu_custom_call.1} parent=1 // pred_check_branch
      %121 = sbr.rel (0) target = $region57
    $region56: #{tpu_custom_call.1} parent=1 // pred_region
      %123 = dma.done [#allocation15], 2048
    $region57: #{tpu_custom_call.1} parent=1 // pred_fallthru
      _
    %p124 = scmp.eq.s32.totalorder 0, 0
    // Predicated region
    $region58: #{tpu_custom_call.1} parent=1 // pred_check
      %p125 = pneg %p124
    $region59: #{tpu_custom_call.1} parent=1 // pred_check_branch
      %127 = sbr.rel (%p125) target = $region61
    $region60: #{tpu_custom_call.1} parent=1 // pred_region
      %v128 = vld [vmem:[#allocation8] sm:$0xff]
      %129 = vst [vmem:[#allocation2] sm:$0xff] %v128
      %v130 = vld [vmem:[#allocation10] sm:$0xff]
      %131 = vst [vmem:[#allocation3] sm:$0xff] %v130
    $region61: #{tpu_custom_call.1} parent=1 // pred_fallthru
      _
    %v132 = vld [vmem:[#allocation5] sm:$0xff]
    %v133 = vld [vmem:[#allocation5 + $0x8] sm:$0xff]
    %v134 = vld [vmem:[#allocation5 + $0x10] sm:$0xff]
    %v135 = vld [vmem:[#allocation5 + $0x18] sm:$0xff]
    %v136 = vld [vmem:[#allocation5 + $0x20] sm:$0xff]
    %v137 = vld [vmem:[#allocation5 + $0x28] sm:$0xff]
    %v138 = vld [vmem:[#allocation5 + $0x30] sm:$0xff]
    %v139 = vld [vmem:[#allocation5 + $0x38] sm:$0xff]
    %v140 = vld [vmem:[#allocation11] sm:$0xff]
    %v141 = vld [vmem:[#allocation11 + $0x8] sm:$0xff]
    %v142 = vld [vmem:[#allocation11 + $0x10] sm:$0xff]
    %v143 = vld [vmem:[#allocation11 + $0x18] sm:$0xff]
    %v144 = vld [vmem:[#allocation11 + $0x20] sm:$0xff]
    %v145 = vld [vmem:[#allocation11 + $0x28] sm:$0xff]
    %v146 = vld [vmem:[#allocation11 + $0x30] sm:$0xff]
    %v147 = vld [vmem:[#allocation11 + $0x38] sm:$0xff]
    %v148 = vld [vmem:[%s5] sm:$0xf]
    %v150 = vperm.slane %v148, 0
    %v151 = vperm.slane %v148, 1
    %v152 = vperm.slane %v148, 2
    %v153 = vperm.slane %v148, 3
    %vm158 = vcmask 130048
    %v160 = vsel %vm158, %v132, 0
    %v163 = vsel %vm158, %v133, 0
    %v166 = vsel %vm158, %v134, 0
    %v169 = vsel %vm158, %v135, 0
    %v172 = vsel %vm158, %v136, 0
    %v175 = vsel %vm158, %v137, 0
    %v178 = vsel %vm158, %v138, 0
    %v181 = vsel %vm158, %v139, 0
    %183 = vmatpush.msra.mxu0 0.0
    %184 = vmatpush.msra.mxu0 0.0
    %185 = vmatpush.msra.mxu0 0.0
    %186 = vmatpush.msra.mxu0 0.0
    %187 = vmatpush.msra.mxu0 0.0
    %188 = vmatpush.msra.mxu0 0.0
    %189 = vmatpush.msra.mxu0 0.0
    %190 = vmatpush.msra.mxu0 0.0
    %191 = vmatpush.msra.mxu0 0.0
    %192 = vmatpush.msra.mxu0 0.0
    %193 = vmatpush.msra.mxu0 0.0
    %194 = vmatpush.msra.mxu0 0.0
    %195 = vmatpush.msra.mxu0 0.0
    %196 = vmatpush.msra.mxu0 0.0
    %197 = vmatpush.msra.mxu0 %v144
    %198 = vmatpush.msra.mxu0 %v140
    %199 = vmatmul.f32.gmra.mxu0 %v160
    %v200 = vpop.f32.mrf.mxu0
    %v201 = vadd.f32 %v150, %v200
    %202 = vmatmul.f32.gmra.mxu0 %v163
    %v203 = vpop.f32.mrf.mxu0
    %v204 = vadd.f32 %v150, %v203
    %205 = vmatmul.f32.gmra.mxu0 %v166
    %v206 = vpop.f32.mrf.mxu0
    %v207 = vadd.f32 %v150, %v206
    %208 = vmatmul.f32.gmra.mxu0 %v169
    %v209 = vpop.f32.mrf.mxu0
    %v210 = vadd.f32 %v150, %v209
    %211 = vmatmul.f32.gmra.mxu0 %v172
    %v212 = vpop.f32.mrf.mxu0
    %v213 = vadd.f32 %v150, %v212
    %214 = vmatmul.f32.gmra.mxu0 %v175
    %v215 = vpop.f32.mrf.mxu0
    %v216 = vadd.f32 %v150, %v215
    %217 = vmatmul.f32.gmra.mxu0 %v178
    %v218 = vpop.f32.mrf.mxu0
    %v219 = vadd.f32 %v150, %v218
    %220 = vmatmul.f32.gmra.mxu0 %v181
    %v221 = vpop.f32.mrf.mxu0
    %v222 = vadd.f32 %v150, %v221
    %223 = vdwg.mxu0
    %224 = vmatpush.msra.mxu0 0.0
    %225 = vmatpush.msra.mxu0 0.0
    %226 = vmatpush.msra.mxu0 0.0
    %227 = vmatpush.msra.mxu0 0.0
    %228 = vmatpush.msra.mxu0 0.0
    %229 = vmatpush.msra.mxu0 0.0
    %230 = vmatpush.msra.mxu0 0.0
    %231 = vmatpush.msra.mxu0 0.0
    %232 = vmatpush.msra.mxu0 0.0
    %233 = vmatpush.msra.mxu0 0.0
    %234 = vmatpush.msra.mxu0 0.0
    %235 = vmatpush.msra.mxu0 0.0
    %236 = vmatpush.msra.mxu0 0.0
    %237 = vmatpush.msra.mxu0 0.0
    %238 = vmatpush.msra.mxu0 %v145
    %239 = vmatpush.msra.mxu0 %v141
    %240 = vmatmul.f32.gmra.mxu0 %v160
    %v241 = vpop.f32.mrf.mxu0
    %v242 = vadd.f32 %v151, %v241
    %243 = vmatmul.f32.gmra.mxu0 %v163
    %v244 = vpop.f32.mrf.mxu0
    %v245 = vadd.f32 %v151, %v244
    %246 = vmatmul.f32.gmra.mxu0 %v166
    %v247 = vpop.f32.mrf.mxu0
    %v248 = vadd.f32 %v151, %v247
    %249 = vmatmul.f32.gmra.mxu0 %v169
    %v250 = vpop.f32.mrf.mxu0
    %v251 = vadd.f32 %v151, %v250
    %252 = vmatmul.f32.gmra.mxu0 %v172
    %v253 = vpop.f32.mrf.mxu0
    %v254 = vadd.f32 %v151, %v253
    %255 = vmatmul.f32.gmra.mxu0 %v175
    %v256 = vpop.f32.mrf.mxu0
    %v257 = vadd.f32 %v151, %v256
    %258 = vmatmul.f32.gmra.mxu0 %v178
    %v259 = vpop.f32.mrf.mxu0
    %v260 = vadd.f32 %v151, %v259
    %261 = vmatmul.f32.gmra.mxu0 %v181
    %v262 = vpop.f32.mrf.mxu0
    %v263 = vadd.f32 %v151, %v262
    %264 = vdwg.mxu0
    %265 = vmatpush.msra.mxu0 0.0
    %266 = vmatpush.msra.mxu0 0.0
    %267 = vmatpush.msra.mxu0 0.0
    %268 = vmatpush.msra.mxu0 0.0
    %269 = vmatpush.msra.mxu0 0.0
    %270 = vmatpush.msra.mxu0 0.0
    %271 = vmatpush.msra.mxu0 0.0
    %272 = vmatpush.msra.mxu0 0.0
    %273 = vmatpush.msra.mxu0 0.0
    %274 = vmatpush.msra.mxu0 0.0
    %275 = vmatpush.msra.mxu0 0.0
    %276 = vmatpush.msra.mxu0 0.0
    %277 = vmatpush.msra.mxu0 0.0
    %278 = vmatpush.msra.mxu0 0.0
    %279 = vmatpush.msra.mxu0 %v146
    %280 = vmatpush.msra.mxu0 %v142
    %281 = vmatmul.f32.gmra.mxu0 %v160
    %v282 = vpop.f32.mrf.mxu0
    %v283 = vadd.f32 %v152, %v282
    %284 = vmatmul.f32.gmra.mxu0 %v163
    %v285 = vpop.f32.mrf.mxu0
    %v286 = vadd.f32 %v152, %v285
    %287 = vmatmul.f32.gmra.mxu0 %v166
    %v288 = vpop.f32.mrf.mxu0
    %v289 = vadd.f32 %v152, %v288
    %290 = vmatmul.f32.gmra.mxu0 %v169
    %v291 = vpop.f32.mrf.mxu0
    %v292 = vadd.f32 %v152, %v291
    %293 = vmatmul.f32.gmra.mxu0 %v172
    %v294 = vpop.f32.mrf.mxu0
    %v295 = vadd.f32 %v152, %v294
    %296 = vmatmul.f32.gmra.mxu0 %v175
    %v297 = vpop.f32.mrf.mxu0
    %v298 = vadd.f32 %v152, %v297
    %299 = vmatmul.f32.gmra.mxu0 %v178
    %v300 = vpop.f32.mrf.mxu0
    %v301 = vadd.f32 %v152, %v300
    %302 = vmatmul.f32.gmra.mxu0 %v181
    %v303 = vpop.f32.mrf.mxu0
    %v304 = vadd.f32 %v152, %v303
    %305 = vdwg.mxu0
    %306 = vmatpush.msra.mxu0 0.0
    %307 = vmatpush.msra.mxu0 0.0
    %308 = vmatpush.msra.mxu0 0.0
    %309 = vmatpush.msra.mxu0 0.0
    %310 = vmatpush.msra.mxu0 0.0
    %311 = vmatpush.msra.mxu0 0.0
    %312 = vmatpush.msra.mxu0 0.0
    %313 = vmatpush.msra.mxu0 0.0
    %314 = vmatpush.msra.mxu0 0.0
    %315 = vmatpush.msra.mxu0 0.0
    %316 = vmatpush.msra.mxu0 0.0
    %317 = vmatpush.msra.mxu0 0.0
    %318 = vmatpush.msra.mxu0 0.0
    %319 = vmatpush.msra.mxu0 0.0
    %320 = vmatpush.msra.mxu0 %v147
    %321 = vmatpush.msra.mxu0 %v143
    %322 = vmatmul.f32.gmra.mxu0 %v160
    %v323 = vpop.f32.mrf.mxu0
    %v324 = vadd.f32 %v153, %v323
    %325 = vmatmul.f32.gmra.mxu0 %v163
    %v326 = vpop.f32.mrf.mxu0
    %v327 = vadd.f32 %v153, %v326
    %328 = vmatmul.f32.gmra.mxu0 %v166
    %v329 = vpop.f32.mrf.mxu0
    %v330 = vadd.f32 %v153, %v329
    %331 = vmatmul.f32.gmra.mxu0 %v169
    %v332 = vpop.f32.mrf.mxu0
    %v333 = vadd.f32 %v153, %v332
    %334 = vmatmul.f32.gmra.mxu0 %v172
    %v335 = vpop.f32.mrf.mxu0
    %v336 = vadd.f32 %v153, %v335
    %337 = vmatmul.f32.gmra.mxu0 %v175
    %v338 = vpop.f32.mrf.mxu0
    %v339 = vadd.f32 %v153, %v338
    %340 = vmatmul.f32.gmra.mxu0 %v178
    %v341 = vpop.f32.mrf.mxu0
    %v342 = vadd.f32 %v153, %v341
    %343 = vmatmul.f32.gmra.mxu0 %v181
    %v344 = vpop.f32.mrf.mxu0
    %v345 = vadd.f32 %v153, %v344
    %346 = vdwg.mxu0
    %347 = vst [vmem:[#allocation4] sm:$0xff] %v201
    %348 = vst [vmem:[#allocation4 + $0x8] sm:$0xff] %v242
    %349 = vst [vmem:[#allocation4 + $0x10] sm:$0xff] %v283
    %350 = vst [vmem:[#allocation4 + $0x18] sm:$0xff] %v324
    %351 = vst [vmem:[#allocation4 + $0x20] sm:$0xff] %v204
    %352 = vst [vmem:[#allocation4 + $0x28] sm:$0xff] %v245
    %353 = vst [vmem:[#allocation4 + $0x30] sm:$0xff] %v286
    %354 = vst [vmem:[#allocation4 + $0x38] sm:$0xff] %v327
    %355 = vst [vmem:[#allocation4 + $0x40] sm:$0xff] %v207
    %356 = vst [vmem:[#allocation4 + $0x48] sm:$0xff] %v248
    %357 = vst [vmem:[#allocation4 + $0x50] sm:$0xff] %v289
    %358 = vst [vmem:[#allocation4 + $0x58] sm:$0xff] %v330
    %359 = vst [vmem:[#allocation4 + $0x60] sm:$0xff] %v210
    %360 = vst [vmem:[#allocation4 + $0x68] sm:$0xff] %v251
    %361 = vst [vmem:[#allocation4 + $0x70] sm:$0xff] %v292
    %362 = vst [vmem:[#allocation4 + $0x78] sm:$0xff] %v333
    %363 = vst [vmem:[#allocation4 + $0x80] sm:$0xff] %v213
    %364 = vst [vmem:[#allocation4 + $0x88] sm:$0xff] %v254
    %365 = vst [vmem:[#allocation4 + $0x90] sm:$0xff] %v295
    %366 = vst [vmem:[#allocation4 + $0x98] sm:$0xff] %v336
    %367 = vst [vmem:[#allocation4 + $0xa0] sm:$0xff] %v216
    %368 = vst [vmem:[#allocation4 + $0xa8] sm:$0xff] %v257
    %369 = vst [vmem:[#allocation4 + $0xb0] sm:$0xff] %v298
    %370 = vst [vmem:[#allocation4 + $0xb8] sm:$0xff] %v339
    %371 = vst [vmem:[#allocation4 + $0xc0] sm:$0xff] %v219
    %372 = vst [vmem:[#allocation4 + $0xc8] sm:$0xff] %v260
    %373 = vst [vmem:[#allocation4 + $0xd0] sm:$0xff] %v301
    %374 = vst [vmem:[#allocation4 + $0xd8] sm:$0xff] %v342
    %375 = vst [vmem:[#allocation4 + $0xe0] sm:$0xff] %v222
    %376 = vst [vmem:[#allocation4 + $0xe8] sm:$0xff] %v263
    %377 = vst [vmem:[#allocation4 + $0xf0] sm:$0xff] %v304
    %378 = vst [vmem:[#allocation4 + $0xf8] sm:$0xff] %v345
    %v379 = vld [vmem:[#allocation2] sm:$0xff]
    %v380 = vld [vmem:[#allocation3] sm:$0xff]
    %v381 = vld [vmem:[#allocation4] sm:$0xff]
    %v382 = vld [vmem:[#allocation4 + $0x8] sm:$0xff]
    %v383 = vld [vmem:[#allocation4 + $0x10] sm:$0xff]
    %v384 = vld [vmem:[#allocation4 + $0x18] sm:$0xff]
    %v385 = vld [vmem:[#allocation13] sm:$0xff]
    %v386 = vld [vmem:[#allocation13 + $0x8] sm:$0xff]
    %v387 = vld [vmem:[#allocation13 + $0x10] sm:$0xff]
    %v388 = vld [vmem:[#allocation13 + $0x18] sm:$0xff]
    %v389 = vld [vmem:[#allocation13 + $0x20] sm:$0xff]
    %v390 = vld [vmem:[#allocation13 + $0x28] sm:$0xff]
    %v391 = vld [vmem:[#allocation13 + $0x30] sm:$0xff]
    %v392 = vld [vmem:[#allocation13 + $0x38] sm:$0xff]
    %v393 = vld [vmem:[#allocation13 + $0x40] sm:$0xff]
    %v394 = vld [vmem:[#allocation13 + $0x48] sm:$0xff]
    %v395 = vld [vmem:[#allocation13 + $0x50] sm:$0xff]
    %v396 = vld [vmem:[#allocation13 + $0x58] sm:$0xff]
    %v397 = vld [vmem:[#allocation13 + $0x60] sm:$0xff]
    %v398 = vld [vmem:[#allocation13 + $0x68] sm:$0xff]
    %v399 = vld [vmem:[#allocation13 + $0x70] sm:$0xff]
    %v400 = vld [vmem:[#allocation13 + $0x78] sm:$0xff]
    %v401 = vld [vmem:[#allocation13 + $0x80] sm:$0xff]
    %v402 = vld [vmem:[#allocation13 + $0x88] sm:$0xff]
    %v403 = vld [vmem:[#allocation13 + $0x90] sm:$0xff]
    %v404 = vld [vmem:[#allocation13 + $0x98] sm:$0xff]
    %v405 = vld [vmem:[#allocation13 + $0xa0] sm:$0xff]
    %v406 = vld [vmem:[#allocation13 + $0xa8] sm:$0xff]
    %v407 = vld [vmem:[#allocation13 + $0xb0] sm:$0xff]
    %v408 = vld [vmem:[#allocation13 + $0xb8] sm:$0xff]
    %v409 = vld [vmem:[#allocation13 + $0xc0] sm:$0xff]
    %v410 = vld [vmem:[#allocation13 + $0xc8] sm:$0xff]
    %v411 = vld [vmem:[#allocation13 + $0xd0] sm:$0xff]
    %v412 = vld [vmem:[#allocation13 + $0xd8] sm:$0xff]
    %v413 = vld [vmem:[#allocation13 + $0xe0] sm:$0xff]
    %v414 = vld [vmem:[#allocation13 + $0xe8] sm:$0xff]
    %v415 = vld [vmem:[#allocation13 + $0xf0] sm:$0xff]
    %v416 = vld [vmem:[#allocation13 + $0xf8] sm:$0xff]
    %v417 = vld [vmem:[#allocation13 + $0x100] sm:$0xff]
    %v418 = vld [vmem:[#allocation13 + $0x108] sm:$0xff]
    %v419 = vld [vmem:[#allocation13 + $0x110] sm:$0xff]
    %v420 = vld [vmem:[#allocation13 + $0x118] sm:$0xff]
    %v421 = vld [vmem:[#allocation13 + $0x120] sm:$0xff]
    %v422 = vld [vmem:[#allocation13 + $0x128] sm:$0xff]
    %v423 = vld [vmem:[#allocation13 + $0x130] sm:$0xff]
    %v424 = vld [vmem:[#allocation13 + $0x138] sm:$0xff]
    %v425 = vld [vmem:[#allocation13 + $0x140] sm:$0xff]
    %v426 = vld [vmem:[#allocation13 + $0x148] sm:$0xff]
    %v427 = vld [vmem:[#allocation13 + $0x150] sm:$0xff]
    %v428 = vld [vmem:[#allocation13 + $0x158] sm:$0xff]
    %v429 = vld [vmem:[#allocation13 + $0x160] sm:$0xff]
    %v430 = vld [vmem:[#allocation13 + $0x168] sm:$0xff]
    %v431 = vld [vmem:[#allocation13 + $0x170] sm:$0xff]
    %v432 = vld [vmem:[#allocation13 + $0x178] sm:$0xff]
    %v433 = vld [vmem:[#allocation13 + $0x180] sm:$0xff]
    %v434 = vld [vmem:[#allocation13 + $0x188] sm:$0xff]
    %v435 = vld [vmem:[#allocation13 + $0x190] sm:$0xff]
    %v436 = vld [vmem:[#allocation13 + $0x198] sm:$0xff]
    %v437 = vld [vmem:[#allocation13 + $0x1a0] sm:$0xff]
    %v438 = vld [vmem:[#allocation13 + $0x1a8] sm:$0xff]
    %v439 = vld [vmem:[#allocation13 + $0x1b0] sm:$0xff]
    %v440 = vld [vmem:[#allocation13 + $0x1b8] sm:$0xff]
    %v441 = vld [vmem:[#allocation13 + $0x1c0] sm:$0xff]
    %v442 = vld [vmem:[#allocation13 + $0x1c8] sm:$0xff]
    %v443 = vld [vmem:[#allocation13 + $0x1d0] sm:$0xff]
    %v444 = vld [vmem:[#allocation13 + $0x1d8] sm:$0xff]
    %v445 = vld [vmem:[#allocation13 + $0x1e0] sm:$0xff]
    %v446 = vld [vmem:[#allocation13 + $0x1e8] sm:$0xff]
    %v447 = vld [vmem:[#allocation13 + $0x1f0] sm:$0xff]
    %v448 = vld [vmem:[#allocation13 + $0x1f8] sm:$0xff]
    %449 = vmatpush.msra.mxu0 %v445
    %450 = vmatpush.msra.mxu0 %v441
    %451 = vmatpush.msra.mxu0 %v437
    %452 = vmatpush.msra.mxu0 %v433
    %453 = vmatpush.msra.mxu0 %v429
    %454 = vmatpush.msra.mxu0 %v425
    %455 = vmatpush.msra.mxu0 %v421
    %456 = vmatpush.msra.mxu0 %v417
    %457 = vmatpush.msra.mxu0 %v413
    %458 = vmatpush.msra.mxu0 %v409
    %459 = vmatpush.msra.mxu0 %v405
    %460 = vmatpush.msra.mxu0 %v401
    %461 = vmatpush.msra.mxu0 %v397
    %462 = vmatpush.msra.mxu0 %v393
    %463 = vmatpush.msra.mxu0 %v389
    %464 = vmatpush.msra.mxu0 %v385
    %465 = vmatmul.f32.gmra.mxu0 %v379
    %v466 = vpop.f32.mrf.mxu0
    %v467 = vadd.f32 0.0, %v466
    %468 = vdwg.mxu0
    %469 = vmatpush.msra.mxu0 %v446
    %470 = vmatpush.msra.mxu0 %v442
    %471 = vmatpush.msra.mxu0 %v438
    %472 = vmatpush.msra.mxu0 %v434
    %473 = vmatpush.msra.mxu0 %v430
    %474 = vmatpush.msra.mxu0 %v426
    %475 = vmatpush.msra.mxu0 %v422
    %476 = vmatpush.msra.mxu0 %v418
    %477 = vmatpush.msra.mxu0 %v414
    %478 = vmatpush.msra.mxu0 %v410
    %479 = vmatpush.msra.mxu0 %v406
    %480 = vmatpush.msra.mxu0 %v402
    %481 = vmatpush.msra.mxu0 %v398
    %482 = vmatpush.msra.mxu0 %v394
    %483 = vmatpush.msra.mxu0 %v390
    %484 = vmatpush.msra.mxu0 %v386
    %485 = vmatmul.f32.gmra.mxu0 %v379
    %v486 = vpop.f32.mrf.mxu0
    %v487 = vadd.f32 0.0, %v486
    %488 = vdwg.mxu0
    %489 = vmatpush.msra.mxu0 %v447
    %490 = vmatpush.msra.mxu0 %v443
    %491 = vmatpush.msra.mxu0 %v439
    %492 = vmatpush.msra.mxu0 %v435
    %493 = vmatpush.msra.mxu0 %v431
    %494 = vmatpush.msra.mxu0 %v427
    %495 = vmatpush.msra.mxu0 %v423
    %496 = vmatpush.msra.mxu0 %v419
    %497 = vmatpush.msra.mxu0 %v415
    %498 = vmatpush.msra.mxu0 %v411
    %499 = vmatpush.msra.mxu0 %v407
    %500 = vmatpush.msra.mxu0 %v403
    %501 = vmatpush.msra.mxu0 %v399
    %502 = vmatpush.msra.mxu0 %v395
    %503 = vmatpush.msra.mxu0 %v391
    %504 = vmatpush.msra.mxu0 %v387
    %505 = vmatmul.f32.gmra.mxu0 %v379
    %v506 = vpop.f32.mrf.mxu0
    %v507 = vadd.f32 0.0, %v506
    %508 = vdwg.mxu0
    %509 = vmatpush.msra.mxu0 %v448
    %510 = vmatpush.msra.mxu0 %v444
    %511 = vmatpush.msra.mxu0 %v440
    %512 = vmatpush.msra.mxu0 %v436
    %513 = vmatpush.msra.mxu0 %v432
    %514 = vmatpush.msra.mxu0 %v428
    %515 = vmatpush.msra.mxu0 %v424
    %516 = vmatpush.msra.mxu0 %v420
    %517 = vmatpush.msra.mxu0 %v416
    %518 = vmatpush.msra.mxu0 %v412
    %519 = vmatpush.msra.mxu0 %v408
    %520 = vmatpush.msra.mxu0 %v404
    %521 = vmatpush.msra.mxu0 %v400
    %522 = vmatpush.msra.mxu0 %v396
    %523 = vmatpush.msra.mxu0 %v392
    %524 = vmatpush.msra.mxu0 %v388
    %525 = vmatmul.f32.gmra.mxu0 %v379
    %v526 = vpop.f32.mrf.mxu0
    %v527 = vadd.f32 0.0, %v526
    %528 = vdwg.mxu0
    %v529 = vadd.f32 %v381, %v467
    %v530 = vadd.f32 %v382, %v487
    %v531 = vadd.f32 %v383, %v507
    %v532 = vadd.f32 %v384, %v527
    %v533 = vmul.f32 %v529, 0.5
    %v534 = vtanh.pop %v533
    %v535 = vmul.f32 %v534, 0.5
    %v536 = vadd.f32 %v535, 0.5
    %v537 = vmul.f32 %v530, 0.5
    %v538 = vtanh.pop %v537
    %v539 = vmul.f32 %v538, 0.5
    %v540 = vadd.f32 %v539, 0.5
    %v541 = vtanh.pop %v531
    %v542 = vmul.f32 %v532, 0.5
    %v543 = vtanh.pop %v542
    %v544 = vmul.f32 %v543, 0.5
    %v545 = vadd.f32 %v544, 0.5
    %v546 = vmul.f32 %v540, %v380
    %v547 = vmul.f32 %v536, %v541
    %v548 = vadd.f32 %v546, %v547
    %v549 = vtanh.pop %v548
    %v550 = vmul.f32 %v545, %v549
    %s551 = scalar_lea.vmem [#allocation4], 32
    %v552 = vld [vmem:[%s551] sm:$0xff]
    %v553 = vld [vmem:[%s551 + $0x8] sm:$0xff]
    %v554 = vld [vmem:[%s551 + $0x10] sm:$0xff]
    %v555 = vld [vmem:[%s551 + $0x18] sm:$0xff]
    %556 = vmatpush.msra.mxu0 %v445
    %557 = vmatpush.msra.mxu0 %v441
    %558 = vmatpush.msra.mxu0 %v437
    %559 = vmatpush.msra.mxu0 %v433
    %560 = vmatpush.msra.mxu0 %v429
    %561 = vmatpush.msra.mxu0 %v425
    %562 = vmatpush.msra.mxu0 %v421
    %563 = vmatpush.msra.mxu0 %v417
    %564 = vmatpush.msra.mxu0 %v413
    %565 = vmatpush.msra.mxu0 %v409
    %566 = vmatpush.msra.mxu0 %v405
    %567 = vmatpush.msra.mxu0 %v401
    %568 = vmatpush.msra.mxu0 %v397
    %569 = vmatpush.msra.mxu0 %v393
    %570 = vmatpush.msra.mxu0 %v389
    %571 = vmatpush.msra.mxu0 %v385
    %572 = vmatmul.f32.gmra.mxu0 %v550
    %v573 = vpop.f32.mrf.mxu0
    %v574 = vadd.f32 0.0, %v573
    %575 = vdwg.mxu0
    %576 = vmatpush.msra.mxu0 %v446
    %577 = vmatpush.msra.mxu0 %v442
    %578 = vmatpush.msra.mxu0 %v438
    %579 = vmatpush.msra.mxu0 %v434
    %580 = vmatpush.msra.mxu0 %v430
    %581 = vmatpush.msra.mxu0 %v426
    %582 = vmatpush.msra.mxu0 %v422
    %583 = vmatpush.msra.mxu0 %v418
    %584 = vmatpush.msra.mxu0 %v414
    %585 = vmatpush.msra.mxu0 %v410
    %586 = vmatpush.msra.mxu0 %v406
    %587 = vmatpush.msra.mxu0 %v402
    %588 = vmatpush.msra.mxu0 %v398
    %589 = vmatpush.msra.mxu0 %v394
    %590 = vmatpush.msra.mxu0 %v390
    %591 = vmatpush.msra.mxu0 %v386
    %592 = vmatmul.f32.gmra.mxu0 %v550
    %v593 = vpop.f32.mrf.mxu0
    %v594 = vadd.f32 0.0, %v593
    %595 = vdwg.mxu0
    %596 = vmatpush.msra.mxu0 %v447
    %597 = vmatpush.msra.mxu0 %v443
    %598 = vmatpush.msra.mxu0 %v439
    %599 = vmatpush.msra.mxu0 %v435
    %600 = vmatpush.msra.mxu0 %v431
    %601 = vmatpush.msra.mxu0 %v427
    %602 = vmatpush.msra.mxu0 %v423
    %603 = vmatpush.msra.mxu0 %v419
    %604 = vmatpush.msra.mxu0 %v415
    %605 = vmatpush.msra.mxu0 %v411
    %606 = vmatpush.msra.mxu0 %v407
    %607 = vmatpush.msra.mxu0 %v403
    %608 = vmatpush.msra.mxu0 %v399
    %609 = vmatpush.msra.mxu0 %v395
    %610 = vmatpush.msra.mxu0 %v391
    %611 = vmatpush.msra.mxu0 %v387
    %612 = vmatmul.f32.gmra.mxu0 %v550
    %v613 = vpop.f32.mrf.mxu0
    %v614 = vadd.f32 0.0, %v613
    %615 = vdwg.mxu0
    %616 = vmatpush.msra.mxu0 %v448
    %617 = vmatpush.msra.mxu0 %v444
    %618 = vmatpush.msra.mxu0 %v440
    %619 = vmatpush.msra.mxu0 %v436
    %620 = vmatpush.msra.mxu0 %v432
    %621 = vmatpush.msra.mxu0 %v428
    %622 = vmatpush.msra.mxu0 %v424
    %623 = vmatpush.msra.mxu0 %v420
    %624 = vmatpush.msra.mxu0 %v416
    %625 = vmatpush.msra.mxu0 %v412
    %626 = vmatpush.msra.mxu0 %v408
    %627 = vmatpush.msra.mxu0 %v404
    %628 = vmatpush.msra.mxu0 %v400
    %629 = vmatpush.msra.mxu0 %v396
    %630 = vmatpush.msra.mxu0 %v392
    %631 = vmatpush.msra.mxu0 %v388
    %632 = vmatmul.f32.gmra.mxu0 %v550
    %v633 = vpop.f32.mrf.mxu0
    %v634 = vadd.f32 0.0, %v633
    %635 = vdwg.mxu0
    %v636 = vadd.f32 %v552, %v574
    %v637 = vadd.f32 %v553, %v594
    %v638 = vadd.f32 %v554, %v614
    %v639 = vadd.f32 %v555, %v634
    %v640 = vmul.f32 %v636, 0.5
    %v641 = vtanh.pop %v640
    %v642 = vmul.f32 %v641, 0.5
    %v643 = vadd.f32 %v642, 0.5
    %v644 = vmul.f32 %v637, 0.5
    %v645 = vtanh.pop %v644
    %v646 = vmul.f32 %v645, 0.5
    %v647 = vadd.f32 %v646, 0.5
    %v648 = vtanh.pop %v638
    %v649 = vmul.f32 %v639, 0.5
    %v650 = vtanh.pop %v649
    %v651 = vmul.f32 %v650, 0.5
    %v652 = vadd.f32 %v651, 0.5
    %v653 = vmul.f32 %v647, %v548
    %v654 = vmul.f32 %v643, %v648
    %v655 = vadd.f32 %v653, %v654
    %v656 = vtanh.pop %v655
    %v657 = vmul.f32 %v652, %v656
    %s658 = scalar_lea.vmem [#allocation4], 64
    %v659 = vld [vmem:[%s658] sm:$0xff]
    %v660 = vld [vmem:[%s658 + $0x8] sm:$0xff]
    %v661 = vld [vmem:[%s658 + $0x10] sm:$0xff]
    %v662 = vld [vmem:[%s658 + $0x18] sm:$0xff]
    %663 = vmatpush.msra.mxu0 %v445
    %664 = vmatpush.msra.mxu0 %v441
    %665 = vmatpush.msra.mxu0 %v437
    %666 = vmatpush.msra.mxu0 %v433
    %667 = vmatpush.msra.mxu0 %v429
    %668 = vmatpush.msra.mxu0 %v425
    %669 = vmatpush.msra.mxu0 %v421
    %670 = vmatpush.msra.mxu0 %v417
    %671 = vmatpush.msra.mxu0 %v413
    %672 = vmatpush.msra.mxu0 %v409
    %673 = vmatpush.msra.mxu0 %v405
    %674 = vmatpush.msra.mxu0 %v401
    %675 = vmatpush.msra.mxu0 %v397
    %676 = vmatpush.msra.mxu0 %v393
    %677 = vmatpush.msra.mxu0 %v389
    %678 = vmatpush.msra.mxu0 %v385
    %679 = vmatmul.f32.gmra.mxu0 %v657
    %v680 = vpop.f32.mrf.mxu0
    %v681 = vadd.f32 0.0, %v680
    %682 = vdwg.mxu0
    %683 = vmatpush.msra.mxu0 %v446
    %684 = vmatpush.msra.mxu0 %v442
    %685 = vmatpush.msra.mxu0 %v438
    %686 = vmatpush.msra.mxu0 %v434
    %687 = vmatpush.msra.mxu0 %v430
    %688 = vmatpush.msra.mxu0 %v426
    %689 = vmatpush.msra.mxu0 %v422
    %690 = vmatpush.msra.mxu0 %v418
    %691 = vmatpush.msra.mxu0 %v414
    %692 = vmatpush.msra.mxu0 %v410
    %693 = vmatpush.msra.mxu0 %v406
    %694 = vmatpush.msra.mxu0 %v402
    %695 = vmatpush.msra.mxu0 %v398
    %696 = vmatpush.msra.mxu0 %v394
    %697 = vmatpush.msra.mxu0 %v390
    %698 = vmatpush.msra.mxu0 %v386
    %699 = vmatmul.f32.gmra.mxu0 %v657
    %v700 = vpop.f32.mrf.mxu0
    %v701 = vadd.f32 0.0, %v700
    %702 = vdwg.mxu0
    %703 = vmatpush.msra.mxu0 %v447
    %704 = vmatpush.msra.mxu0 %v443
    %705 = vmatpush.msra.mxu0 %v439
    %706 = vmatpush.msra.mxu0 %v435
    %707 = vmatpush.msra.mxu0 %v431
    %708 = vmatpush.msra.mxu0 %v427
    %709 = vmatpush.msra.mxu0 %v423
    %710 = vmatpush.msra.mxu0 %v419
    %711 = vmatpush.msra.mxu0 %v415
    %712 = vmatpush.msra.mxu0 %v411
    %713 = vmatpush.msra.mxu0 %v407
    %714 = vmatpush.msra.mxu0 %v403
    %715 = vmatpush.msra.mxu0 %v399
    %716 = vmatpush.msra.mxu0 %v395
    %717 = vmatpush.msra.mxu0 %v391
    %718 = vmatpush.msra.mxu0 %v387
    %719 = vmatmul.f32.gmra.mxu0 %v657
    %v720 = vpop.f32.mrf.mxu0
    %v721 = vadd.f32 0.0, %v720
    %722 = vdwg.mxu0
    %723 = vmatpush.msra.mxu0 %v448
    %724 = vmatpush.msra.mxu0 %v444
    %725 = vmatpush.msra.mxu0 %v440
    %726 = vmatpush.msra.mxu0 %v436
    %727 = vmatpush.msra.mxu0 %v432
    %728 = vmatpush.msra.mxu0 %v428
    %729 = vmatpush.msra.mxu0 %v424
    %730 = vmatpush.msra.mxu0 %v420
    %731 = vmatpush.msra.mxu0 %v416
    %732 = vmatpush.msra.mxu0 %v412
    %733 = vmatpush.msra.mxu0 %v408
    %734 = vmatpush.msra.mxu0 %v404
    %735 = vmatpush.msra.mxu0 %v400
    %736 = vmatpush.msra.mxu0 %v396
    %737 = vmatpush.msra.mxu0 %v392
    %738 = vmatpush.msra.mxu0 %v388
    %739 = vmatmul.f32.gmra.mxu0 %v657
    %v740 = vpop.f32.mrf.mxu0
    %v741 = vadd.f32 0.0, %v740
    %742 = vdwg.mxu0
    %v743 = vadd.f32 %v659, %v681
    %v744 = vadd.f32 %v660, %v701
    %v745 = vadd.f32 %v661, %v721
    %v746 = vadd.f32 %v662, %v741
    %v747 = vmul.f32 %v743, 0.5
    %v748 = vtanh.pop %v747
    %v749 = vmul.f32 %v748, 0.5
    %v750 = vadd.f32 %v749, 0.5
    %v751 = vmul.f32 %v744, 0.5
    %v752 = vtanh.pop %v751
    %v753 = vmul.f32 %v752, 0.5
    %v754 = vadd.f32 %v753, 0.5
    %v755 = vtanh.pop %v745
    %v756 = vmul.f32 %v746, 0.5
    %v757 = vtanh.pop %v756
    %v758 = vmul.f32 %v757, 0.5
    %v759 = vadd.f32 %v758, 0.5
    %v760 = vmul.f32 %v754, %v655
    %v761 = vmul.f32 %v750, %v755
    %v762 = vadd.f32 %v760, %v761
    %v763 = vtanh.pop %v762
    %v764 = vmul.f32 %v759, %v763
    %s765 = scalar_lea.vmem [#allocation4], 96
    %v766 = vld [vmem:[%s765] sm:$0xff]
    %v767 = vld [vmem:[%s765 + $0x8] sm:$0xff]
    %v768 = vld [vmem:[%s765 + $0x10] sm:$0xff]
    %v769 = vld [vmem:[%s765 + $0x18] sm:$0xff]
    %770 = vmatpush.msra.mxu0 %v445
    %771 = vmatpush.msra.mxu0 %v441
    %772 = vmatpush.msra.mxu0 %v437
    %773 = vmatpush.msra.mxu0 %v433
    %774 = vmatpush.msra.mxu0 %v429
    %775 = vmatpush.msra.mxu0 %v425
    %776 = vmatpush.msra.mxu0 %v421
    %777 = vmatpush.msra.mxu0 %v417
    %778 = vmatpush.msra.mxu0 %v413
    %779 = vmatpush.msra.mxu0 %v409
    %780 = vmatpush.msra.mxu0 %v405
    %781 = vmatpush.msra.mxu0 %v401
    %782 = vmatpush.msra.mxu0 %v397
    %783 = vmatpush.msra.mxu0 %v393
    %784 = vmatpush.msra.mxu0 %v389
    %785 = vmatpush.msra.mxu0 %v385
    %786 = vmatmul.f32.gmra.mxu0 %v764
    %v787 = vpop.f32.mrf.mxu0
    %v788 = vadd.f32 0.0, %v787
    %789 = vdwg.mxu0
    %790 = vmatpush.msra.mxu0 %v446
    %791 = vmatpush.msra.mxu0 %v442
    %792 = vmatpush.msra.mxu0 %v438
    %793 = vmatpush.msra.mxu0 %v434
    %794 = vmatpush.msra.mxu0 %v430
    %795 = vmatpush.msra.mxu0 %v426
    %796 = vmatpush.msra.mxu0 %v422
    %797 = vmatpush.msra.mxu0 %v418
    %798 = vmatpush.msra.mxu0 %v414
    %799 = vmatpush.msra.mxu0 %v410
    %800 = vmatpush.msra.mxu0 %v406
    %801 = vmatpush.msra.mxu0 %v402
    %802 = vmatpush.msra.mxu0 %v398
    %803 = vmatpush.msra.mxu0 %v394
    %804 = vmatpush.msra.mxu0 %v390
    %805 = vmatpush.msra.mxu0 %v386
    %806 = vmatmul.f32.gmra.mxu0 %v764
    %v807 = vpop.f32.mrf.mxu0
    %v808 = vadd.f32 0.0, %v807
    %809 = vdwg.mxu0
    %810 = vmatpush.msra.mxu0 %v447
    %811 = vmatpush.msra.mxu0 %v443
    %812 = vmatpush.msra.mxu0 %v439
    %813 = vmatpush.msra.mxu0 %v435
    %814 = vmatpush.msra.mxu0 %v431
    %815 = vmatpush.msra.mxu0 %v427
    %816 = vmatpush.msra.mxu0 %v423
    %817 = vmatpush.msra.mxu0 %v419
    %818 = vmatpush.msra.mxu0 %v415
    %819 = vmatpush.msra.mxu0 %v411
    %820 = vmatpush.msra.mxu0 %v407
    %821 = vmatpush.msra.mxu0 %v403
    %822 = vmatpush.msra.mxu0 %v399
    %823 = vmatpush.msra.mxu0 %v395
    %824 = vmatpush.msra.mxu0 %v391
    %825 = vmatpush.msra.mxu0 %v387
    %826 = vmatmul.f32.gmra.mxu0 %v764
    %v827 = vpop.f32.mrf.mxu0
    %v828 = vadd.f32 0.0, %v827
    %829 = vdwg.mxu0
    %830 = vmatpush.msra.mxu0 %v448
    %831 = vmatpush.msra.mxu0 %v444
    %832 = vmatpush.msra.mxu0 %v440
    %833 = vmatpush.msra.mxu0 %v436
    %834 = vmatpush.msra.mxu0 %v432
    %835 = vmatpush.msra.mxu0 %v428
    %836 = vmatpush.msra.mxu0 %v424
    %837 = vmatpush.msra.mxu0 %v420
    %838 = vmatpush.msra.mxu0 %v416
    %839 = vmatpush.msra.mxu0 %v412
    %840 = vmatpush.msra.mxu0 %v408
    %841 = vmatpush.msra.mxu0 %v404
    %842 = vmatpush.msra.mxu0 %v400
    %843 = vmatpush.msra.mxu0 %v396
    %844 = vmatpush.msra.mxu0 %v392
    %845 = vmatpush.msra.mxu0 %v388
    %846 = vmatmul.f32.gmra.mxu0 %v764
    %v847 = vpop.f32.mrf.mxu0
    %v848 = vadd.f32 0.0, %v847
    %849 = vdwg.mxu0
    %v850 = vadd.f32 %v766, %v788
    %v851 = vadd.f32 %v767, %v808
    %v852 = vadd.f32 %v768, %v828
    %v853 = vadd.f32 %v769, %v848
    %v854 = vmul.f32 %v850, 0.5
    %v855 = vtanh.pop %v854
    %v856 = vmul.f32 %v855, 0.5
    %v857 = vadd.f32 %v856, 0.5
    %v858 = vmul.f32 %v851, 0.5
    %v859 = vtanh.pop %v858
    %v860 = vmul.f32 %v859, 0.5
    %v861 = vadd.f32 %v860, 0.5
    %v862 = vtanh.pop %v852
    %v863 = vmul.f32 %v853, 0.5
    %v864 = vtanh.pop %v863
    %v865 = vmul.f32 %v864, 0.5
    %v866 = vadd.f32 %v865, 0.5
    %v867 = vmul.f32 %v861, %v762
    %v868 = vmul.f32 %v857, %v862
    %v869 = vadd.f32 %v867, %v868
    %v870 = vtanh.pop %v869
    %v871 = vmul.f32 %v866, %v870
    %s872 = scalar_lea.vmem [#allocation4], 128
    %v873 = vld [vmem:[%s872] sm:$0xff]
    %v874 = vld [vmem:[%s872 + $0x8] sm:$0xff]
    %v875 = vld [vmem:[%s872 + $0x10] sm:$0xff]
    %v876 = vld [vmem:[%s872 + $0x18] sm:$0xff]
    %877 = vmatpush.msra.mxu0 %v445
    %878 = vmatpush.msra.mxu0 %v441
    %879 = vmatpush.msra.mxu0 %v437
    %880 = vmatpush.msra.mxu0 %v433
    %881 = vmatpush.msra.mxu0 %v429
    %882 = vmatpush.msra.mxu0 %v425
    %883 = vmatpush.msra.mxu0 %v421
    %884 = vmatpush.msra.mxu0 %v417
    %885 = vmatpush.msra.mxu0 %v413
    %886 = vmatpush.msra.mxu0 %v409
    %887 = vmatpush.msra.mxu0 %v405
    %888 = vmatpush.msra.mxu0 %v401
    %889 = vmatpush.msra.mxu0 %v397
    %890 = vmatpush.msra.mxu0 %v393
    %891 = vmatpush.msra.mxu0 %v389
    %892 = vmatpush.msra.mxu0 %v385
    %893 = vmatmul.f32.gmra.mxu0 %v871
    %v894 = vpop.f32.mrf.mxu0
    %v895 = vadd.f32 0.0, %v894
    %896 = vdwg.mxu0
    %897 = vmatpush.msra.mxu0 %v446
    %898 = vmatpush.msra.mxu0 %v442
    %899 = vmatpush.msra.mxu0 %v438
    %900 = vmatpush.msra.mxu0 %v434
    %901 = vmatpush.msra.mxu0 %v430
    %902 = vmatpush.msra.mxu0 %v426
    %903 = vmatpush.msra.mxu0 %v422
    %904 = vmatpush.msra.mxu0 %v418
    %905 = vmatpush.msra.mxu0 %v414
    %906 = vmatpush.msra.mxu0 %v410
    %907 = vmatpush.msra.mxu0 %v406
    %908 = vmatpush.msra.mxu0 %v402
    %909 = vmatpush.msra.mxu0 %v398
    %910 = vmatpush.msra.mxu0 %v394
    %911 = vmatpush.msra.mxu0 %v390
    %912 = vmatpush.msra.mxu0 %v386
    %913 = vmatmul.f32.gmra.mxu0 %v871
    %v914 = vpop.f32.mrf.mxu0
    %v915 = vadd.f32 0.0, %v914
    %916 = vdwg.mxu0
    %917 = vmatpush.msra.mxu0 %v447
    %918 = vmatpush.msra.mxu0 %v443
    %919 = vmatpush.msra.mxu0 %v439
    %920 = vmatpush.msra.mxu0 %v435
    %921 = vmatpush.msra.mxu0 %v431
    %922 = vmatpush.msra.mxu0 %v427
    %923 = vmatpush.msra.mxu0 %v423
    %924 = vmatpush.msra.mxu0 %v419
    %925 = vmatpush.msra.mxu0 %v415
    %926 = vmatpush.msra.mxu0 %v411
    %927 = vmatpush.msra.mxu0 %v407
    %928 = vmatpush.msra.mxu0 %v403
    %929 = vmatpush.msra.mxu0 %v399
    %930 = vmatpush.msra.mxu0 %v395
    %931 = vmatpush.msra.mxu0 %v391
    %932 = vmatpush.msra.mxu0 %v387
    %933 = vmatmul.f32.gmra.mxu0 %v871
    %v934 = vpop.f32.mrf.mxu0
    %v935 = vadd.f32 0.0, %v934
    %936 = vdwg.mxu0
    %937 = vmatpush.msra.mxu0 %v448
    %938 = vmatpush.msra.mxu0 %v444
    %939 = vmatpush.msra.mxu0 %v440
    %940 = vmatpush.msra.mxu0 %v436
    %941 = vmatpush.msra.mxu0 %v432
    %942 = vmatpush.msra.mxu0 %v428
    %943 = vmatpush.msra.mxu0 %v424
    %944 = vmatpush.msra.mxu0 %v420
    %945 = vmatpush.msra.mxu0 %v416
    %946 = vmatpush.msra.mxu0 %v412
    %947 = vmatpush.msra.mxu0 %v408
    %948 = vmatpush.msra.mxu0 %v404
    %949 = vmatpush.msra.mxu0 %v400
    %950 = vmatpush.msra.mxu0 %v396
    %951 = vmatpush.msra.mxu0 %v392
    %952 = vmatpush.msra.mxu0 %v388
    %953 = vmatmul.f32.gmra.mxu0 %v871
    %v954 = vpop.f32.mrf.mxu0
    %v955 = vadd.f32 0.0, %v954
    %956 = vdwg.mxu0
    %v957 = vadd.f32 %v873, %v895
    %v958 = vadd.f32 %v874, %v915
    %v959 = vadd.f32 %v875, %v935
    %v960 = vadd.f32 %v876, %v955
    %v961 = vmul.f32 %v957, 0.5
    %v962 = vtanh.pop %v961
    %v963 = vmul.f32 %v962, 0.5
    %v964 = vadd.f32 %v963, 0.5
    %v965 = vmul.f32 %v958, 0.5
    %v966 = vtanh.pop %v965
    %v967 = vmul.f32 %v966, 0.5
    %v968 = vadd.f32 %v967, 0.5
    %v969 = vtanh.pop %v959
    %v970 = vmul.f32 %v960, 0.5
    %v971 = vtanh.pop %v970
    %v972 = vmul.f32 %v971, 0.5
    %v973 = vadd.f32 %v972, 0.5
    %v974 = vmul.f32 %v968, %v869
    %v975 = vmul.f32 %v964, %v969
    %v976 = vadd.f32 %v974, %v975
    %v977 = vtanh.pop %v976
    %v978 = vmul.f32 %v973, %v977
    %s979 = scalar_lea.vmem [#allocation4], 160
    %v980 = vld [vmem:[%s979] sm:$0xff]
    %v981 = vld [vmem:[%s979 + $0x8] sm:$0xff]
    %v982 = vld [vmem:[%s979 + $0x10] sm:$0xff]
    %v983 = vld [vmem:[%s979 + $0x18] sm:$0xff]
    %984 = vmatpush.msra.mxu0 %v445
    %985 = vmatpush.msra.mxu0 %v441
    %986 = vmatpush.msra.mxu0 %v437
    %987 = vmatpush.msra.mxu0 %v433
    %988 = vmatpush.msra.mxu0 %v429
    %989 = vmatpush.msra.mxu0 %v425
    %990 = vmatpush.msra.mxu0 %v421
    %991 = vmatpush.msra.mxu0 %v417
    %992 = vmatpush.msra.mxu0 %v413
    %993 = vmatpush.msra.mxu0 %v409
    %994 = vmatpush.msra.mxu0 %v405
    %995 = vmatpush.msra.mxu0 %v401
    %996 = vmatpush.msra.mxu0 %v397
    %997 = vmatpush.msra.mxu0 %v393
    %998 = vmatpush.msra.mxu0 %v389
    %999 = vmatpush.msra.mxu0 %v385
    %1000 = vmatmul.f32.gmra.mxu0 %v978
    %v1001 = vpop.f32.mrf.mxu0
    %v1002 = vadd.f32 0.0, %v1001
    %1003 = vdwg.mxu0
    %1004 = vmatpush.msra.mxu0 %v446
    %1005 = vmatpush.msra.mxu0 %v442
    %1006 = vmatpush.msra.mxu0 %v438
    %1007 = vmatpush.msra.mxu0 %v434
    %1008 = vmatpush.msra.mxu0 %v430
    %1009 = vmatpush.msra.mxu0 %v426
    %1010 = vmatpush.msra.mxu0 %v422
    %1011 = vmatpush.msra.mxu0 %v418
    %1012 = vmatpush.msra.mxu0 %v414
    %1013 = vmatpush.msra.mxu0 %v410
    %1014 = vmatpush.msra.mxu0 %v406
    %1015 = vmatpush.msra.mxu0 %v402
    %1016 = vmatpush.msra.mxu0 %v398
    %1017 = vmatpush.msra.mxu0 %v394
    %1018 = vmatpush.msra.mxu0 %v390
    %1019 = vmatpush.msra.mxu0 %v386
    %1020 = vmatmul.f32.gmra.mxu0 %v978
    %v1021 = vpop.f32.mrf.mxu0
    %v1022 = vadd.f32 0.0, %v1021
    %1023 = vdwg.mxu0
    %1024 = vmatpush.msra.mxu0 %v447
    %1025 = vmatpush.msra.mxu0 %v443
    %1026 = vmatpush.msra.mxu0 %v439
    %1027 = vmatpush.msra.mxu0 %v435
    %1028 = vmatpush.msra.mxu0 %v431
    %1029 = vmatpush.msra.mxu0 %v427
    %1030 = vmatpush.msra.mxu0 %v423
    %1031 = vmatpush.msra.mxu0 %v419
    %1032 = vmatpush.msra.mxu0 %v415
    %1033 = vmatpush.msra.mxu0 %v411
    %1034 = vmatpush.msra.mxu0 %v407
    %1035 = vmatpush.msra.mxu0 %v403
    %1036 = vmatpush.msra.mxu0 %v399
    %1037 = vmatpush.msra.mxu0 %v395
    %1038 = vmatpush.msra.mxu0 %v391
    %1039 = vmatpush.msra.mxu0 %v387
    %1040 = vmatmul.f32.gmra.mxu0 %v978
    %v1041 = vpop.f32.mrf.mxu0
    %v1042 = vadd.f32 0.0, %v1041
    %1043 = vdwg.mxu0
    %1044 = vmatpush.msra.mxu0 %v448
    %1045 = vmatpush.msra.mxu0 %v444
    %1046 = vmatpush.msra.mxu0 %v440
    %1047 = vmatpush.msra.mxu0 %v436
    %1048 = vmatpush.msra.mxu0 %v432
    %1049 = vmatpush.msra.mxu0 %v428
    %1050 = vmatpush.msra.mxu0 %v424
    %1051 = vmatpush.msra.mxu0 %v420
    %1052 = vmatpush.msra.mxu0 %v416
    %1053 = vmatpush.msra.mxu0 %v412
    %1054 = vmatpush.msra.mxu0 %v408
    %1055 = vmatpush.msra.mxu0 %v404
    %1056 = vmatpush.msra.mxu0 %v400
    %1057 = vmatpush.msra.mxu0 %v396
    %1058 = vmatpush.msra.mxu0 %v392
    %1059 = vmatpush.msra.mxu0 %v388
    %1060 = vmatmul.f32.gmra.mxu0 %v978
    %v1061 = vpop.f32.mrf.mxu0
    %v1062 = vadd.f32 0.0, %v1061
    %1063 = vdwg.mxu0
    %v1064 = vadd.f32 %v980, %v1002
    %v1065 = vadd.f32 %v981, %v1022
    %v1066 = vadd.f32 %v982, %v1042
    %v1067 = vadd.f32 %v983, %v1062
    %v1068 = vmul.f32 %v1064, 0.5
    %v1069 = vtanh.pop %v1068
    %v1070 = vmul.f32 %v1069, 0.5
    %v1071 = vadd.f32 %v1070, 0.5
    %v1072 = vmul.f32 %v1065, 0.5
    %v1073 = vtanh.pop %v1072
    %v1074 = vmul.f32 %v1073, 0.5
    %v1075 = vadd.f32 %v1074, 0.5
    %v1076 = vtanh.pop %v1066
    %v1077 = vmul.f32 %v1067, 0.5
    %v1078 = vtanh.pop %v1077
    %v1079 = vmul.f32 %v1078, 0.5
    %v1080 = vadd.f32 %v1079, 0.5
    %v1081 = vmul.f32 %v1075, %v976
    %v1082 = vmul.f32 %v1071, %v1076
    %v1083 = vadd.f32 %v1081, %v1082
    %v1084 = vtanh.pop %v1083
    %v1085 = vmul.f32 %v1080, %v1084
    %s1086 = scalar_lea.vmem [#allocation4], 192
    %v1087 = vld [vmem:[%s1086] sm:$0xff]
    %v1088 = vld [vmem:[%s1086 + $0x8] sm:$0xff]
    %v1089 = vld [vmem:[%s1086 + $0x10] sm:$0xff]
    %v1090 = vld [vmem:[%s1086 + $0x18] sm:$0xff]
    %1091 = vmatpush.msra.mxu0 %v445
    %1092 = vmatpush.msra.mxu0 %v441
    %1093 = vmatpush.msra.mxu0 %v437
    %1094 = vmatpush.msra.mxu0 %v433
    %1095 = vmatpush.msra.mxu0 %v429
    %1096 = vmatpush.msra.mxu0 %v425
    %1097 = vmatpush.msra.mxu0 %v421
    %1098 = vmatpush.msra.mxu0 %v417
    %1099 = vmatpush.msra.mxu0 %v413
    %1100 = vmatpush.msra.mxu0 %v409
    %1101 = vmatpush.msra.mxu0 %v405
    %1102 = vmatpush.msra.mxu0 %v401
    %1103 = vmatpush.msra.mxu0 %v397
    %1104 = vmatpush.msra.mxu0 %v393
    %1105 = vmatpush.msra.mxu0 %v389
    %1106 = vmatpush.msra.mxu0 %v385
    %1107 = vmatmul.f32.gmra.mxu0 %v1085
    %v1108 = vpop.f32.mrf.mxu0
    %v1109 = vadd.f32 0.0, %v1108
    %1110 = vdwg.mxu0
    %1111 = vmatpush.msra.mxu0 %v446
    %1112 = vmatpush.msra.mxu0 %v442
    %1113 = vmatpush.msra.mxu0 %v438
    %1114 = vmatpush.msra.mxu0 %v434
    %1115 = vmatpush.msra.mxu0 %v430
    %1116 = vmatpush.msra.mxu0 %v426
    %1117 = vmatpush.msra.mxu0 %v422
    %1118 = vmatpush.msra.mxu0 %v418
    %1119 = vmatpush.msra.mxu0 %v414
    %1120 = vmatpush.msra.mxu0 %v410
    %1121 = vmatpush.msra.mxu0 %v406
    %1122 = vmatpush.msra.mxu0 %v402
    %1123 = vmatpush.msra.mxu0 %v398
    %1124 = vmatpush.msra.mxu0 %v394
    %1125 = vmatpush.msra.mxu0 %v390
    %1126 = vmatpush.msra.mxu0 %v386
    %1127 = vmatmul.f32.gmra.mxu0 %v1085
    %v1128 = vpop.f32.mrf.mxu0
    %v1129 = vadd.f32 0.0, %v1128
    %1130 = vdwg.mxu0
    %1131 = vmatpush.msra.mxu0 %v447
    %1132 = vmatpush.msra.mxu0 %v443
    %1133 = vmatpush.msra.mxu0 %v439
    %1134 = vmatpush.msra.mxu0 %v435
    %1135 = vmatpush.msra.mxu0 %v431
    %1136 = vmatpush.msra.mxu0 %v427
    %1137 = vmatpush.msra.mxu0 %v423
    %1138 = vmatpush.msra.mxu0 %v419
    %1139 = vmatpush.msra.mxu0 %v415
    %1140 = vmatpush.msra.mxu0 %v411
    %1141 = vmatpush.msra.mxu0 %v407
    %1142 = vmatpush.msra.mxu0 %v403
    %1143 = vmatpush.msra.mxu0 %v399
    %1144 = vmatpush.msra.mxu0 %v395
    %1145 = vmatpush.msra.mxu0 %v391
    %1146 = vmatpush.msra.mxu0 %v387
    %1147 = vmatmul.f32.gmra.mxu0 %v1085
    %v1148 = vpop.f32.mrf.mxu0
    %v1149 = vadd.f32 0.0, %v1148
    %1150 = vdwg.mxu0
    %1151 = vmatpush.msra.mxu0 %v448
    %1152 = vmatpush.msra.mxu0 %v444
    %1153 = vmatpush.msra.mxu0 %v440
    %1154 = vmatpush.msra.mxu0 %v436
    %1155 = vmatpush.msra.mxu0 %v432
    %1156 = vmatpush.msra.mxu0 %v428
    %1157 = vmatpush.msra.mxu0 %v424
    %1158 = vmatpush.msra.mxu0 %v420
    %1159 = vmatpush.msra.mxu0 %v416
    %1160 = vmatpush.msra.mxu0 %v412
    %1161 = vmatpush.msra.mxu0 %v408
    %1162 = vmatpush.msra.mxu0 %v404
    %1163 = vmatpush.msra.mxu0 %v400
    %1164 = vmatpush.msra.mxu0 %v396
    %1165 = vmatpush.msra.mxu0 %v392
    %1166 = vmatpush.msra.mxu0 %v388
    %1167 = vmatmul.f32.gmra.mxu0 %v1085
    %v1168 = vpop.f32.mrf.mxu0
    %v1169 = vadd.f32 0.0, %v1168
    %1170 = vdwg.mxu0
    %v1171 = vadd.f32 %v1087, %v1109
    %v1172 = vadd.f32 %v1088, %v1129
    %v1173 = vadd.f32 %v1089, %v1149
    %v1174 = vadd.f32 %v1090, %v1169
    %v1175 = vmul.f32 %v1171, 0.5
    %v1176 = vtanh.pop %v1175
    %v1177 = vmul.f32 %v1176, 0.5
    %v1178 = vadd.f32 %v1177, 0.5
    %v1179 = vmul.f32 %v1172, 0.5
    %v1180 = vtanh.pop %v1179
    %v1181 = vmul.f32 %v1180, 0.5
    %v1182 = vadd.f32 %v1181, 0.5
    %v1183 = vtanh.pop %v1173
    %v1184 = vmul.f32 %v1174, 0.5
    %v1185 = vtanh.pop %v1184
    %v1186 = vmul.f32 %v1185, 0.5
    %v1187 = vadd.f32 %v1186, 0.5
    %v1188 = vmul.f32 %v1182, %v1083
    %v1189 = vmul.f32 %v1178, %v1183
    %v1190 = vadd.f32 %v1188, %v1189
    %v1191 = vtanh.pop %v1190
    %v1192 = vmul.f32 %v1187, %v1191
    %s1193 = scalar_lea.vmem [#allocation4], 224
    %v1194 = vld [vmem:[%s1193] sm:$0xff]
    %v1195 = vld [vmem:[%s1193 + $0x8] sm:$0xff]
    %v1196 = vld [vmem:[%s1193 + $0x10] sm:$0xff]
    %v1197 = vld [vmem:[%s1193 + $0x18] sm:$0xff]
    %1198 = vmatpush.msra.mxu0 %v445
    %1199 = vmatpush.msra.mxu0 %v441
    %1200 = vmatpush.msra.mxu0 %v437
    %1201 = vmatpush.msra.mxu0 %v433
    %1202 = vmatpush.msra.mxu0 %v429
    %1203 = vmatpush.msra.mxu0 %v425
    %1204 = vmatpush.msra.mxu0 %v421
    %1205 = vmatpush.msra.mxu0 %v417
    %1206 = vmatpush.msra.mxu0 %v413
    %1207 = vmatpush.msra.mxu0 %v409
    %1208 = vmatpush.msra.mxu0 %v405
    %1209 = vmatpush.msra.mxu0 %v401
    %1210 = vmatpush.msra.mxu0 %v397
    %1211 = vmatpush.msra.mxu0 %v393
    %1212 = vmatpush.msra.mxu0 %v389
    %1213 = vmatpush.msra.mxu0 %v385
    %1214 = vmatmul.f32.gmra.mxu0 %v1192
    %v1215 = vpop.f32.mrf.mxu0
    %v1216 = vadd.f32 0.0, %v1215
    %1217 = vdwg.mxu0
    %1218 = vmatpush.msra.mxu0 %v446
    %1219 = vmatpush.msra.mxu0 %v442
    %1220 = vmatpush.msra.mxu0 %v438
    %1221 = vmatpush.msra.mxu0 %v434
    %1222 = vmatpush.msra.mxu0 %v430
    %1223 = vmatpush.msra.mxu0 %v426
    %1224 = vmatpush.msra.mxu0 %v422
    %1225 = vmatpush.msra.mxu0 %v418
    %1226 = vmatpush.msra.mxu0 %v414
    %1227 = vmatpush.msra.mxu0 %v410
    %1228 = vmatpush.msra.mxu0 %v406
    %1229 = vmatpush.msra.mxu0 %v402
    %1230 = vmatpush.msra.mxu0 %v398
    %1231 = vmatpush.msra.mxu0 %v394
    %1232 = vmatpush.msra.mxu0 %v390
    %1233 = vmatpush.msra.mxu0 %v386
    %1234 = vmatmul.f32.gmra.mxu0 %v1192
    %v1235 = vpop.f32.mrf.mxu0
    %v1236 = vadd.f32 0.0, %v1235
    %1237 = vdwg.mxu0
    %1238 = vmatpush.msra.mxu0 %v447
    %1239 = vmatpush.msra.mxu0 %v443
    %1240 = vmatpush.msra.mxu0 %v439
    %1241 = vmatpush.msra.mxu0 %v435
    %1242 = vmatpush.msra.mxu0 %v431
    %1243 = vmatpush.msra.mxu0 %v427
    %1244 = vmatpush.msra.mxu0 %v423
    %1245 = vmatpush.msra.mxu0 %v419
    %1246 = vmatpush.msra.mxu0 %v415
    %1247 = vmatpush.msra.mxu0 %v411
    %1248 = vmatpush.msra.mxu0 %v407
    %1249 = vmatpush.msra.mxu0 %v403
    %1250 = vmatpush.msra.mxu0 %v399
    %1251 = vmatpush.msra.mxu0 %v395
    %1252 = vmatpush.msra.mxu0 %v391
    %1253 = vmatpush.msra.mxu0 %v387
    %1254 = vmatmul.f32.gmra.mxu0 %v1192
    %v1255 = vpop.f32.mrf.mxu0
    %v1256 = vadd.f32 0.0, %v1255
    %1257 = vdwg.mxu0
    %1258 = vmatpush.msra.mxu0 %v448
    %1259 = vmatpush.msra.mxu0 %v444
    %1260 = vmatpush.msra.mxu0 %v440
    %1261 = vmatpush.msra.mxu0 %v436
    %1262 = vmatpush.msra.mxu0 %v432
    %1263 = vmatpush.msra.mxu0 %v428
    %1264 = vmatpush.msra.mxu0 %v424
    %1265 = vmatpush.msra.mxu0 %v420
    %1266 = vmatpush.msra.mxu0 %v416
    %1267 = vmatpush.msra.mxu0 %v412
    %1268 = vmatpush.msra.mxu0 %v408
    %1269 = vmatpush.msra.mxu0 %v404
    %1270 = vmatpush.msra.mxu0 %v400
    %1271 = vmatpush.msra.mxu0 %v396
    %1272 = vmatpush.msra.mxu0 %v392
    %1273 = vmatpush.msra.mxu0 %v388
    %1274 = vmatmul.f32.gmra.mxu0 %v1192
    %v1275 = vpop.f32.mrf.mxu0
    %v1276 = vadd.f32 0.0, %v1275
    %1277 = vdwg.mxu0
    %v1278 = vadd.f32 %v1194, %v1216
    %v1279 = vadd.f32 %v1195, %v1236
    %v1280 = vadd.f32 %v1196, %v1256
    %v1281 = vadd.f32 %v1197, %v1276
    %v1282 = vmul.f32 %v1278, 0.5
    %v1283 = vtanh.pop %v1282
    %v1284 = vmul.f32 %v1283, 0.5
    %v1285 = vadd.f32 %v1284, 0.5
    %v1286 = vmul.f32 %v1279, 0.5
    %v1287 = vtanh.pop %v1286
    %v1288 = vmul.f32 %v1287, 0.5
    %v1289 = vadd.f32 %v1288, 0.5
    %v1290 = vtanh.pop %v1280
    %v1291 = vmul.f32 %v1281, 0.5
    %v1292 = vtanh.pop %v1291
    %v1293 = vmul.f32 %v1292, 0.5
    %v1294 = vadd.f32 %v1293, 0.5
    %v1295 = vmul.f32 %v1289, %v1190
    %v1296 = vmul.f32 %v1285, %v1290
    %v1297 = vadd.f32 %v1295, %v1296
    %v1298 = vtanh.pop %v1297
    %v1299 = vmul.f32 %v1294, %v1298
    %1300 = vst [vmem:[#allocation2] sm:$0xff] %v1299
    %1301 = vst [vmem:[#allocation3] sm:$0xff] %v1297
    // Predicated region
    $region62: #{tpu_custom_call.1} parent=1 // pred_check
      %p1302 = pneg %p124
    $region63: #{tpu_custom_call.1} parent=1 // pred_check_branch
      %1304 = sbr.rel (%p1302) target = $region65
    $region64: #{tpu_custom_call.1} parent=1 // pred_region
      %1305 = vst [vmem:[#allocation17] sm:$0xff] %v1299
      %1306 = vst [vmem:[#allocation19] sm:$0xff] %v1297
      %v1307 = vld [vmem:[#allocation14] sm:$0xff]
      %v1308 = vld [vmem:[#allocation14 + $0x8] sm:$0xff]
      %v1309 = vld [vmem:[#allocation14 + $0x10] sm:$0xff]
      %v1310 = vld [vmem:[#allocation14 + $0x18] sm:$0xff]
      %v1311 = vld [vmem:[#allocation14 + $0x20] sm:$0xff]
      %v1312 = vld [vmem:[#allocation14 + $0x28] sm:$0xff]
      %v1313 = vld [vmem:[#allocation14 + $0x30] sm:$0xff]
      %v1314 = vld [vmem:[#allocation14 + $0x38] sm:$0xff]
      %v1315 = vld [vmem:[#allocation14 + $0x40] sm:$0xff]
      %v1316 = vld [vmem:[#allocation14 + $0x48] sm:$0xff]
      %v1317 = vld [vmem:[#allocation14 + $0x50] sm:$0xff]
      %v1318 = vld [vmem:[#allocation14 + $0x58] sm:$0xff]
      %v1319 = vld [vmem:[#allocation14 + $0x60] sm:$0xff]
      %v1320 = vld [vmem:[#allocation14 + $0x68] sm:$0xff]
      %v1321 = vld [vmem:[#allocation14 + $0x70] sm:$0xff]
      %v1322 = vld [vmem:[#allocation14 + $0x78] sm:$0xff]
      %v1323 = vld [vmem:[%s7] sm:$0x1]
      %v1325 = vperm.slane %v1323, 0
      %1327 = vmatpush.msra.mxu0 %v1322
      %1328 = vmatpush.msra.mxu0 %v1321
      %1329 = vmatpush.msra.mxu0 %v1320
      %1330 = vmatpush.msra.mxu0 %v1319
      %1331 = vmatpush.msra.mxu0 %v1318
      %1332 = vmatpush.msra.mxu0 %v1317
      %1333 = vmatpush.msra.mxu0 %v1316
      %1334 = vmatpush.msra.mxu0 %v1315
      %1335 = vmatpush.msra.mxu0 %v1314
      %1336 = vmatpush.msra.mxu0 %v1313
      %1337 = vmatpush.msra.mxu0 %v1312
      %1338 = vmatpush.msra.mxu0 %v1311
      %1339 = vmatpush.msra.mxu0 %v1310
      %1340 = vmatpush.msra.mxu0 %v1309
      %1341 = vmatpush.msra.mxu0 %v1308
      %1342 = vmatpush.msra.mxu0 %v1307
      %1343 = vmatmul.f32.gmra.mxu0 %v1299
      %v1344 = vpop.f32.mrf.mxu0
      %v1345 = vadd.f32 %v1325, %v1344
      %1346 = vdwg.mxu0
      %1347 = vst [vmem:[#allocation16] sm:$0xff] %v1345
    $region65: #{tpu_custom_call.1} parent=1 // pred_fallthru
      _
    // Predicated region
    $region66: #{tpu_custom_call.1} parent=1 // pred_check
      _
    $region67: #{tpu_custom_call.1} parent=1 // pred_check_branch
      %1349 = sbr.rel (0) target = $region69
    $region68: #{tpu_custom_call.1} parent=1 // pred_region
      %1351 = vsyncadd [#allocation7], 0
      %s1353 = sshll.u32 [#allocation16], 4
      %s1354 = int_to_ptr.vmem [resolvable:$true] %s1353
      %s1355 = sshll.u32 %s8, 4
      %s1356 = int_to_ptr.hbm [resolvable:$true] %s1355
      %1358 = dma.vmem_to_hbm [thread:$0]  %s1354, 128, %s1356, [#allocation7]
    $region69: #{tpu_custom_call.1} parent=1 // pred_fallthru
      _
    // Predicated region
    $region70: #{tpu_custom_call.1} parent=1 // pred_check
      _
    $region71: #{tpu_custom_call.1} parent=1 // pred_check_branch
      %1360 = sbr.rel (0) target = $region73
    $region72: #{tpu_custom_call.1} parent=1 // pred_region
      %1362 = vsyncadd [#allocation18], 0
      %s1364 = sshll.u32 [#allocation17], 4
      %s1365 = int_to_ptr.vmem [resolvable:$true] %s1364
      %s1366 = sshll.u32 %s9, 4
      %s1367 = int_to_ptr.hbm [resolvable:$true] %s1366
      %1369 = dma.vmem_to_hbm [thread:$0]  %s1365, 128, %s1367, [#allocation18]
    $region73: #{tpu_custom_call.1} parent=1 // pred_fallthru
      _
    // Predicated region
    $region74: #{tpu_custom_call.1} parent=1 // pred_check
      _
    $region75: #{tpu_custom_call.1} parent=1 // pred_check_branch
      %1371 = sbr.rel (0) target = $region77
    $region76: #{tpu_custom_call.1} parent=1 // pred_region
      %1373 = vsyncadd [#allocation18], 0
      %s1375 = sshll.u32 [#allocation19], 4
      %s1376 = int_to_ptr.vmem [resolvable:$true] %s1375
      %s1377 = sshll.u32 %s10, 4
      %s1378 = int_to_ptr.hbm [resolvable:$true] %s1377
      %1380 = dma.vmem_to_hbm [thread:$0]  %s1376, 128, %s1378, [#allocation18]
    $region77: #{tpu_custom_call.1} parent=1 // pred_fallthru
      _
    // Predicated region
    $region78: #{tpu_custom_call.1} parent=1 // pred_check
      _
    $region79: #{tpu_custom_call.1} parent=1 // pred_check_branch
      %1382 = sbr.rel (0) target = $region81
    $region80: #{tpu_custom_call.1} parent=1 // pred_region
      %1384 = dma.done [#allocation7], 128
    $region81: #{tpu_custom_call.1} parent=1 // pred_fallthru
      _
    // Predicated region
    $region82: #{tpu_custom_call.1} parent=1 // pred_check
      _
    $region83: #{tpu_custom_call.1} parent=1 // pred_check_branch
      %1386 = sbr.rel (0) target = $region85
    $region84: #{tpu_custom_call.1} parent=1 // pred_region
      %1388 = dma.done [#allocation18], 128
    $region85: #{tpu_custom_call.1} parent=1 // pred_fallthru
      _
    // Predicated region
    $region86: #{tpu_custom_call.1} parent=1 // pred_check
      _
    $region87: #{tpu_custom_call.1} parent=1 // pred_check_branch
      %1390 = sbr.rel (0) target = $region89
    $region88: #{tpu_custom_call.1} parent=1 // pred_region
      %1392 = dma.done [#allocation18], 128
    $region89: #{tpu_custom_call.1} parent=1 // pred_fallthru
      _
    %1393 = vsyncpa [#allocation6], 1
    %1394 = vsyncpa [#allocation9], 1
    %1395 = vsyncpa [#allocation12], 1
    %1396 = vsyncpa [#allocation15], 1
    %1397 = vsyncpa [#allocation7], 1
    %1398 = vsyncpa [#allocation18], 1

</llo_original>
